<compile_context>
chip_gen: v5e
topology: v5e:2x2
jax: 0.10.0
libtpu: 0.0.40
codegen_flags: <defaults>
</compile_context>

<pallas_src>
import math

import numpy as np

import jax
import jax.numpy as jnp
from jax.experimental import pallas as pl
from jax.experimental.pallas import tpu as pltpu

# Network geometry (fixed by fc1.in_features == 324 = 4*9*9 -> 84x84 input).
_C_IN = 4
_C1_OUT = 2                 # conv1 channels
_C2_OUT, _C2_K = 4, 4       # conv2 channels / kernel
_H2 = _W2 = 9               # conv2 output spatial
_GRID = 21                  # phase-split block grid (84 / stride 4)
_T = _GRID * _GRID          # 441 grid positions
_TP = 512                   # grid positions padded to a lane multiple
_F = _C_IN * 16             # 64 phase-split features per grid position
_N2 = _C2_OUT * _H2 * _W2   # 324 = PyTorch flatten size
_N2P = 384                  # padded to 3*128 lanes
_N_FC1 = 256
_N_ACT = 3


# ---------------------------------------------------------------------------
# The single fused kernel: conv1 -> ReLU -> conv2 -> ReLU -> fc1 -> ReLU -> out
# for one sample per grid step; everything VMEM-resident, plain 2-D matmuls.
# ---------------------------------------------------------------------------
def _dqn_fused_kernel(xp_ref, wp_ref, b1_ref, s1_ref, s21_ref,
                      a2lo_ref, a2hi_ref, b2_ref, wf1_ref, bf1_ref,
                      wout_ref, bout_ref, y_ref):
    f32 = jnp.float32

    # conv1: contract the 64 phase-split features at all 21x21 grid positions.
    # Rows of `t`: (sy,sx) shift pair major, conv1 channel minor.
    t = jnp.dot(wp_ref[...], xp_ref[...], preferred_element_type=f32)   # (8, 512)

    # Align the four (sy,sx) partial responses onto the (y1,x1) output frame.
    # Shifts by {1, 21, 22} grid positions are 0/1 matmuls on the MXU
    # (S22 = S1 @ S21); off-window positions are zero-filled and later masked
    # by zero rows of the folded conv2 matrix.
    s1 = s1_ref[...]
    h1 = (t[0:2, :]
          + jnp.dot(t[2:4, :], s1, preferred_element_type=f32)
          + jnp.dot(t[4:6, :] + jnp.dot(t[6:8, :], s1, preferred_element_type=f32),
                    s21_ref[...], preferred_element_type=f32))
    h1 = jnp.maximum(h1 + b1_ref[...], 0.0)                             # (2, 512)
    h1 = h1.astype(a2lo_ref.dtype)

    # conv2 folded into one dense matmul per conv1 channel (block-expanded
    # weights in PyTorch flatten order, zero rows masking invalid positions).
    h2 = (jnp.dot(h1[0:1, :], a2lo_ref[...], preferred_element_type=f32)
          + jnp.dot(h1[1:2, :], a2hi_ref[...], preferred_element_type=f32)
          + b2_ref[...])
    h2 = jnp.maximum(h2, 0.0)                                           # (1, 384)

    # fc1 (+ReLU) and output head.
    h3 = jnp.dot(h2, wf1_ref[...], preferred_element_type=f32) + bf1_ref[...]
    h3 = jnp.maximum(h3, 0.0)                                           # (1, 256)
    y = jnp.dot(h3, wout_ref[...], preferred_element_type=f32) + bout_ref[...]
    y_ref[...] = y.astype(y_ref.dtype)


# ---------------------------------------------------------------------------
# Wrapper-side prologue: non-inflating phase-split relayout of the raw input.
#   xp[b, ci*16 + py*4 + px, ty*21 + tx] = x[b, ci, 4*ty + py, 4*tx + px]
# (same element count as the input, padded 441 -> 512 lanes, cast to bf16).
# ---------------------------------------------------------------------------
def _phase_split(x):
    B = x.shape[0]
    t = x.reshape(B, _C_IN, _GRID, 4, _GRID, 4)      # b ci ty py tx px
    t = t.transpose(0, 1, 3, 5, 2, 4)                # b ci py px ty tx
    t = t.reshape(B, _F, _T)
    t = jnp.pad(t, ((0, 0), (0, 0), (0, _TP - _T)))
    return t.astype(jnp.bfloat16)                    # (B, 64, 512)


# ---------------------------------------------------------------------------
# One-time host-side parameter preprocessing (zero per-step cost).
# ---------------------------------------------------------------------------
def prepare_params(params):
    w1 = np.asarray(params["conv1_w"], np.float32)   # (2,4,8,8)  [co,ci,ky,kx]
    b1 = np.asarray(params["conv1_b"], np.float32)   # (2,)
    w2 = np.asarray(params["conv2_w"], np.float32)   # (4,2,4,4)  [o,co,ky,kx]
    b2 = np.asarray(params["conv2_b"], np.float32)   # (4,)

    # conv1 weights regrouped for the phase-split contraction:
    #   row s = (sy*2+sx)*2 + co, col f = ci*16 + py*4 + px,  ky=4sy+py, kx=4sx+px
    wp = w1.reshape(2, 4, 2, 4, 2, 4)                # co ci sy py sx px
    wp = wp.transpose(2, 4, 0, 1, 3, 5)              # sy sx co ci py px
    wp = wp.reshape(8, _F)

    # 0/1 "shift by d grid positions" matrices: S_d[i + d, i] = 1.
    def shift(d):
        s = np.zeros((_TP, _TP), np.float32)
        idx = np.arange(_TP - d)
        s[idx + d, idx] = 1.0
        return s

    # conv2 folded into a dense matrix acting on the 21x21-grid conv1 output,
    # split per conv1 channel.  Rows at invalid / padded grid positions stay 0,
    # which also masks the relu(b1) values living there; columns are in PyTorch
    # flatten order (o, y2, x2) and zero-padded 324 -> 384.
    a2 = np.zeros((_C1_OUT, _TP, _N2P), np.float32)
    for y2 in range(_H2):
        for x2 in range(_W2):
            for ky in range(_C2_K):
                for kx in range(_C2_K):
                    t_idx = (2 * y2 + ky) * _GRID + (2 * x2 + kx)
                    for o in range(_C2_OUT):
                        col = o * (_H2 * _W2) + y2 * _W2 + x2
                        a2[:, t_idx, col] = w2[o, :, ky, kx]
    b2_row = np.zeros((1, _N2P), np.float32)
    b2_row[0, :_N2] = np.repeat(b2, _H2 * _W2)

    # NOTE: fc1_w / out_w are consumed as (in, out).  A real PyTorch checkpoint
    # stores nn.Linear weights as (out, in) and must be transposed before this.
    wf1 = np.zeros((_N2P, _N_FC1), np.float32)
    wf1[:_N2, :] = np.asarray(params["fc1_w"], np.float32)

    return {
        "wp": jnp.asarray(wp, jnp.bfloat16),                     # (8, 64)
        "b1": jnp.asarray(b1.reshape(_C1_OUT, 1)),               # (2, 1)
        "s1": jnp.asarray(shift(1)),                             # (512, 512)
        "s21": jnp.asarray(shift(_GRID)),                        # (512, 512)
        "a2lo": jnp.asarray(a2[0], jnp.bfloat16),                # (512, 384)
        "a2hi": jnp.asarray(a2[1], jnp.bfloat16),                # (512, 384)
        "b2": jnp.asarray(b2_row),                               # (1, 384)
        "wf1": jnp.asarray(wf1),                                 # (384, 256)
        "bf1": jnp.asarray(params["fc1_b"], jnp.float32).reshape(1, -1),
        "wout": jnp.asarray(params["out_w"], jnp.float32),       # (256, 3)
        "bout": jnp.asarray(params["out_b"], jnp.float32).reshape(1, -1),
    }


# ---------------------------------------------------------------------------
# Full forward pass (matches _network.forward).
# ---------------------------------------------------------------------------
def network_forward(pp, x):
    B = x.shape[0]
    xp = _phase_split(x.astype(jnp.float32))         # (B, 64, 512) bf16

    flops = B * (2 * 8 * _F * _TP                    # conv1 phase contraction
                 + 3 * (2 * _C1_OUT * _TP * _TP)     # shift-align matmuls
                 + _C1_OUT * 2 * _TP * _N2P          # conv2 (two channel halves)
                 + 2 * _N2P * _N_FC1                 # fc1
                 + 2 * _N_FC1 * _N_ACT)              # out
    weight_bytes = sum(int(v.size) * v.dtype.itemsize for v in pp.values())
    bytes_accessed = int(xp.size) * 2 + weight_bytes + B * _N_ACT * 4

    y = pl.pallas_call(
        _dqn_fused_kernel,
        out_shape=jax.ShapeDtypeStruct((B, 1, _N_ACT), jnp.float32),
        grid_spec=pltpu.PrefetchScalarGridSpec(
            num_scalar_prefetch=0,
            grid=(B,),
            in_specs=[
                pl.BlockSpec((None, _F, _TP), lambda i: (i, 0, 0)),    # xp (per-sample)
                pl.BlockSpec((8, _F), lambda i: (0, 0)),               # wp
                pl.BlockSpec((_C1_OUT, 1), lambda i: (0, 0)),          # b1
                pl.BlockSpec((_TP, _TP), lambda i: (0, 0)),            # shift d=1
                pl.BlockSpec((_TP, _TP), lambda i: (0, 0)),            # shift d=21
                pl.BlockSpec((_TP, _N2P), lambda i: (0, 0)),           # a2 (channel 0)
                pl.BlockSpec((_TP, _N2P), lambda i: (0, 0)),           # a2 (channel 1)
                pl.BlockSpec((1, _N2P), lambda i: (0, 0)),             # b2
                pl.BlockSpec((_N2P, _N_FC1), lambda i: (0, 0)),        # fc1_w
                pl.BlockSpec((1, _N_FC1), lambda i: (0, 0)),           # fc1_b
                pl.BlockSpec((_N_FC1, _N_ACT), lambda i: (0, 0)),      # out_w
                pl.BlockSpec((1, _N_ACT), lambda i: (0, 0)),           # out_b
            ],
            out_specs=pl.BlockSpec((None, 1, _N_ACT), lambda i: (i, 0, 0)),
        ),
        compiler_params=pltpu.CompilerParams(
            dimension_semantics=("parallel",)),
        cost_estimate=pl.CostEstimate(flops=flops, transcendentals=0,
                                      bytes_accessed=bytes_accessed),
    )(xp, pp["wp"], pp["b1"], pp["s1"], pp["s21"], pp["a2lo"], pp["a2hi"],
      pp["b2"], pp["wf1"], pp["bf1"], pp["wout"], pp["bout"])

    return y.reshape(B, _N_ACT)


# ---------------------------------------------------------------------------
# Deterministic parameter init (PyTorch-style uniform(-1/sqrt(fan_in), +)).
# fc1_w / out_w are stored already transposed to (in, out).
# ---------------------------------------------------------------------------
def init_params(key):
    def u(k, shape, fan_in):
        bound = 1.0 / math.sqrt(fan_in)
        return jax.random.uniform(k, shape, jnp.float32, -bound, bound)

    ks = jax.random.split(key, 8)
    return {
        "conv1_w": u(ks[0], (2, 4, 8, 8), 4 * 8 * 8),
        "conv1_b": u(ks[1], (2,), 4 * 8 * 8),
        "conv2_w": u(ks[2], (4, 2, 4, 4), 2 * 4 * 4),
        "conv2_b": u(ks[3], (4,), 2 * 4 * 4),
        "fc1_w":   u(ks[4], (324, 256), 324),
        "fc1_b":   u(ks[5], (256,), 324),
        "out_w":   u(ks[6], (256, 3), 256),
        "out_b":   u(ks[7], (3,), 256),
    }


# ---------------------------------------------------------------------------
# Pure-JAX reference (sanity check of the fused Pallas path).
# ---------------------------------------------------------------------------
def reference_forward(params, x):
    dn = ("NCHW", "OIHW", "NCHW")
    hp = jax.lax.Precision.HIGHEST
    t = jax.lax.conv_general_dilated(x, params["conv1_w"], (4, 4), "VALID",
                                     dimension_numbers=dn, precision=hp)
    t = jax.nn.relu(t + params["conv1_b"].reshape(1, -1, 1, 1))
    t = jax.lax.conv_general_dilated(t, params["conv2_w"], (2, 2), "VALID",
                                     dimension_numbers=dn, precision=hp)
    t = jax.nn.relu(t + params["conv2_b"].reshape(1, -1, 1, 1))
    t = t.reshape(t.shape[0], -1)
    t = jax.nn.relu(jnp.dot(t, params["fc1_w"], precision=hp) + params["fc1_b"])
    t = jnp.dot(t, params["out_w"], precision=hp) + params["out_b"]
    return t


if __name__ == "__main__":
    key = jax.random.PRNGKey(0)
    kp, kx = jax.random.split(key)
    params = init_params(kp)
    pp = prepare_params(params)     # one-time host-side weight preprocessing

    batch = 2
    x = jax.random.normal(kx, (batch, _C_IN, 84, 84), dtype=jnp.float32)

    fwd = jax.jit(network_forward)
    y = fwd(pp, x)
    jax.block_until_ready(y)

    assert y.shape == (batch, _N_ACT), y.shape
    y_ref = reference_forward(params, x)
    max_err = float(jnp.max(jnp.abs(y - y_ref)))
    assert max_err < 1e-2, f"mismatch vs reference: {max_err}"

    print("KERNEL_OK")
</pallas_src>

<mosaic_0001>
module attributes {stable_mosaic.version = 11 : i64} {
  func.func @_dqn_fused_kernel(%arg0: i32, %arg1: memref<1x64x512xbf16, #tpu.memory_space<vmem>>, %arg2: memref<8x64xbf16, #tpu.memory_space<vmem>>, %arg3: memref<2x1xf32, #tpu.memory_space<vmem>>, %arg4: memref<512x512xf32, #tpu.memory_space<vmem>>, %arg5: memref<512x512xf32, #tpu.memory_space<vmem>>, %arg6: memref<512x384xbf16, #tpu.memory_space<vmem>>, %arg7: memref<512x384xbf16, #tpu.memory_space<vmem>>, %arg8: memref<1x384xf32, #tpu.memory_space<vmem>>, %arg9: memref<384x256xf32, #tpu.memory_space<vmem>>, %arg10: memref<1x256xf32, #tpu.memory_space<vmem>>, %arg11: memref<256x3xf32, #tpu.memory_space<vmem>>, %arg12: memref<1x3xf32, #tpu.memory_space<vmem>>, %arg13: memref<1x1x3xf32, #tpu.memory_space<vmem>>) attributes {dimension_semantics = [#tpu.dimension_semantics<parallel>], iteration_bounds = array<i64: 2>, scalar_prefetch = 0 : i64, scratch_operands = 0 : i64, tpu.core_type = #tpu.core_type<tc>, window_params = [{transform_indices = @transform_0, window_bounds = array<i64: 1, 64, 512>}, {pipeline_mode = #tpu.pipeline_mode<synchronous>, transform_indices = @transform_1, window_bounds = array<i64: 8, 64>}, {pipeline_mode = #tpu.pipeline_mode<synchronous>, transform_indices = @transform_2, window_bounds = array<i64: 2, 1>}, {pipeline_mode = #tpu.pipeline_mode<synchronous>, transform_indices = @transform_3, window_bounds = array<i64: 512, 512>}, {pipeline_mode = #tpu.pipeline_mode<synchronous>, transform_indices = @transform_4, window_bounds = array<i64: 512, 512>}, {pipeline_mode = #tpu.pipeline_mode<synchronous>, transform_indices = @transform_5, window_bounds = array<i64: 512, 384>}, {pipeline_mode = #tpu.pipeline_mode<synchronous>, transform_indices = @transform_6, window_bounds = array<i64: 512, 384>}, {pipeline_mode = #tpu.pipeline_mode<synchronous>, transform_indices = @transform_7, window_bounds = array<i64: 1, 384>}, {pipeline_mode = #tpu.pipeline_mode<synchronous>, transform_indices = @transform_8, window_bounds = array<i64: 384, 256>}, {pipeline_mode = #tpu.pipeline_mode<synchronous>, transform_indices = @transform_9, window_bounds = array<i64: 1, 256>}, {pipeline_mode = #tpu.pipeline_mode<synchronous>, transform_indices = @transform_10, window_bounds = array<i64: 256, 3>}, {pipeline_mode = #tpu.pipeline_mode<synchronous>, transform_indices = @transform_11, window_bounds = array<i64: 1, 3>}, {transform_indices = @transform_12, window_bounds = array<i64: 1, 1, 3>}]} {
    %c0 = arith.constant 0 : index
    %c0_0 = arith.constant 0 : index
    %0 = vector.load %arg2[%c0, %c0_0] : memref<8x64xbf16, #tpu.memory_space<vmem>>, vector<8x64xbf16>
    %c0_1 = arith.constant 0 : index
    %c0_2 = arith.constant 0 : index
    %c0_3 = arith.constant 0 : index
    %1 = vector.load %arg1[%c0_1, %c0_2, %c0_3] : memref<1x64x512xbf16, #tpu.memory_space<vmem>>, vector<1x64x512xbf16>
    %2 = vector.shape_cast %1 : vector<1x64x512xbf16> to vector<64x512xbf16>
    %cst = arith.constant dense<0.000000e+00> : vector<8x512xf32>
    %3 = tpu.matmul %0, %2, %cst {dimension_numbers = #tpu.dot_dimension_numbers<[1], [0], [0], [1], [0, 0, 1, 1], [], []>} : vector<8x64xbf16>, vector<64x512xbf16>, vector<8x512xf32> -> vector<8x512xf32>
    %c0_4 = arith.constant 0 : index
    %c0_5 = arith.constant 0 : index
    %4 = vector.load %arg4[%c0_4, %c0_5] : memref<512x512xf32, #tpu.memory_space<vmem>>, vector<512x512xf32>
    %5 = vector.extract_strided_slice %3 {offsets = [0, 0], sizes = [2, 512], strides = [1, 1]} : vector<8x512xf32> to vector<2x512xf32>
    %6 = vector.extract_strided_slice %3 {offsets = [2, 0], sizes = [2, 512], strides = [1, 1]} : vector<8x512xf32> to vector<2x512xf32>
    %cst_6 = arith.constant dense<0.000000e+00> : vector<2x512xf32>
    %7 = tpu.matmul %6, %4, %cst_6 {dimension_numbers = #tpu.dot_dimension_numbers<[1], [0], [0], [1], [0, 0, 1, 1], [], []>} : vector<2x512xf32>, vector<512x512xf32>, vector<2x512xf32> -> vector<2x512xf32>
    %8 = arith.addf %5, %7 : vector<2x512xf32>
    %9 = vector.extract_strided_slice %3 {offsets = [4, 0], sizes = [2, 512], strides = [1, 1]} : vector<8x512xf32> to vector<2x512xf32>
    %10 = vector.extract_strided_slice %3 {offsets = [6, 0], sizes = [2, 512], strides = [1, 1]} : vector<8x512xf32> to vector<2x512xf32>
    %cst_7 = arith.constant dense<0.000000e+00> : vector<2x512xf32>
    %11 = tpu.matmul %10, %4, %cst_7 {dimension_numbers = #tpu.dot_dimension_numbers<[1], [0], [0], [1], [0, 0, 1, 1], [], []>} : vector<2x512xf32>, vector<512x512xf32>, vector<2x512xf32> -> vector<2x512xf32>
    %12 = arith.addf %9, %11 : vector<2x512xf32>
    %c0_8 = arith.constant 0 : index
    %c0_9 = arith.constant 0 : index
    %13 = vector.load %arg5[%c0_8, %c0_9] : memref<512x512xf32, #tpu.memory_space<vmem>>, vector<512x512xf32>
    %cst_10 = arith.constant dense<0.000000e+00> : vector<2x512xf32>
    %14 = tpu.matmul %12, %13, %cst_10 {dimension_numbers = #tpu.dot_dimension_numbers<[1], [0], [0], [1], [0, 0, 1, 1], [], []>} : vector<2x512xf32>, vector<512x512xf32>, vector<2x512xf32> -> vector<2x512xf32>
    %15 = arith.addf %8, %14 : vector<2x512xf32>
    %c0_11 = arith.constant 0 : index
    %c0_12 = arith.constant 0 : index
    %16 = vector.load %arg3[%c0_11, %c0_12] : memref<2x1xf32, #tpu.memory_space<vmem>>, vector<2x1xf32>
    %17 = vector.broadcast %16 : vector<2x1xf32> to vector<2x512xf32>
    %18 = arith.addf %15, %17 : vector<2x512xf32>
    %cst_13 = arith.constant 0.000000e+00 : f32
    %19 = vector.broadcast %cst_13 : f32 to vector<2x512xf32>
    %20 = arith.maximumf %18, %19 : vector<2x512xf32>
    %21 = arith.truncf %20 : vector<2x512xf32> to vector<2x512xbf16>
    %22 = vector.extract_strided_slice %21 {offsets = [0, 0], sizes = [1, 512], strides = [1, 1]} : vector<2x512xbf16> to vector<1x512xbf16>
    %c0_14 = arith.constant 0 : index
    %c0_15 = arith.constant 0 : index
    %23 = vector.load %arg6[%c0_14, %c0_15] : memref<512x384xbf16, #tpu.memory_space<vmem>>, vector<512x384xbf16>
    %cst_16 = arith.constant dense<0.000000e+00> : vector<1x384xf32>
    %24 = tpu.matmul %22, %23, %cst_16 {dimension_numbers = #tpu.dot_dimension_numbers<[1], [0], [0], [1], [0, 0, 1, 1], [], []>} : vector<1x512xbf16>, vector<512x384xbf16>, vector<1x384xf32> -> vector<1x384xf32>
    %25 = vector.extract_strided_slice %21 {offsets = [1, 0], sizes = [1, 512], strides = [1, 1]} : vector<2x512xbf16> to vector<1x512xbf16>
    %c0_17 = arith.constant 0 : index
    %c0_18 = arith.constant 0 : index
    %26 = vector.load %arg7[%c0_17, %c0_18] : memref<512x384xbf16, #tpu.memory_space<vmem>>, vector<512x384xbf16>
    %cst_19 = arith.constant dense<0.000000e+00> : vector<1x384xf32>
    %27 = tpu.matmul %25, %26, %cst_19 {dimension_numbers = #tpu.dot_dimension_numbers<[1], [0], [0], [1], [0, 0, 1, 1], [], []>} : vector<1x512xbf16>, vector<512x384xbf16>, vector<1x384xf32> -> vector<1x384xf32>
    %28 = arith.addf %24, %27 : vector<1x384xf32>
    %c0_20 = arith.constant 0 : index
    %c0_21 = arith.constant 0 : index
    %29 = vector.load %arg8[%c0_20, %c0_21] : memref<1x384xf32, #tpu.memory_space<vmem>>, vector<1x384xf32>
    %30 = arith.addf %28, %29 : vector<1x384xf32>
    %cst_22 = arith.constant 0.000000e+00 : f32
    %31 = vector.broadcast %cst_22 : f32 to vector<1x384xf32>
    %32 = arith.maximumf %30, %31 : vector<1x384xf32>
    %c0_23 = arith.constant 0 : index
    %c0_24 = arith.constant 0 : index
    %33 = vector.load %arg9[%c0_23, %c0_24] : memref<384x256xf32, #tpu.memory_space<vmem>>, vector<384x256xf32>
    %cst_25 = arith.constant dense<0.000000e+00> : vector<1x256xf32>
    %34 = tpu.matmul %32, %33, %cst_25 {dimension_numbers = #tpu.dot_dimension_numbers<[1], [0], [0], [1], [0, 0, 1, 1], [], []>} : vector<1x384xf32>, vector<384x256xf32>, vector<1x256xf32> -> vector<1x256xf32>
    %c0_26 = arith.constant 0 : index
    %c0_27 = arith.constant 0 : index
    %35 = vector.load %arg10[%c0_26, %c0_27] : memref<1x256xf32, #tpu.memory_space<vmem>>, vector<1x256xf32>
    %36 = arith.addf %34, %35 : vector<1x256xf32>
    %cst_28 = arith.constant 0.000000e+00 : f32
    %37 = vector.broadcast %cst_28 : f32 to vector<1x256xf32>
    %38 = arith.maximumf %36, %37 : vector<1x256xf32>
    %c0_29 = arith.constant 0 : index
    %c0_30 = arith.constant 0 : index
    %39 = vector.load %arg11[%c0_29, %c0_30] : memref<256x3xf32, #tpu.memory_space<vmem>>, vector<256x3xf32>
    %cst_31 = arith.constant dense<0.000000e+00> : vector<1x3xf32>
    %40 = tpu.matmul %38, %39, %cst_31 {dimension_numbers = #tpu.dot_dimension_numbers<[1], [0], [0], [1], [0, 0, 1, 1], [], []>} : vector<1x256xf32>, vector<256x3xf32>, vector<1x3xf32> -> vector<1x3xf32>
    %c0_32 = arith.constant 0 : index
    %c0_33 = arith.constant 0 : index
    %41 = vector.load %arg12[%c0_32, %c0_33] : memref<1x3xf32, #tpu.memory_space<vmem>>, vector<1x3xf32>
    %42 = arith.addf %40, %41 : vector<1x3xf32>
    %c0_34 = arith.constant 0 : index
    %c0_35 = arith.constant 0 : index
    %c0_36 = arith.constant 0 : index
    %43 = vector.load %arg13[%c0_34, %c0_35, %c0_36] : memref<1x1x3xf32, #tpu.memory_space<vmem>>, vector<1x1x3xf32>
    %44 = vector.shape_cast %43 : vector<1x1x3xf32> to vector<1x3xf32>
    %45 = vector.shape_cast %42 : vector<1x3xf32> to vector<1x1x3xf32>
    tpu.vector_store %arg13[%c0_34, %c0_35, %c0_36], %45 {strides = array<i32>} : memref<1x1x3xf32, #tpu.memory_space<vmem>>, vector<1x1x3xf32>,
    return
  }
  func.func @transform_0(%arg0: i32) -> (i32, i32, i32) {
    %c0_i32 = arith.constant 0 : i32
    %c0_i32_0 = arith.constant 0 : i32
    %c0_i32_1 = arith.constant 0 : i32
    return %arg0, %c0_i32, %c0_i32_0 : i32, i32, i32
  }
  func.func @transform_1(%arg0: i32) -> (i32, i32) {
    %c0_i32 = arith.constant 0 : i32
    %c0_i32_0 = arith.constant 0 : i32
    %c0_i32_1 = arith.constant 0 : i32
    return %c0_i32, %c0_i32_0 : i32, i32
  }
  func.func @transform_2(%arg0: i32) -> (i32, i32) {
    %c0_i32 = arith.constant 0 : i32
    %c0_i32_0 = arith.constant 0 : i32
    %c0_i32_1 = arith.constant 0 : i32
    return %c0_i32, %c0_i32_0 : i32, i32
  }
  func.func @transform_3(%arg0: i32) -> (i32, i32) {
    %c0_i32 = arith.constant 0 : i32
    %c0_i32_0 = arith.constant 0 : i32
    %c0_i32_1 = arith.constant 0 : i32
    return %c0_i32, %c0_i32_0 : i32, i32
  }
  func.func @transform_4(%arg0: i32) -> (i32, i32) {
    %c0_i32 = arith.constant 0 : i32
    %c0_i32_0 = arith.constant 0 : i32
    %c0_i32_1 = arith.constant 0 : i32
    return %c0_i32, %c0_i32_0 : i32, i32
  }
  func.func @transform_5(%arg0: i32) -> (i32, i32) {
    %c0_i32 = arith.constant 0 : i32
    %c0_i32_0 = arith.constant 0 : i32
    %c0_i32_1 = arith.constant 0 : i32
    return %c0_i32, %c0_i32_0 : i32, i32
  }
  func.func @transform_6(%arg0: i32) -> (i32, i32) {
    %c0_i32 = arith.constant 0 : i32
    %c0_i32_0 = arith.constant 0 : i32
    %c0_i32_1 = arith.constant 0 : i32
    return %c0_i32, %c0_i32_0 : i32, i32
  }
  func.func @transform_7(%arg0: i32) -> (i32, i32) {
    %c0_i32 = arith.constant 0 : i32
    %c0_i32_0 = arith.constant 0 : i32
    %c0_i32_1 = arith.constant 0 : i32
    return %c0_i32, %c0_i32_0 : i32, i32
  }
  func.func @transform_8(%arg0: i32) -> (i32, i32) {
    %c0_i32 = arith.constant 0 : i32
    %c0_i32_0 = arith.constant 0 : i32
    %c0_i32_1 = arith.constant 0 : i32
    return %c0_i32, %c0_i32_0 : i32, i32
  }
  func.func @transform_9(%arg0: i32) -> (i32, i32) {
    %c0_i32 = arith.constant 0 : i32
    %c0_i32_0 = arith.constant 0 : i32
    %c0_i32_1 = arith.constant 0 : i32
    return %c0_i32, %c0_i32_0 : i32, i32
  }
  func.func @transform_10(%arg0: i32) -> (i32, i32) {
    %c0_i32 = arith.constant 0 : i32
    %c0_i32_0 = arith.constant 0 : i32
    %c0_i32_1 = arith.constant 0 : i32
    return %c0_i32, %c0_i32_0 : i32, i32
  }
  func.func @transform_11(%arg0: i32) -> (i32, i32) {
    %c0_i32 = arith.constant 0 : i32
    %c0_i32_0 = arith.constant 0 : i32
    %c0_i32_1 = arith.constant 0 : i32
    return %c0_i32, %c0_i32_0 : i32, i32
  }
  func.func @transform_12(%arg0: i32) -> (i32, i32, i32) {
    %c0_i32 = arith.constant 0 : i32
    %c0_i32_0 = arith.constant 0 : i32
    %c0_i32_1 = arith.constant 0 : i32
    return %arg0, %c0_i32, %c0_i32_0 : i32, i32, i32
  }
}

</mosaic_0001>

<llo_original>
// kernel: network_forward.1
$region0: #{network_forward.1}
  #allocation0 [shape = 'u32[]', space=smem, size = 0x4, offset = 0x4, fixed_abs, tag = 'smem constant byte address 0x4 - core index']
  #allocation1 [shape = 'u32[72,128]{1,0:T(1,128)}', space=vmem, size = 0x9000, scoped, tag = 'internal scratch']
  %s0 = inlined_call_operand.vmem [shape: bf16[2,64,512], index: 0, kind: input, shape index: {}]
  %s1 = inlined_call_operand.vmem [shape: bf16[8,64], index: 1, kind: input, shape index: {}]
  %s2 = inlined_call_operand.vmem [shape: f32[2,1], index: 2, kind: input, shape index: {}]
  %s3 = inlined_call_operand.vmem [shape: f32[512,512], index: 3, kind: input, shape index: {}]
  %s4 = inlined_call_operand.vmem [shape: f32[512,512], index: 4, kind: input, shape index: {}]
  %s5 = inlined_call_operand.vmem [shape: bf16[512,384], index: 5, kind: input, shape index: {}]
  %s6 = inlined_call_operand.vmem [shape: bf16[512,384], index: 6, kind: input, shape index: {}]
  %s7 = inlined_call_operand.vmem [shape: f32[1,384], index: 7, kind: input, shape index: {}]
  %s8 = inlined_call_operand.vmem [shape: f32[384,256], index: 8, kind: input, shape index: {}]
  %s9 = inlined_call_operand.vmem [shape: f32[1,256], index: 9, kind: input, shape index: {}]
  %s10 = inlined_call_operand.vmem [shape: f32[256,3], index: 10, kind: input, shape index: {}]
  %s11 = inlined_call_operand.vmem [shape: f32[1,3], index: 11, kind: input, shape index: {}]
  %s12 = inlined_call_operand.hbm [shape: f32[2,1,3], index: 12, kind: output, shape index: {}]
  %s13 = sld [smem:[#allocation0]]
  $region81: #{network_forward.1} parent=0
    _
  %s15 = ssub.s32 1, %s13
  %s16 = scalar_select 0, %s15, %s13
  $region1: #{network_forward.1} parent=0
    #allocation2 [shape = 'u8[1024]{0}', space=vmem, size = 0x400, scoped, tag = 'output window, operand 0']
    #allocation3 [shape = 's32[2]{0}', space=sflag, size = 0x8, scoped, tag = 'scoped memory for network_forward.1']
    %17 = vsyncpa [#allocation3], 0
    %s18 = scalar_lea.sflag [#allocation3], 1
    %19 = vsyncpa %s18, 0
    loop: start=0, step=1, limit=4
    $region2: #{network_forward.1} parent=1 // loop_pre_header
      _
    $region3: #{network_forward.1} parent=1 // loop_header
      %s21 = sphi 0, %s25
      %p22 = scmp.ge.s32.totalorder %s21, 4
      %s31 = sphi 0, %s33
      %s34 = sphi 0, %s31
      %s35 = sphi 0, %s34
      %s51 = sphi 0, %s35
      %s55 = sphi 0, %s55
      %s57 = sphi 0, %s55
      %s58 = sphi 0, %s57
      %s72 = sphi 0, %s58
      %s76 = sphi 0, %s76
      %s78 = sphi 0, %s76
      %s79 = sphi 0, %s78
      %s93 = sphi 0, %s79
      %s97 = sphi 0, %s97
      %s99 = sphi 0, %s97
      %s100 = sphi 0, %s99
      %s114 = sphi 0, %s100
      %s118 = sphi 0, %s118
      %s120 = sphi 0, %s118
      %s121 = sphi 0, %s120
      %s135 = sphi 0, %s121
      %s139 = sphi 0, %s139
      %s141 = sphi 0, %s139
      %s142 = sphi 0, %s141
      %s156 = sphi 0, %s142
      %s160 = sphi 0, %s160
      %s162 = sphi 0, %s160
      %s163 = sphi 0, %s162
      %s177 = sphi 0, %s163
      %s181 = sphi 0, %s181
      %s183 = sphi 0, %s181
      %s184 = sphi 0, %s183
      %s198 = sphi 0, %s184
      %s202 = sphi 0, %s202
      %s204 = sphi 0, %s202
      %s205 = sphi 0, %s204
      %s219 = sphi 0, %s205
      %s223 = sphi 0, %s223
      %s225 = sphi 0, %s223
      %s226 = sphi 0, %s225
      %s240 = sphi 0, %s226
      %s244 = sphi 0, %s244
      %s246 = sphi 0, %s244
      %s247 = sphi 0, %s246
      %s261 = sphi 0, %s247
      %s265 = sphi 0, %s265
      %s267 = sphi 0, %s265
      %s268 = sphi 0, %s267
      %s282 = sphi 0, %s268
      %s288 = sphi 0, %s290
      %s291 = sphi 0, %s288
      %s292 = sphi 0, %s291
      %s308 = sphi 0, %s292
    $region4: #{network_forward.1} parent=1 // loop_header_branch
      %24 = sbr.rel (%p22) target = $region8
    $region5: #{network_forward.1} parent=1 // loop_body
      %s26 = ssub.s32 %s21, 1
      %s27 = ssub.s32 %s21, 2
      %s28 = sadd.s32 %s21, 1
      %s29 = ssub.s32 %s21, %s28
      %p30 = scmp.eq.s32.totalorder %s29, 0
      %s32 = sadd.s32 %s31, 1
      %s33 = scalar_select %p30, %s31, %s32
      %p36 = pneg %p30
      %p37 = scmp.eq.s32.totalorder %s21, 1
      %p38 = por %p36, %p37
      %p39 = scmp.ne.s32.totalorder %s31, %s34
      %p40 = scmp.eq.s32.totalorder %s21, 0
      %p41 = por %p39, %p40
      %p42 = scmp.ne.s32.totalorder %s31, %s34
      %p43 = scmp.eq.s32.totalorder %s26, 1
      %p44 = por %p42, %p43
      %p45 = scmp.ne.s32.totalorder %s34, %s35
      %p46 = scmp.eq.s32.totalorder %s26, 0
      %p47 = por %p45, %p46
      %p48 = scmp.ne.s32.totalorder %s34, %s35
      %p49 = scmp.eq.s32.totalorder %s27, 1
      %p50 = por %p48, %p49
      %p52 = scmp.ne.s32.totalorder %s35, %s51
      %p53 = scmp.eq.s32.totalorder %s27, 0
      %p54 = por %p52, %p53
      %s56 = sadd.s32 %s55, 1
      %p59 = scmp.eq.s32.totalorder %s21, 1
      %p60 = scmp.ne.s32.totalorder %s55, %s57
      %p61 = scmp.eq.s32.totalorder %s21, 0
      %p62 = por %p60, %p61
      %p63 = scmp.ne.s32.totalorder %s55, %s57
      %p64 = scmp.eq.s32.totalorder %s26, 1
      %p65 = por %p63, %p64
      %p66 = scmp.ne.s32.totalorder %s57, %s58
      %p67 = scmp.eq.s32.totalorder %s26, 0
      %p68 = por %p66, %p67
      %p69 = scmp.ne.s32.totalorder %s57, %s58
      %p70 = scmp.eq.s32.totalorder %s27, 1
      %p71 = por %p69, %p70
      %p73 = scmp.ne.s32.totalorder %s58, %s72
      %p74 = scmp.eq.s32.totalorder %s27, 0
      %p75 = por %p73, %p74
      %s77 = sadd.s32 %s76, 1
      %p80 = scmp.eq.s32.totalorder %s21, 1
      %p81 = scmp.ne.s32.totalorder %s76, %s78
      %p82 = scmp.eq.s32.totalorder %s21, 0
      %p83 = por %p81, %p82
      %p84 = scmp.ne.s32.totalorder %s76, %s78
      %p85 = scmp.eq.s32.totalorder %s26, 1
      %p86 = por %p84, %p85
      %p87 = scmp.ne.s32.totalorder %s78, %s79
      %p88 = scmp.eq.s32.totalorder %s26, 0
      %p89 = por %p87, %p88
      %p90 = scmp.ne.s32.totalorder %s78, %s79
      %p91 = scmp.eq.s32.totalorder %s27, 1
      %p92 = por %p90, %p91
      %p94 = scmp.ne.s32.totalorder %s79, %s93
      %p95 = scmp.eq.s32.totalorder %s27, 0
      %p96 = por %p94, %p95
      %s98 = sadd.s32 %s97, 1
      %p101 = scmp.eq.s32.totalorder %s21, 1
      %p102 = scmp.ne.s32.totalorder %s97, %s99
      %p103 = scmp.eq.s32.totalorder %s21, 0
      %p104 = por %p102, %p103
      %p105 = scmp.ne.s32.totalorder %s97, %s99
      %p106 = scmp.eq.s32.totalorder %s26, 1
      %p107 = por %p105, %p106
      %p108 = scmp.ne.s32.totalorder %s99, %s100
      %p109 = scmp.eq.s32.totalorder %s26, 0
      %p110 = por %p108, %p109
      %p111 = scmp.ne.s32.totalorder %s99, %s100
      %p112 = scmp.eq.s32.totalorder %s27, 1
      %p113 = por %p111, %p112
      %p115 = scmp.ne.s32.totalorder %s100, %s114
      %p116 = scmp.eq.s32.totalorder %s27, 0
      %p117 = por %p115, %p116
      %s119 = sadd.s32 %s118, 1
      %p122 = scmp.eq.s32.totalorder %s21, 1
      %p123 = scmp.ne.s32.totalorder %s118, %s120
      %p124 = scmp.eq.s32.totalorder %s21, 0
      %p125 = por %p123, %p124
      %p126 = scmp.ne.s32.totalorder %s118, %s120
      %p127 = scmp.eq.s32.totalorder %s26, 1
      %p128 = por %p126, %p127
      %p129 = scmp.ne.s32.totalorder %s120, %s121
      %p130 = scmp.eq.s32.totalorder %s26, 0
      %p131 = por %p129, %p130
      %p132 = scmp.ne.s32.totalorder %s120, %s121
      %p133 = scmp.eq.s32.totalorder %s27, 1
      %p134 = por %p132, %p133
      %p136 = scmp.ne.s32.totalorder %s121, %s135
      %p137 = scmp.eq.s32.totalorder %s27, 0
      %p138 = por %p136, %p137
      %s140 = sadd.s32 %s139, 1
      %p143 = scmp.eq.s32.totalorder %s21, 1
      %p144 = scmp.ne.s32.totalorder %s139, %s141
      %p145 = scmp.eq.s32.totalorder %s21, 0
      %p146 = por %p144, %p145
      %p147 = scmp.ne.s32.totalorder %s139, %s141
      %p148 = scmp.eq.s32.totalorder %s26, 1
      %p149 = por %p147, %p148
      %p150 = scmp.ne.s32.totalorder %s141, %s142
      %p151 = scmp.eq.s32.totalorder %s26, 0
      %p152 = por %p150, %p151
      %p153 = scmp.ne.s32.totalorder %s141, %s142
      %p154 = scmp.eq.s32.totalorder %s27, 1
      %p155 = por %p153, %p154
      %p157 = scmp.ne.s32.totalorder %s142, %s156
      %p158 = scmp.eq.s32.totalorder %s27, 0
      %p159 = por %p157, %p158
      %s161 = sadd.s32 %s160, 1
      %p164 = scmp.eq.s32.totalorder %s21, 1
      %p165 = scmp.ne.s32.totalorder %s160, %s162
      %p166 = scmp.eq.s32.totalorder %s21, 0
      %p167 = por %p165, %p166
      %p168 = scmp.ne.s32.totalorder %s160, %s162
      %p169 = scmp.eq.s32.totalorder %s26, 1
      %p170 = por %p168, %p169
      %p171 = scmp.ne.s32.totalorder %s162, %s163
      %p172 = scmp.eq.s32.totalorder %s26, 0
      %p173 = por %p171, %p172
      %p174 = scmp.ne.s32.totalorder %s162, %s163
      %p175 = scmp.eq.s32.totalorder %s27, 1
      %p176 = por %p174, %p175
      %p178 = scmp.ne.s32.totalorder %s163, %s177
      %p179 = scmp.eq.s32.totalorder %s27, 0
      %p180 = por %p178, %p179
      %s182 = sadd.s32 %s181, 1
      %p185 = scmp.eq.s32.totalorder %s21, 1
      %p186 = scmp.ne.s32.totalorder %s181, %s183
      %p187 = scmp.eq.s32.totalorder %s21, 0
      %p188 = por %p186, %p187
      %p189 = scmp.ne.s32.totalorder %s181, %s183
      %p190 = scmp.eq.s32.totalorder %s26, 1
      %p191 = por %p189, %p190
      %p192 = scmp.ne.s32.totalorder %s183, %s184
      %p193 = scmp.eq.s32.totalorder %s26, 0
      %p194 = por %p192, %p193
      %p195 = scmp.ne.s32.totalorder %s183, %s184
      %p196 = scmp.eq.s32.totalorder %s27, 1
      %p197 = por %p195, %p196
      %p199 = scmp.ne.s32.totalorder %s184, %s198
      %p200 = scmp.eq.s32.totalorder %s27, 0
      %p201 = por %p199, %p200
      %s203 = sadd.s32 %s202, 1
      %p206 = scmp.eq.s32.totalorder %s21, 1
      %p207 = scmp.ne.s32.totalorder %s202, %s204
      %p208 = scmp.eq.s32.totalorder %s21, 0
      %p209 = por %p207, %p208
      %p210 = scmp.ne.s32.totalorder %s202, %s204
      %p211 = scmp.eq.s32.totalorder %s26, 1
      %p212 = por %p210, %p211
      %p213 = scmp.ne.s32.totalorder %s204, %s205
      %p214 = scmp.eq.s32.totalorder %s26, 0
      %p215 = por %p213, %p214
      %p216 = scmp.ne.s32.totalorder %s204, %s205
      %p217 = scmp.eq.s32.totalorder %s27, 1
      %p218 = por %p216, %p217
      %p220 = scmp.ne.s32.totalorder %s205, %s219
      %p221 = scmp.eq.s32.totalorder %s27, 0
      %p222 = por %p220, %p221
      %s224 = sadd.s32 %s223, 1
      %p227 = scmp.eq.s32.totalorder %s21, 1
      %p228 = scmp.ne.s32.totalorder %s223, %s225
      %p229 = scmp.eq.s32.totalorder %s21, 0
      %p230 = por %p228, %p229
      %p231 = scmp.ne.s32.totalorder %s223, %s225
      %p232 = scmp.eq.s32.totalorder %s26, 1
      %p233 = por %p231, %p232
      %p234 = scmp.ne.s32.totalorder %s225, %s226
      %p235 = scmp.eq.s32.totalorder %s26, 0
      %p236 = por %p234, %p235
      %p237 = scmp.ne.s32.totalorder %s225, %s226
      %p238 = scmp.eq.s32.totalorder %s27, 1
      %p239 = por %p237, %p238
      %p241 = scmp.ne.s32.totalorder %s226, %s240
      %p242 = scmp.eq.s32.totalorder %s27, 0
      %p243 = por %p241, %p242
      %s245 = sadd.s32 %s244, 1
      %p248 = scmp.eq.s32.totalorder %s21, 1
      %p249 = scmp.ne.s32.totalorder %s244, %s246
      %p250 = scmp.eq.s32.totalorder %s21, 0
      %p251 = por %p249, %p250
      %p252 = scmp.ne.s32.totalorder %s244, %s246
      %p253 = scmp.eq.s32.totalorder %s26, 1
      %p254 = por %p252, %p253
      %p255 = scmp.ne.s32.totalorder %s246, %s247
      %p256 = scmp.eq.s32.totalorder %s26, 0
      %p257 = por %p255, %p256
      %p258 = scmp.ne.s32.totalorder %s246, %s247
      %p259 = scmp.eq.s32.totalorder %s27, 1
      %p260 = por %p258, %p259
      %p262 = scmp.ne.s32.totalorder %s247, %s261
      %p263 = scmp.eq.s32.totalorder %s27, 0
      %p264 = por %p262, %p263
      %s266 = sadd.s32 %s265, 1
      %p269 = scmp.eq.s32.totalorder %s21, 1
      %p270 = scmp.ne.s32.totalorder %s265, %s267
      %p271 = scmp.eq.s32.totalorder %s21, 0
      %p272 = por %p270, %p271
      %p273 = scmp.ne.s32.totalorder %s265, %s267
      %p274 = scmp.eq.s32.totalorder %s26, 1
      %p275 = por %p273, %p274
      %p276 = scmp.ne.s32.totalorder %s267, %s268
      %p277 = scmp.eq.s32.totalorder %s26, 0
      %p278 = por %p276, %p277
      %p279 = scmp.ne.s32.totalorder %s267, %s268
      %p280 = scmp.eq.s32.totalorder %s27, 1
      %p281 = por %p279, %p280
      %p283 = scmp.ne.s32.totalorder %s268, %s282
      %p284 = scmp.eq.s32.totalorder %s27, 0
      %p285 = por %p283, %p284
      %s286 = ssub.s32 %s21, %s28
      %p287 = scmp.eq.s32.totalorder %s286, 0
      %s289 = sadd.s32 %s288, 1
      %s290 = scalar_select %p287, %s288, %s289
      %p293 = pneg %p287
      %p294 = scmp.eq.s32.totalorder %s21, 1
      %p295 = por %p293, %p294
      %p296 = scmp.ne.s32.totalorder %s288, %s291
      %p297 = scmp.eq.s32.totalorder %s21, 0
      %p298 = por %p296, %p297
      %p299 = scmp.ne.s32.totalorder %s288, %s291
      %p300 = scmp.eq.s32.totalorder %s26, 1
      %p301 = por %p299, %p300
      %p302 = scmp.ne.s32.totalorder %s291, %s292
      %p303 = scmp.eq.s32.totalorder %s26, 0
      %p304 = por %p302, %p303
      %p305 = scmp.ne.s32.totalorder %s291, %s292
      %p306 = scmp.eq.s32.totalorder %s27, 1
      %p307 = por %p305, %p306
      %p309 = scmp.ne.s32.totalorder %s292, %s308
      %p310 = scmp.eq.s32.totalorder %s27, 0
      %p311 = por %p309, %p310
      %p312 = scmp.le.s32.totalorder 1, %s21
      %p313 = scmp.lt.s32.totalorder %s21, 3
      %p314 = pnand %p312, %p313
      %p315 = pneg %p314
      // Predicated region
      $region9: #{network_forward.1} parent=5 // pred_check
        _
      $region10: #{network_forward.1} parent=5 // pred_check_branch
        %317 = sbr.rel (%p314) target = $region12
      $region11: #{network_forward.1} parent=5 // pred_region
        %s318 = ssub.s32 %s21, 1
        // Predicated region
        $region13: #{network_forward.1} parent=11 // pred_check
          %p319 = pneg %p68
        $region14: #{network_forward.1} parent=11 // pred_check_branch
          %321 = sbr.rel (%p319) target = $region16
        $region15: #{network_forward.1} parent=11 // pred_region
          _
        $region16: #{network_forward.1} parent=11 // pred_fallthru
          _
        // Predicated region
        $region17: #{network_forward.1} parent=11 // pred_check
          %p322 = pneg %p89
        $region18: #{network_forward.1} parent=11 // pred_check_branch
          %324 = sbr.rel (%p322) target = $region20
        $region19: #{network_forward.1} parent=11 // pred_region
          _
        $region20: #{network_forward.1} parent=11 // pred_fallthru
          _
        // Predicated region
        $region21: #{network_forward.1} parent=11 // pred_check
          %p325 = pneg %p110
        $region22: #{network_forward.1} parent=11 // pred_check_branch
          %327 = sbr.rel (%p325) target = $region24
        $region23: #{network_forward.1} parent=11 // pred_region
          _
        $region24: #{network_forward.1} parent=11 // pred_fallthru
          _
        // Predicated region
        $region25: #{network_forward.1} parent=11 // pred_check
          %p328 = pneg %p131
        $region26: #{network_forward.1} parent=11 // pred_check_branch
          %330 = sbr.rel (%p328) target = $region28
        $region27: #{network_forward.1} parent=11 // pred_region
          _
        $region28: #{network_forward.1} parent=11 // pred_fallthru
          _
        // Predicated region
        $region29: #{network_forward.1} parent=11 // pred_check
          %p331 = pneg %p152
        $region30: #{network_forward.1} parent=11 // pred_check_branch
          %333 = sbr.rel (%p331) target = $region32
        $region31: #{network_forward.1} parent=11 // pred_region
          _
        $region32: #{network_forward.1} parent=11 // pred_fallthru
          _
        // Predicated region
        $region33: #{network_forward.1} parent=11 // pred_check
          %p334 = pneg %p173
        $region34: #{network_forward.1} parent=11 // pred_check_branch
          %336 = sbr.rel (%p334) target = $region36
        $region35: #{network_forward.1} parent=11 // pred_region
          _
        $region36: #{network_forward.1} parent=11 // pred_fallthru
          _
        // Predicated region
        $region37: #{network_forward.1} parent=11 // pred_check
          %p337 = pneg %p194
        $region38: #{network_forward.1} parent=11 // pred_check_branch
          %339 = sbr.rel (%p337) target = $region40
        $region39: #{network_forward.1} parent=11 // pred_region
          _
        $region40: #{network_forward.1} parent=11 // pred_fallthru
          _
        // Predicated region
        $region41: #{network_forward.1} parent=11 // pred_check
          %p340 = pneg %p215
        $region42: #{network_forward.1} parent=11 // pred_check_branch
          %342 = sbr.rel (%p340) target = $region44
        $region43: #{network_forward.1} parent=11 // pred_region
          _
        $region44: #{network_forward.1} parent=11 // pred_fallthru
          _
        // Predicated region
        $region45: #{network_forward.1} parent=11 // pred_check
          %p343 = pneg %p236
        $region46: #{network_forward.1} parent=11 // pred_check_branch
          %345 = sbr.rel (%p343) target = $region48
        $region47: #{network_forward.1} parent=11 // pred_region
          _
        $region48: #{network_forward.1} parent=11 // pred_fallthru
          _
        // Predicated region
        $region49: #{network_forward.1} parent=11 // pred_check
          %p346 = pneg %p257
        $region50: #{network_forward.1} parent=11 // pred_check_branch
          %348 = sbr.rel (%p346) target = $region52
        $region51: #{network_forward.1} parent=11 // pred_region
          _
        $region52: #{network_forward.1} parent=11 // pred_fallthru
          _
        // Predicated region
        $region53: #{network_forward.1} parent=11 // pred_check
          %p349 = pneg %p278
        $region54: #{network_forward.1} parent=11 // pred_check_branch
          %351 = sbr.rel (%p349) target = $region56
        $region55: #{network_forward.1} parent=11 // pred_region
          _
        $region56: #{network_forward.1} parent=11 // pred_fallthru
          _
      $region12: #{network_forward.1} parent=5 // pred_fallthru
        _
      %p352 = scmp.lt.s32.totalorder %s21, 2
      // Predicated region
      $region57: #{network_forward.1} parent=5 // pred_check
        %p353 = pneg %p352
      $region58: #{network_forward.1} parent=5 // pred_check_branch
        %355 = sbr.rel (%p353) target = $region60
      $region59: #{network_forward.1} parent=5 // pred_region
        // Predicated region
        $region61: #{network_forward.1} parent=59 // pred_check
          %p356 = pneg %p41
        $region62: #{network_forward.1} parent=59 // pred_check_branch
          %358 = sbr.rel (%p356) target = $region64
        $region63: #{network_forward.1} parent=59 // pred_region
          %p359 = scmp.lt.s32.totalorder %s21, 1
          %s360 = scalar_select %p359, %s21, 1
          %s361 = smul.addr %s360, 32
          %s362 = smul.addr %s361, 4
          %s363 = scalar_lea.vmem %s0, %s362
        $region64: #{network_forward.1} parent=59 // pred_fallthru
          _
      $region60: #{network_forward.1} parent=5 // pred_fallthru
        _
      %p364 = scmp.le.s32.totalorder 1, %s21
      %p365 = scmp.lt.s32.totalorder %s21, 3
      %p366 = pnand %p364, %p365
      %p367 = pneg %p366
      // Predicated region
      $region65: #{network_forward.1} parent=5 // pred_check
        _
      $region66: #{network_forward.1} parent=5 // pred_check_branch
        %369 = sbr.rel (%p366) target = $region68
      $region67: #{network_forward.1} parent=5 // pred_region
        %s370 = ssub.s32 %s21, 1
        %p371 = scmp.lt.s32.totalorder %s26, 1
        %s372 = scalar_select %p371, %s26, 1
        %s373 = smul.addr %s372, 32
        %s374 = smul.addr %s373, 4
        %s375 = scalar_lea.vmem %s0, %s374
        %p376 = pneg %p47
        %p377 = pneg %p44
        %p378 = pneg %p68
        %p379 = pneg %p65
        %p380 = pneg %p89
        %p381 = pneg %p86
        %p382 = pneg %p110
        %p383 = pneg %p107
        %p384 = pneg %p131
        %p385 = pneg %p128
        %p386 = pneg %p152
        %p387 = pneg %p149
        %p388 = pneg %p173
        %p389 = pneg %p170
        %p390 = pneg %p194
        %p391 = pneg %p191
        %p392 = pneg %p215
        %p393 = pneg %p212
        %p394 = pneg %p236
        %p395 = pneg %p233
        %p396 = pneg %p257
        %p397 = pneg %p254
        %p398 = pneg %p278
        %p399 = pneg %p275
        %p400 = pneg %p304
        %p401 = pneg %p301
        %s402 = sand.u32 %s291, 1
        %s403 = scalar_lea.sflag [#allocation3], %s402
        %s404 = sand.u32 %s291, 1
        %s405 = scalar_lea.vmem [#allocation2], %s404
        %p406 = scmp.lt.s32.totalorder %s26, 1
        %s407 = scalar_select %p406, %s26, 1
        %s408 = smul.addr %s407, 32
        %s409 = smul.addr %s408, 4
        %s410 = scalar_lea.vmem %s0, %s409
        %v412 = vld [vmem:[%s1] sm:$0xf]
        %v413 = vld [vmem:[%s410] sm:$0xff]
        %v414 = vld [vmem:[%s410 + $0x8] sm:$0xff]
        %v415 = vld [vmem:[%s410 + $0x10] sm:$0xff]
        %v416 = vld [vmem:[%s410 + $0x18] sm:$0xff]
        %v417 = vld [vmem:[%s410 + $0x20] sm:$0xff]
        %v418 = vld [vmem:[%s410 + $0x28] sm:$0xff]
        %v419 = vld [vmem:[%s410 + $0x30] sm:$0xff]
        %v420 = vld [vmem:[%s410 + $0x38] sm:$0xff]
        %v421 = vld [vmem:[%s410 + $0x40] sm:$0xff]
        %v422 = vld [vmem:[%s410 + $0x48] sm:$0xff]
        %v423 = vld [vmem:[%s410 + $0x50] sm:$0xff]
        %v424 = vld [vmem:[%s410 + $0x58] sm:$0xff]
        %v425 = vld [vmem:[%s410 + $0x60] sm:$0xff]
        %v426 = vld [vmem:[%s410 + $0x68] sm:$0xff]
        %v427 = vld [vmem:[%s410 + $0x70] sm:$0xff]
        %v428 = vld [vmem:[%s410 + $0x78] sm:$0xff]
        %v445 = vunpack.c.l.b16 %v413
        %v446 = vunpack.c.h.b16 %v413
        %v447 = vunpack.c.l.b16 %v414
        %v448 = vunpack.c.h.b16 %v414
        %v449 = vunpack.c.l.b16 %v415
        %v450 = vunpack.c.h.b16 %v415
        %v451 = vunpack.c.l.b16 %v416
        %v452 = vunpack.c.h.b16 %v416
        %v453 = vunpack.c.l.b16 %v417
        %v454 = vunpack.c.h.b16 %v417
        %v455 = vunpack.c.l.b16 %v418
        %v456 = vunpack.c.h.b16 %v418
        %v457 = vunpack.c.l.b16 %v419
        %v458 = vunpack.c.h.b16 %v419
        %v459 = vunpack.c.l.b16 %v420
        %v460 = vunpack.c.h.b16 %v420
        %v461 = vunpack.c.l.b16 %v421
        %v462 = vunpack.c.h.b16 %v421
        %v463 = vunpack.c.l.b16 %v422
        %v464 = vunpack.c.h.b16 %v422
        %v465 = vunpack.c.l.b16 %v423
        %v466 = vunpack.c.h.b16 %v423
        %v467 = vunpack.c.l.b16 %v424
        %v468 = vunpack.c.h.b16 %v424
        %v469 = vunpack.c.l.b16 %v425
        %v470 = vunpack.c.h.b16 %v425
        %v471 = vunpack.c.l.b16 %v426
        %v472 = vunpack.c.h.b16 %v426
        %v473 = vunpack.c.l.b16 %v427
        %v474 = vunpack.c.h.b16 %v427
        %v475 = vunpack.c.l.b16 %v428
        %v476 = vunpack.c.h.b16 %v428
        %v477 = vpack.c.b16 %v449, %v445
        %v478 = vpack.c.b16 %v450, %v446
        %v479 = vpack.c.b16 %v451, %v447
        %v480 = vpack.c.b16 %v452, %v448
        %v481 = vpack.c.b16 %v457, %v453
        %v482 = vpack.c.b16 %v458, %v454
        %v483 = vpack.c.b16 %v459, %v455
        %v484 = vpack.c.b16 %v460, %v456
        %v485 = vpack.c.b16 %v465, %v461
        %v486 = vpack.c.b16 %v466, %v462
        %v487 = vpack.c.b16 %v467, %v463
        %v488 = vpack.c.b16 %v468, %v464
        %v489 = vpack.c.b16 %v473, %v469
        %v490 = vpack.c.b16 %v474, %v470
        %v491 = vpack.c.b16 %v475, %v471
        %v492 = vpack.c.b16 %v476, %v472
        %vm509 = vcmask 523264
        %v511 = vsel %vm509, %v412, 0
        %513 = vmatpush.bf16.msra.mxu0 0
        %514 = vmatpush.bf16.msra.mxu0 0
        %515 = vmatpush.bf16.msra.mxu0 0
        %516 = vmatpush.bf16.msra.mxu0 0
        %517 = vmatpush.bf16.msra.mxu0 %v489
        %518 = vmatpush.bf16.msra.mxu0 %v485
        %519 = vmatpush.bf16.msra.mxu0 %v481
        %520 = vmatpush.bf16.msra.mxu0 %v477
        %521 = vmatmul.bf16.gmra.mxu0 %v511
        %v522 = vpop.f32.mrf.mxu0
        %v523 = vadd.f32 0.0, %v522
        %v524 = vpop.f32.mrf.mxu0
        %525 = vdwg.mxu0
        %526 = vmatpush.bf16.msra.mxu0 0
        %527 = vmatpush.bf16.msra.mxu0 0
        %528 = vmatpush.bf16.msra.mxu0 0
        %529 = vmatpush.bf16.msra.mxu0 0
        %530 = vmatpush.bf16.msra.mxu0 %v490
        %531 = vmatpush.bf16.msra.mxu0 %v486
        %532 = vmatpush.bf16.msra.mxu0 %v482
        %533 = vmatpush.bf16.msra.mxu0 %v478
        %534 = vmatmul.bf16.gmra.mxu0 %v511
        %v535 = vpop.f32.mrf.mxu0
        %v536 = vadd.f32 0.0, %v535
        %v537 = vpop.f32.mrf.mxu0
        %538 = vdwg.mxu0
        %539 = vmatpush.bf16.msra.mxu0 0
        %540 = vmatpush.bf16.msra.mxu0 0
        %541 = vmatpush.bf16.msra.mxu0 0
        %542 = vmatpush.bf16.msra.mxu0 0
        %543 = vmatpush.bf16.msra.mxu0 %v491
        %544 = vmatpush.bf16.msra.mxu0 %v487
        %545 = vmatpush.bf16.msra.mxu0 %v483
        %546 = vmatpush.bf16.msra.mxu0 %v479
        %547 = vmatmul.bf16.gmra.mxu0 %v511
        %v548 = vpop.f32.mrf.mxu0
        %v549 = vadd.f32 0.0, %v548
        %v550 = vpop.f32.mrf.mxu0
        %551 = vdwg.mxu0
        %552 = vmatpush.bf16.msra.mxu0 0
        %553 = vmatpush.bf16.msra.mxu0 0
        %554 = vmatpush.bf16.msra.mxu0 0
        %555 = vmatpush.bf16.msra.mxu0 0
        %556 = vmatpush.bf16.msra.mxu0 %v492
        %557 = vmatpush.bf16.msra.mxu0 %v488
        %558 = vmatpush.bf16.msra.mxu0 %v484
        %559 = vmatpush.bf16.msra.mxu0 %v480
        %560 = vmatmul.bf16.gmra.mxu0 %v511
        %v561 = vpop.f32.mrf.mxu0
        %v562 = vadd.f32 0.0, %v561
        %v563 = vpop.f32.mrf.mxu0
        %564 = vdwg.mxu0
        %v565 = vld [vmem:[%s3] sm:$0xff]
        %v566 = vld [vmem:[%s3 + $0x8] sm:$0xff]
        %v567 = vld [vmem:[%s3 + $0x10] sm:$0xff]
        %v568 = vld [vmem:[%s3 + $0x18] sm:$0xff]
        %v569 = vld [vmem:[%s3 + $0x20] sm:$0xff]
        %v570 = vld [vmem:[%s3 + $0x28] sm:$0xff]
        %v571 = vld [vmem:[%s3 + $0x30] sm:$0xff]
        %v572 = vld [vmem:[%s3 + $0x38] sm:$0xff]
        %v573 = vld [vmem:[%s3 + $0x40] sm:$0xff]
        %v574 = vld [vmem:[%s3 + $0x48] sm:$0xff]
        %v575 = vld [vmem:[%s3 + $0x50] sm:$0xff]
        %v576 = vld [vmem:[%s3 + $0x58] sm:$0xff]
        %v577 = vld [vmem:[%s3 + $0x60] sm:$0xff]
        %v578 = vld [vmem:[%s3 + $0x68] sm:$0xff]
        %v579 = vld [vmem:[%s3 + $0x70] sm:$0xff]
        %v580 = vld [vmem:[%s3 + $0x78] sm:$0xff]
        %v581 = vld [vmem:[%s3 + $0x80] sm:$0xff]
        %v582 = vld [vmem:[%s3 + $0x88] sm:$0xff]
        %v583 = vld [vmem:[%s3 + $0x90] sm:$0xff]
        %v584 = vld [vmem:[%s3 + $0x98] sm:$0xff]
        %v585 = vld [vmem:[%s3 + $0xa0] sm:$0xff]
        %v586 = vld [vmem:[%s3 + $0xa8] sm:$0xff]
        %v587 = vld [vmem:[%s3 + $0xb0] sm:$0xff]
        %v588 = vld [vmem:[%s3 + $0xb8] sm:$0xff]
        %v589 = vld [vmem:[%s3 + $0xc0] sm:$0xff]
        %v590 = vld [vmem:[%s3 + $0xc8] sm:$0xff]
        %v591 = vld [vmem:[%s3 + $0xd0] sm:$0xff]
        %v592 = vld [vmem:[%s3 + $0xd8] sm:$0xff]
        %v593 = vld [vmem:[%s3 + $0xe0] sm:$0xff]
        %v594 = vld [vmem:[%s3 + $0xe8] sm:$0xff]
        %v595 = vld [vmem:[%s3 + $0xf0] sm:$0xff]
        %v596 = vld [vmem:[%s3 + $0xf8] sm:$0xff]
        %v597 = vld [vmem:[%s3 + $0x100] sm:$0xff]
        %v598 = vld [vmem:[%s3 + $0x108] sm:$0xff]
        %v599 = vld [vmem:[%s3 + $0x110] sm:$0xff]
        %v600 = vld [vmem:[%s3 + $0x118] sm:$0xff]
        %v601 = vld [vmem:[%s3 + $0x120] sm:$0xff]
        %v602 = vld [vmem:[%s3 + $0x128] sm:$0xff]
        %v603 = vld [vmem:[%s3 + $0x130] sm:$0xff]
        %v604 = vld [vmem:[%s3 + $0x138] sm:$0xff]
        %v605 = vld [vmem:[%s3 + $0x140] sm:$0xff]
        %v606 = vld [vmem:[%s3 + $0x148] sm:$0xff]
        %v607 = vld [vmem:[%s3 + $0x150] sm:$0xff]
        %v608 = vld [vmem:[%s3 + $0x158] sm:$0xff]
        %v609 = vld [vmem:[%s3 + $0x160] sm:$0xff]
        %v610 = vld [vmem:[%s3 + $0x168] sm:$0xff]
        %v611 = vld [vmem:[%s3 + $0x170] sm:$0xff]
        %v612 = vld [vmem:[%s3 + $0x178] sm:$0xff]
        %v613 = vld [vmem:[%s3 + $0x180] sm:$0xff]
        %v614 = vld [vmem:[%s3 + $0x188] sm:$0xff]
        %v615 = vld [vmem:[%s3 + $0x190] sm:$0xff]
        %v616 = vld [vmem:[%s3 + $0x198] sm:$0xff]
        %v617 = vld [vmem:[%s3 + $0x1a0] sm:$0xff]
        %v618 = vld [vmem:[%s3 + $0x1a8] sm:$0xff]
        %v619 = vld [vmem:[%s3 + $0x1b0] sm:$0xff]
        %v620 = vld [vmem:[%s3 + $0x1b8] sm:$0xff]
        %v621 = vld [vmem:[%s3 + $0x1c0] sm:$0xff]
        %v622 = vld [vmem:[%s3 + $0x1c8] sm:$0xff]
        %v623 = vld [vmem:[%s3 + $0x1d0] sm:$0xff]
        %v624 = vld [vmem:[%s3 + $0x1d8] sm:$0xff]
        %v625 = vld [vmem:[%s3 + $0x1e0] sm:$0xff]
        %v626 = vld [vmem:[%s3 + $0x1e8] sm:$0xff]
        %v627 = vld [vmem:[%s3 + $0x1f0] sm:$0xff]
        %v628 = vld [vmem:[%s3 + $0x1f8] sm:$0xff]
        %v629 = vld [vmem:[%s3 + $0x200] sm:$0xff]
        %v630 = vld [vmem:[%s3 + $0x208] sm:$0xff]
        %v631 = vld [vmem:[%s3 + $0x210] sm:$0xff]
        %v632 = vld [vmem:[%s3 + $0x218] sm:$0xff]
        %v633 = vld [vmem:[%s3 + $0x220] sm:$0xff]
        %v634 = vld [vmem:[%s3 + $0x228] sm:$0xff]
        %v635 = vld [vmem:[%s3 + $0x230] sm:$0xff]
        %v636 = vld [vmem:[%s3 + $0x238] sm:$0xff]
        %v637 = vld [vmem:[%s3 + $0x240] sm:$0xff]
        %v638 = vld [vmem:[%s3 + $0x248] sm:$0xff]
        %v639 = vld [vmem:[%s3 + $0x250] sm:$0xff]
        %v640 = vld [vmem:[%s3 + $0x258] sm:$0xff]
        %v641 = vld [vmem:[%s3 + $0x260] sm:$0xff]
        %v642 = vld [vmem:[%s3 + $0x268] sm:$0xff]
        %v643 = vld [vmem:[%s3 + $0x270] sm:$0xff]
        %v644 = vld [vmem:[%s3 + $0x278] sm:$0xff]
        %v645 = vld [vmem:[%s3 + $0x280] sm:$0xff]
        %v646 = vld [vmem:[%s3 + $0x288] sm:$0xff]
        %v647 = vld [vmem:[%s3 + $0x290] sm:$0xff]
        %v648 = vld [vmem:[%s3 + $0x298] sm:$0xff]
        %v649 = vld [vmem:[%s3 + $0x2a0] sm:$0xff]
        %v650 = vld [vmem:[%s3 + $0x2a8] sm:$0xff]
        %v651 = vld [vmem:[%s3 + $0x2b0] sm:$0xff]
        %v652 = vld [vmem:[%s3 + $0x2b8] sm:$0xff]
        %v653 = vld [vmem:[%s3 + $0x2c0] sm:$0xff]
        %v654 = vld [vmem:[%s3 + $0x2c8] sm:$0xff]
        %v655 = vld [vmem:[%s3 + $0x2d0] sm:$0xff]
        %v656 = vld [vmem:[%s3 + $0x2d8] sm:$0xff]
        %v657 = vld [vmem:[%s3 + $0x2e0] sm:$0xff]
        %v658 = vld [vmem:[%s3 + $0x2e8] sm:$0xff]
        %v659 = vld [vmem:[%s3 + $0x2f0] sm:$0xff]
        %v660 = vld [vmem:[%s3 + $0x2f8] sm:$0xff]
        %v661 = vld [vmem:[%s3 + $0x300] sm:$0xff]
        %v662 = vld [vmem:[%s3 + $0x308] sm:$0xff]
        %v663 = vld [vmem:[%s3 + $0x310] sm:$0xff]
        %v664 = vld [vmem:[%s3 + $0x318] sm:$0xff]
        %v665 = vld [vmem:[%s3 + $0x320] sm:$0xff]
        %v666 = vld [vmem:[%s3 + $0x328] sm:$0xff]
        %v667 = vld [vmem:[%s3 + $0x330] sm:$0xff]
        %v668 = vld [vmem:[%s3 + $0x338] sm:$0xff]
        %v669 = vld [vmem:[%s3 + $0x340] sm:$0xff]
        %v670 = vld [vmem:[%s3 + $0x348] sm:$0xff]
        %v671 = vld [vmem:[%s3 + $0x350] sm:$0xff]
        %v672 = vld [vmem:[%s3 + $0x358] sm:$0xff]
        %v673 = vld [vmem:[%s3 + $0x360] sm:$0xff]
        %v674 = vld [vmem:[%s3 + $0x368] sm:$0xff]
        %v675 = vld [vmem:[%s3 + $0x370] sm:$0xff]
        %v676 = vld [vmem:[%s3 + $0x378] sm:$0xff]
        %v677 = vld [vmem:[%s3 + $0x380] sm:$0xff]
        %v678 = vld [vmem:[%s3 + $0x388] sm:$0xff]
        %v679 = vld [vmem:[%s3 + $0x390] sm:$0xff]
        %v680 = vld [vmem:[%s3 + $0x398] sm:$0xff]
        %v681 = vld [vmem:[%s3 + $0x3a0] sm:$0xff]
        %v682 = vld [vmem:[%s3 + $0x3a8] sm:$0xff]
        %v683 = vld [vmem:[%s3 + $0x3b0] sm:$0xff]
        %v684 = vld [vmem:[%s3 + $0x3b8] sm:$0xff]
        %v685 = vld [vmem:[%s3 + $0x3c0] sm:$0xff]
        %v686 = vld [vmem:[%s3 + $0x3c8] sm:$0xff]
        %v687 = vld [vmem:[%s3 + $0x3d0] sm:$0xff]
        %v688 = vld [vmem:[%s3 + $0x3d8] sm:$0xff]
        %v689 = vld [vmem:[%s3 + $0x3e0] sm:$0xff]
        %v690 = vld [vmem:[%s3 + $0x3e8] sm:$0xff]
        %v691 = vld [vmem:[%s3 + $0x3f0] sm:$0xff]
        %v692 = vld [vmem:[%s3 + $0x3f8] sm:$0xff]
        %v693 = vld [vmem:[%s3 + $0x400] sm:$0xff]
        %v694 = vld [vmem:[%s3 + $0x408] sm:$0xff]
        %v695 = vld [vmem:[%s3 + $0x410] sm:$0xff]
        %v696 = vld [vmem:[%s3 + $0x418] sm:$0xff]
        %v697 = vld [vmem:[%s3 + $0x420] sm:$0xff]
        %v698 = vld [vmem:[%s3 + $0x428] sm:$0xff]
        %v699 = vld [vmem:[%s3 + $0x430] sm:$0xff]
        %v700 = vld [vmem:[%s3 + $0x438] sm:$0xff]
        %v701 = vld [vmem:[%s3 + $0x440] sm:$0xff]
        %v702 = vld [vmem:[%s3 + $0x448] sm:$0xff]
        %v703 = vld [vmem:[%s3 + $0x450] sm:$0xff]
        %v704 = vld [vmem:[%s3 + $0x458] sm:$0xff]
        %v705 = vld [vmem:[%s3 + $0x460] sm:$0xff]
        %v706 = vld [vmem:[%s3 + $0x468] sm:$0xff]
        %v707 = vld [vmem:[%s3 + $0x470] sm:$0xff]
        %v708 = vld [vmem:[%s3 + $0x478] sm:$0xff]
        %v709 = vld [vmem:[%s3 + $0x480] sm:$0xff]
        %v710 = vld [vmem:[%s3 + $0x488] sm:$0xff]
        %v711 = vld [vmem:[%s3 + $0x490] sm:$0xff]
        %v712 = vld [vmem:[%s3 + $0x498] sm:$0xff]
        %v713 = vld [vmem:[%s3 + $0x4a0] sm:$0xff]
        %v714 = vld [vmem:[%s3 + $0x4a8] sm:$0xff]
        %v715 = vld [vmem:[%s3 + $0x4b0] sm:$0xff]
        %v716 = vld [vmem:[%s3 + $0x4b8] sm:$0xff]
        %v717 = vld [vmem:[%s3 + $0x4c0] sm:$0xff]
        %v718 = vld [vmem:[%s3 + $0x4c8] sm:$0xff]
        %v719 = vld [vmem:[%s3 + $0x4d0] sm:$0xff]
        %v720 = vld [vmem:[%s3 + $0x4d8] sm:$0xff]
        %v721 = vld [vmem:[%s3 + $0x4e0] sm:$0xff]
        %v722 = vld [vmem:[%s3 + $0x4e8] sm:$0xff]
        %v723 = vld [vmem:[%s3 + $0x4f0] sm:$0xff]
        %v724 = vld [vmem:[%s3 + $0x4f8] sm:$0xff]
        %v725 = vld [vmem:[%s3 + $0x500] sm:$0xff]
        %v726 = vld [vmem:[%s3 + $0x508] sm:$0xff]
        %v727 = vld [vmem:[%s3 + $0x510] sm:$0xff]
        %v728 = vld [vmem:[%s3 + $0x518] sm:$0xff]
        %v729 = vld [vmem:[%s3 + $0x520] sm:$0xff]
        %v730 = vld [vmem:[%s3 + $0x528] sm:$0xff]
        %v731 = vld [vmem:[%s3 + $0x530] sm:$0xff]
        %v732 = vld [vmem:[%s3 + $0x538] sm:$0xff]
        %v733 = vld [vmem:[%s3 + $0x540] sm:$0xff]
        %v734 = vld [vmem:[%s3 + $0x548] sm:$0xff]
        %v735 = vld [vmem:[%s3 + $0x550] sm:$0xff]
        %v736 = vld [vmem:[%s3 + $0x558] sm:$0xff]
        %v737 = vld [vmem:[%s3 + $0x560] sm:$0xff]
        %v738 = vld [vmem:[%s3 + $0x568] sm:$0xff]
        %v739 = vld [vmem:[%s3 + $0x570] sm:$0xff]
        %v740 = vld [vmem:[%s3 + $0x578] sm:$0xff]
        %v741 = vld [vmem:[%s3 + $0x580] sm:$0xff]
        %v742 = vld [vmem:[%s3 + $0x588] sm:$0xff]
        %v743 = vld [vmem:[%s3 + $0x590] sm:$0xff]
        %v744 = vld [vmem:[%s3 + $0x598] sm:$0xff]
        %v745 = vld [vmem:[%s3 + $0x5a0] sm:$0xff]
        %v746 = vld [vmem:[%s3 + $0x5a8] sm:$0xff]
        %v747 = vld [vmem:[%s3 + $0x5b0] sm:$0xff]
        %v748 = vld [vmem:[%s3 + $0x5b8] sm:$0xff]
        %v749 = vld [vmem:[%s3 + $0x5c0] sm:$0xff]
        %v750 = vld [vmem:[%s3 + $0x5c8] sm:$0xff]
        %v751 = vld [vmem:[%s3 + $0x5d0] sm:$0xff]
        %v752 = vld [vmem:[%s3 + $0x5d8] sm:$0xff]
        %v753 = vld [vmem:[%s3 + $0x5e0] sm:$0xff]
        %v754 = vld [vmem:[%s3 + $0x5e8] sm:$0xff]
        %v755 = vld [vmem:[%s3 + $0x5f0] sm:$0xff]
        %v756 = vld [vmem:[%s3 + $0x5f8] sm:$0xff]
        %v757 = vld [vmem:[%s3 + $0x600] sm:$0xff]
        %v758 = vld [vmem:[%s3 + $0x608] sm:$0xff]
        %v759 = vld [vmem:[%s3 + $0x610] sm:$0xff]
        %v760 = vld [vmem:[%s3 + $0x618] sm:$0xff]
        %v761 = vld [vmem:[%s3 + $0x620] sm:$0xff]
        %v762 = vld [vmem:[%s3 + $0x628] sm:$0xff]
        %v763 = vld [vmem:[%s3 + $0x630] sm:$0xff]
        %v764 = vld [vmem:[%s3 + $0x638] sm:$0xff]
        %v765 = vld [vmem:[%s3 + $0x640] sm:$0xff]
        %v766 = vld [vmem:[%s3 + $0x648] sm:$0xff]
        %v767 = vld [vmem:[%s3 + $0x650] sm:$0xff]
        %v768 = vld [vmem:[%s3 + $0x658] sm:$0xff]
        %v769 = vld [vmem:[%s3 + $0x660] sm:$0xff]
        %v770 = vld [vmem:[%s3 + $0x668] sm:$0xff]
        %v771 = vld [vmem:[%s3 + $0x670] sm:$0xff]
        %v772 = vld [vmem:[%s3 + $0x678] sm:$0xff]
        %v773 = vld [vmem:[%s3 + $0x680] sm:$0xff]
        %v774 = vld [vmem:[%s3 + $0x688] sm:$0xff]
        %v775 = vld [vmem:[%s3 + $0x690] sm:$0xff]
        %v776 = vld [vmem:[%s3 + $0x698] sm:$0xff]
        %v777 = vld [vmem:[%s3 + $0x6a0] sm:$0xff]
        %v778 = vld [vmem:[%s3 + $0x6a8] sm:$0xff]
        %v779 = vld [vmem:[%s3 + $0x6b0] sm:$0xff]
        %v780 = vld [vmem:[%s3 + $0x6b8] sm:$0xff]
        %v781 = vld [vmem:[%s3 + $0x6c0] sm:$0xff]
        %v782 = vld [vmem:[%s3 + $0x6c8] sm:$0xff]
        %v783 = vld [vmem:[%s3 + $0x6d0] sm:$0xff]
        %v784 = vld [vmem:[%s3 + $0x6d8] sm:$0xff]
        %v785 = vld [vmem:[%s3 + $0x6e0] sm:$0xff]
        %v786 = vld [vmem:[%s3 + $0x6e8] sm:$0xff]
        %v787 = vld [vmem:[%s3 + $0x6f0] sm:$0xff]
        %v788 = vld [vmem:[%s3 + $0x6f8] sm:$0xff]
        %v789 = vld [vmem:[%s3 + $0x700] sm:$0xff]
        %v790 = vld [vmem:[%s3 + $0x708] sm:$0xff]
        %v791 = vld [vmem:[%s3 + $0x710] sm:$0xff]
        %v792 = vld [vmem:[%s3 + $0x718] sm:$0xff]
        %v793 = vld [vmem:[%s3 + $0x720] sm:$0xff]
        %v794 = vld [vmem:[%s3 + $0x728] sm:$0xff]
        %v795 = vld [vmem:[%s3 + $0x730] sm:$0xff]
        %v796 = vld [vmem:[%s3 + $0x738] sm:$0xff]
        %v797 = vld [vmem:[%s3 + $0x740] sm:$0xff]
        %v798 = vld [vmem:[%s3 + $0x748] sm:$0xff]
        %v799 = vld [vmem:[%s3 + $0x750] sm:$0xff]
        %v800 = vld [vmem:[%s3 + $0x758] sm:$0xff]
        %v801 = vld [vmem:[%s3 + $0x760] sm:$0xff]
        %v802 = vld [vmem:[%s3 + $0x768] sm:$0xff]
        %v803 = vld [vmem:[%s3 + $0x770] sm:$0xff]
        %v804 = vld [vmem:[%s3 + $0x778] sm:$0xff]
        %v805 = vld [vmem:[%s3 + $0x780] sm:$0xff]
        %v806 = vld [vmem:[%s3 + $0x788] sm:$0xff]
        %v807 = vld [vmem:[%s3 + $0x790] sm:$0xff]
        %v808 = vld [vmem:[%s3 + $0x798] sm:$0xff]
        %v809 = vld [vmem:[%s3 + $0x7a0] sm:$0xff]
        %v810 = vld [vmem:[%s3 + $0x7a8] sm:$0xff]
        %v811 = vld [vmem:[%s3 + $0x7b0] sm:$0xff]
        %v812 = vld [vmem:[%s3 + $0x7b8] sm:$0xff]
        %v813 = vld [vmem:[%s3 + $0x7c0] sm:$0xff]
        %v814 = vld [vmem:[%s3 + $0x7c8] sm:$0xff]
        %v815 = vld [vmem:[%s3 + $0x7d0] sm:$0xff]
        %v816 = vld [vmem:[%s3 + $0x7d8] sm:$0xff]
        %v817 = vld [vmem:[%s3 + $0x7e0] sm:$0xff]
        %v818 = vld [vmem:[%s3 + $0x7e8] sm:$0xff]
        %v819 = vld [vmem:[%s3 + $0x7f0] sm:$0xff]
        %v820 = vld [vmem:[%s3 + $0x7f8] sm:$0xff]
        %v825 = vrot.slane %v523, 2
        %v826 = vrot.slane %v536, 2
        %v827 = vrot.slane %v549, 2
        %v828 = vrot.slane %v562, 2
        %833 = vmatpush.msra.mxu0 %v625
        %834 = vmatpush.msra.mxu0 %v621
        %835 = vmatpush.msra.mxu0 %v617
        %836 = vmatpush.msra.mxu0 %v613
        %837 = vmatpush.msra.mxu0 %v609
        %838 = vmatpush.msra.mxu0 %v605
        %839 = vmatpush.msra.mxu0 %v601
        %840 = vmatpush.msra.mxu0 %v597
        %841 = vmatpush.msra.mxu0 %v593
        %842 = vmatpush.msra.mxu0 %v589
        %843 = vmatpush.msra.mxu0 %v585
        %844 = vmatpush.msra.mxu0 %v581
        %845 = vmatpush.msra.mxu0 %v577
        %846 = vmatpush.msra.mxu0 %v573
        %847 = vmatpush.msra.mxu0 %v569
        %848 = vmatpush.msra.mxu0 %v565
        %849 = vmatmul.f32.gmra.mxu0 %v825
        %v850 = vpop.f32.mrf.mxu0
        %v851 = vadd.f32 0.0, %v850
        %852 = vdwg.mxu0
        %853 = vmatpush.msra.mxu0 %v689
        %854 = vmatpush.msra.mxu0 %v685
        %855 = vmatpush.msra.mxu0 %v681
        %856 = vmatpush.msra.mxu0 %v677
        %857 = vmatpush.msra.mxu0 %v673
        %858 = vmatpush.msra.mxu0 %v669
        %859 = vmatpush.msra.mxu0 %v665
        %860 = vmatpush.msra.mxu0 %v661
        %861 = vmatpush.msra.mxu0 %v657
        %862 = vmatpush.msra.mxu0 %v653
        %863 = vmatpush.msra.mxu0 %v649
        %864 = vmatpush.msra.mxu0 %v645
        %865 = vmatpush.msra.mxu0 %v641
        %866 = vmatpush.msra.mxu0 %v637
        %867 = vmatpush.msra.mxu0 %v633
        %868 = vmatpush.msra.mxu0 %v629
        %869 = vmatmul.f32.gmra.mxu0 %v826
        %v870 = vpop.f32.mrf.mxu0
        %v871 = vadd.f32 %v851, %v870
        %872 = vdwg.mxu0
        %873 = vmatpush.msra.mxu0 %v753
        %874 = vmatpush.msra.mxu0 %v749
        %875 = vmatpush.msra.mxu0 %v745
        %876 = vmatpush.msra.mxu0 %v741
        %877 = vmatpush.msra.mxu0 %v737
        %878 = vmatpush.msra.mxu0 %v733
        %879 = vmatpush.msra.mxu0 %v729
        %880 = vmatpush.msra.mxu0 %v725
        %881 = vmatpush.msra.mxu0 %v721
        %882 = vmatpush.msra.mxu0 %v717
        %883 = vmatpush.msra.mxu0 %v713
        %884 = vmatpush.msra.mxu0 %v709
        %885 = vmatpush.msra.mxu0 %v705
        %886 = vmatpush.msra.mxu0 %v701
        %887 = vmatpush.msra.mxu0 %v697
        %888 = vmatpush.msra.mxu0 %v693
        %889 = vmatmul.f32.gmra.mxu0 %v827
        %v890 = vpop.f32.mrf.mxu0
        %v891 = vadd.f32 %v871, %v890
        %892 = vdwg.mxu0
        %893 = vmatpush.msra.mxu0 %v817
        %894 = vmatpush.msra.mxu0 %v813
        %895 = vmatpush.msra.mxu0 %v809
        %896 = vmatpush.msra.mxu0 %v805
        %897 = vmatpush.msra.mxu0 %v801
        %898 = vmatpush.msra.mxu0 %v797
        %899 = vmatpush.msra.mxu0 %v793
        %900 = vmatpush.msra.mxu0 %v789
        %901 = vmatpush.msra.mxu0 %v785
        %902 = vmatpush.msra.mxu0 %v781
        %903 = vmatpush.msra.mxu0 %v777
        %904 = vmatpush.msra.mxu0 %v773
        %905 = vmatpush.msra.mxu0 %v769
        %906 = vmatpush.msra.mxu0 %v765
        %907 = vmatpush.msra.mxu0 %v761
        %908 = vmatpush.msra.mxu0 %v757
        %909 = vmatmul.f32.gmra.mxu0 %v828
        %v910 = vpop.f32.mrf.mxu0
        %v911 = vadd.f32 %v891, %v910
        %912 = vdwg.mxu0
        %913 = vmatpush.msra.mxu0 %v626
        %914 = vmatpush.msra.mxu0 %v622
        %915 = vmatpush.msra.mxu0 %v618
        %916 = vmatpush.msra.mxu0 %v614
        %917 = vmatpush.msra.mxu0 %v610
        %918 = vmatpush.msra.mxu0 %v606
        %919 = vmatpush.msra.mxu0 %v602
        %920 = vmatpush.msra.mxu0 %v598
        %921 = vmatpush.msra.mxu0 %v594
        %922 = vmatpush.msra.mxu0 %v590
        %923 = vmatpush.msra.mxu0 %v586
        %924 = vmatpush.msra.mxu0 %v582
        %925 = vmatpush.msra.mxu0 %v578
        %926 = vmatpush.msra.mxu0 %v574
        %927 = vmatpush.msra.mxu0 %v570
        %928 = vmatpush.msra.mxu0 %v566
        %929 = vmatmul.f32.gmra.mxu0 %v825
        %v930 = vpop.f32.mrf.mxu0
        %v931 = vadd.f32 0.0, %v930
        %932 = vdwg.mxu0
        %933 = vmatpush.msra.mxu0 %v690
        %934 = vmatpush.msra.mxu0 %v686
        %935 = vmatpush.msra.mxu0 %v682
        %936 = vmatpush.msra.mxu0 %v678
        %937 = vmatpush.msra.mxu0 %v674
        %938 = vmatpush.msra.mxu0 %v670
        %939 = vmatpush.msra.mxu0 %v666
        %940 = vmatpush.msra.mxu0 %v662
        %941 = vmatpush.msra.mxu0 %v658
        %942 = vmatpush.msra.mxu0 %v654
        %943 = vmatpush.msra.mxu0 %v650
        %944 = vmatpush.msra.mxu0 %v646
        %945 = vmatpush.msra.mxu0 %v642
        %946 = vmatpush.msra.mxu0 %v638
        %947 = vmatpush.msra.mxu0 %v634
        %948 = vmatpush.msra.mxu0 %v630
        %949 = vmatmul.f32.gmra.mxu0 %v826
        %v950 = vpop.f32.mrf.mxu0
        %v951 = vadd.f32 %v931, %v950
        %952 = vdwg.mxu0
        %953 = vmatpush.msra.mxu0 %v754
        %954 = vmatpush.msra.mxu0 %v750
        %955 = vmatpush.msra.mxu0 %v746
        %956 = vmatpush.msra.mxu0 %v742
        %957 = vmatpush.msra.mxu0 %v738
        %958 = vmatpush.msra.mxu0 %v734
        %959 = vmatpush.msra.mxu0 %v730
        %960 = vmatpush.msra.mxu0 %v726
        %961 = vmatpush.msra.mxu0 %v722
        %962 = vmatpush.msra.mxu0 %v718
        %963 = vmatpush.msra.mxu0 %v714
        %964 = vmatpush.msra.mxu0 %v710
        %965 = vmatpush.msra.mxu0 %v706
        %966 = vmatpush.msra.mxu0 %v702
        %967 = vmatpush.msra.mxu0 %v698
        %968 = vmatpush.msra.mxu0 %v694
        %969 = vmatmul.f32.gmra.mxu0 %v827
        %v970 = vpop.f32.mrf.mxu0
        %v971 = vadd.f32 %v951, %v970
        %972 = vdwg.mxu0
        %973 = vmatpush.msra.mxu0 %v818
        %974 = vmatpush.msra.mxu0 %v814
        %975 = vmatpush.msra.mxu0 %v810
        %976 = vmatpush.msra.mxu0 %v806
        %977 = vmatpush.msra.mxu0 %v802
        %978 = vmatpush.msra.mxu0 %v798
        %979 = vmatpush.msra.mxu0 %v794
        %980 = vmatpush.msra.mxu0 %v790
        %981 = vmatpush.msra.mxu0 %v786
        %982 = vmatpush.msra.mxu0 %v782
        %983 = vmatpush.msra.mxu0 %v778
        %984 = vmatpush.msra.mxu0 %v774
        %985 = vmatpush.msra.mxu0 %v770
        %986 = vmatpush.msra.mxu0 %v766
        %987 = vmatpush.msra.mxu0 %v762
        %988 = vmatpush.msra.mxu0 %v758
        %989 = vmatmul.f32.gmra.mxu0 %v828
        %v990 = vpop.f32.mrf.mxu0
        %v991 = vadd.f32 %v971, %v990
        %992 = vdwg.mxu0
        %993 = vmatpush.msra.mxu0 %v627
        %994 = vmatpush.msra.mxu0 %v623
        %995 = vmatpush.msra.mxu0 %v619
        %996 = vmatpush.msra.mxu0 %v615
        %997 = vmatpush.msra.mxu0 %v611
        %998 = vmatpush.msra.mxu0 %v607
        %999 = vmatpush.msra.mxu0 %v603
        %1000 = vmatpush.msra.mxu0 %v599
        %1001 = vmatpush.msra.mxu0 %v595
        %1002 = vmatpush.msra.mxu0 %v591
        %1003 = vmatpush.msra.mxu0 %v587
        %1004 = vmatpush.msra.mxu0 %v583
        %1005 = vmatpush.msra.mxu0 %v579
        %1006 = vmatpush.msra.mxu0 %v575
        %1007 = vmatpush.msra.mxu0 %v571
        %1008 = vmatpush.msra.mxu0 %v567
        %1009 = vmatmul.f32.gmra.mxu0 %v825
        %v1010 = vpop.f32.mrf.mxu0
        %v1011 = vadd.f32 0.0, %v1010
        %1012 = vdwg.mxu0
        %1013 = vmatpush.msra.mxu0 %v691
        %1014 = vmatpush.msra.mxu0 %v687
        %1015 = vmatpush.msra.mxu0 %v683
        %1016 = vmatpush.msra.mxu0 %v679
        %1017 = vmatpush.msra.mxu0 %v675
        %1018 = vmatpush.msra.mxu0 %v671
        %1019 = vmatpush.msra.mxu0 %v667
        %1020 = vmatpush.msra.mxu0 %v663
        %1021 = vmatpush.msra.mxu0 %v659
        %1022 = vmatpush.msra.mxu0 %v655
        %1023 = vmatpush.msra.mxu0 %v651
        %1024 = vmatpush.msra.mxu0 %v647
        %1025 = vmatpush.msra.mxu0 %v643
        %1026 = vmatpush.msra.mxu0 %v639
        %1027 = vmatpush.msra.mxu0 %v635
        %1028 = vmatpush.msra.mxu0 %v631
        %1029 = vmatmul.f32.gmra.mxu0 %v826
        %v1030 = vpop.f32.mrf.mxu0
        %v1031 = vadd.f32 %v1011, %v1030
        %1032 = vdwg.mxu0
        %1033 = vmatpush.msra.mxu0 %v755
        %1034 = vmatpush.msra.mxu0 %v751
        %1035 = vmatpush.msra.mxu0 %v747
        %1036 = vmatpush.msra.mxu0 %v743
        %1037 = vmatpush.msra.mxu0 %v739
        %1038 = vmatpush.msra.mxu0 %v735
        %1039 = vmatpush.msra.mxu0 %v731
        %1040 = vmatpush.msra.mxu0 %v727
        %1041 = vmatpush.msra.mxu0 %v723
        %1042 = vmatpush.msra.mxu0 %v719
        %1043 = vmatpush.msra.mxu0 %v715
        %1044 = vmatpush.msra.mxu0 %v711
        %1045 = vmatpush.msra.mxu0 %v707
        %1046 = vmatpush.msra.mxu0 %v703
        %1047 = vmatpush.msra.mxu0 %v699
        %1048 = vmatpush.msra.mxu0 %v695
        %1049 = vmatmul.f32.gmra.mxu0 %v827
        %v1050 = vpop.f32.mrf.mxu0
        %v1051 = vadd.f32 %v1031, %v1050
        %1052 = vdwg.mxu0
        %1053 = vmatpush.msra.mxu0 %v819
        %1054 = vmatpush.msra.mxu0 %v815
        %1055 = vmatpush.msra.mxu0 %v811
        %1056 = vmatpush.msra.mxu0 %v807
        %1057 = vmatpush.msra.mxu0 %v803
        %1058 = vmatpush.msra.mxu0 %v799
        %1059 = vmatpush.msra.mxu0 %v795
        %1060 = vmatpush.msra.mxu0 %v791
        %1061 = vmatpush.msra.mxu0 %v787
        %1062 = vmatpush.msra.mxu0 %v783
        %1063 = vmatpush.msra.mxu0 %v779
        %1064 = vmatpush.msra.mxu0 %v775
        %1065 = vmatpush.msra.mxu0 %v771
        %1066 = vmatpush.msra.mxu0 %v767
        %1067 = vmatpush.msra.mxu0 %v763
        %1068 = vmatpush.msra.mxu0 %v759
        %1069 = vmatmul.f32.gmra.mxu0 %v828
        %v1070 = vpop.f32.mrf.mxu0
        %v1071 = vadd.f32 %v1051, %v1070
        %1072 = vdwg.mxu0
        %1073 = vmatpush.msra.mxu0 %v628
        %1074 = vmatpush.msra.mxu0 %v624
        %1075 = vmatpush.msra.mxu0 %v620
        %1076 = vmatpush.msra.mxu0 %v616
        %1077 = vmatpush.msra.mxu0 %v612
        %1078 = vmatpush.msra.mxu0 %v608
        %1079 = vmatpush.msra.mxu0 %v604
        %1080 = vmatpush.msra.mxu0 %v600
        %1081 = vmatpush.msra.mxu0 %v596
        %1082 = vmatpush.msra.mxu0 %v592
        %1083 = vmatpush.msra.mxu0 %v588
        %1084 = vmatpush.msra.mxu0 %v584
        %1085 = vmatpush.msra.mxu0 %v580
        %1086 = vmatpush.msra.mxu0 %v576
        %1087 = vmatpush.msra.mxu0 %v572
        %1088 = vmatpush.msra.mxu0 %v568
        %1089 = vmatmul.f32.gmra.mxu0 %v825
        %v1090 = vpop.f32.mrf.mxu0
        %v1091 = vadd.f32 0.0, %v1090
        %1092 = vdwg.mxu0
        %1093 = vmatpush.msra.mxu0 %v692
        %1094 = vmatpush.msra.mxu0 %v688
        %1095 = vmatpush.msra.mxu0 %v684
        %1096 = vmatpush.msra.mxu0 %v680
        %1097 = vmatpush.msra.mxu0 %v676
        %1098 = vmatpush.msra.mxu0 %v672
        %1099 = vmatpush.msra.mxu0 %v668
        %1100 = vmatpush.msra.mxu0 %v664
        %1101 = vmatpush.msra.mxu0 %v660
        %1102 = vmatpush.msra.mxu0 %v656
        %1103 = vmatpush.msra.mxu0 %v652
        %1104 = vmatpush.msra.mxu0 %v648
        %1105 = vmatpush.msra.mxu0 %v644
        %1106 = vmatpush.msra.mxu0 %v640
        %1107 = vmatpush.msra.mxu0 %v636
        %1108 = vmatpush.msra.mxu0 %v632
        %1109 = vmatmul.f32.gmra.mxu0 %v826
        %v1110 = vpop.f32.mrf.mxu0
        %v1111 = vadd.f32 %v1091, %v1110
        %1112 = vdwg.mxu0
        %1113 = vmatpush.msra.mxu0 %v756
        %1114 = vmatpush.msra.mxu0 %v752
        %1115 = vmatpush.msra.mxu0 %v748
        %1116 = vmatpush.msra.mxu0 %v744
        %1117 = vmatpush.msra.mxu0 %v740
        %1118 = vmatpush.msra.mxu0 %v736
        %1119 = vmatpush.msra.mxu0 %v732
        %1120 = vmatpush.msra.mxu0 %v728
        %1121 = vmatpush.msra.mxu0 %v724
        %1122 = vmatpush.msra.mxu0 %v720
        %1123 = vmatpush.msra.mxu0 %v716
        %1124 = vmatpush.msra.mxu0 %v712
        %1125 = vmatpush.msra.mxu0 %v708
        %1126 = vmatpush.msra.mxu0 %v704
        %1127 = vmatpush.msra.mxu0 %v700
        %1128 = vmatpush.msra.mxu0 %v696
        %1129 = vmatmul.f32.gmra.mxu0 %v827
        %v1130 = vpop.f32.mrf.mxu0
        %v1131 = vadd.f32 %v1111, %v1130
        %1132 = vdwg.mxu0
        %1133 = vmatpush.msra.mxu0 %v820
        %1134 = vmatpush.msra.mxu0 %v816
        %1135 = vmatpush.msra.mxu0 %v812
        %1136 = vmatpush.msra.mxu0 %v808
        %1137 = vmatpush.msra.mxu0 %v804
        %1138 = vmatpush.msra.mxu0 %v800
        %1139 = vmatpush.msra.mxu0 %v796
        %1140 = vmatpush.msra.mxu0 %v792
        %1141 = vmatpush.msra.mxu0 %v788
        %1142 = vmatpush.msra.mxu0 %v784
        %1143 = vmatpush.msra.mxu0 %v780
        %1144 = vmatpush.msra.mxu0 %v776
        %1145 = vmatpush.msra.mxu0 %v772
        %1146 = vmatpush.msra.mxu0 %v768
        %1147 = vmatpush.msra.mxu0 %v764
        %1148 = vmatpush.msra.mxu0 %v760
        %1149 = vmatmul.f32.gmra.mxu0 %v828
        %v1150 = vpop.f32.mrf.mxu0
        %v1151 = vadd.f32 %v1131, %v1150
        %1152 = vdwg.mxu0
        %v1153 = vadd.f32 %v523, %v911
        %v1154 = vadd.f32 %v536, %v991
        %v1155 = vadd.f32 %v549, %v1071
        %v1156 = vadd.f32 %v562, %v1151
        %v1157 = vrot.slane %v523, 6
        %v1158 = vrot.slane %v536, 6
        %v1159 = vrot.slane %v549, 6
        %v1160 = vrot.slane %v562, 6
        %1165 = vmatpush.msra.mxu0 %v625
        %1166 = vmatpush.msra.mxu0 %v621
        %1167 = vmatpush.msra.mxu0 %v617
        %1168 = vmatpush.msra.mxu0 %v613
        %1169 = vmatpush.msra.mxu0 %v609
        %1170 = vmatpush.msra.mxu0 %v605
        %1171 = vmatpush.msra.mxu0 %v601
        %1172 = vmatpush.msra.mxu0 %v597
        %1173 = vmatpush.msra.mxu0 %v593
        %1174 = vmatpush.msra.mxu0 %v589
        %1175 = vmatpush.msra.mxu0 %v585
        %1176 = vmatpush.msra.mxu0 %v581
        %1177 = vmatpush.msra.mxu0 %v577
        %1178 = vmatpush.msra.mxu0 %v573
        %1179 = vmatpush.msra.mxu0 %v569
        %1180 = vmatpush.msra.mxu0 %v565
        %1181 = vmatmul.f32.gmra.mxu0 %v1157
        %v1182 = vpop.f32.mrf.mxu0
        %v1183 = vadd.f32 0.0, %v1182
        %1184 = vdwg.mxu0
        %1185 = vmatpush.msra.mxu0 %v689
        %1186 = vmatpush.msra.mxu0 %v685
        %1187 = vmatpush.msra.mxu0 %v681
        %1188 = vmatpush.msra.mxu0 %v677
        %1189 = vmatpush.msra.mxu0 %v673
        %1190 = vmatpush.msra.mxu0 %v669
        %1191 = vmatpush.msra.mxu0 %v665
        %1192 = vmatpush.msra.mxu0 %v661
        %1193 = vmatpush.msra.mxu0 %v657
        %1194 = vmatpush.msra.mxu0 %v653
        %1195 = vmatpush.msra.mxu0 %v649
        %1196 = vmatpush.msra.mxu0 %v645
        %1197 = vmatpush.msra.mxu0 %v641
        %1198 = vmatpush.msra.mxu0 %v637
        %1199 = vmatpush.msra.mxu0 %v633
        %1200 = vmatpush.msra.mxu0 %v629
        %1201 = vmatmul.f32.gmra.mxu0 %v1158
        %v1202 = vpop.f32.mrf.mxu0
        %v1203 = vadd.f32 %v1183, %v1202
        %1204 = vdwg.mxu0
        %1205 = vmatpush.msra.mxu0 %v753
        %1206 = vmatpush.msra.mxu0 %v749
        %1207 = vmatpush.msra.mxu0 %v745
        %1208 = vmatpush.msra.mxu0 %v741
        %1209 = vmatpush.msra.mxu0 %v737
        %1210 = vmatpush.msra.mxu0 %v733
        %1211 = vmatpush.msra.mxu0 %v729
        %1212 = vmatpush.msra.mxu0 %v725
        %1213 = vmatpush.msra.mxu0 %v721
        %1214 = vmatpush.msra.mxu0 %v717
        %1215 = vmatpush.msra.mxu0 %v713
        %1216 = vmatpush.msra.mxu0 %v709
        %1217 = vmatpush.msra.mxu0 %v705
        %1218 = vmatpush.msra.mxu0 %v701
        %1219 = vmatpush.msra.mxu0 %v697
        %1220 = vmatpush.msra.mxu0 %v693
        %1221 = vmatmul.f32.gmra.mxu0 %v1159
        %v1222 = vpop.f32.mrf.mxu0
        %v1223 = vadd.f32 %v1203, %v1222
        %1224 = vdwg.mxu0
        %1225 = vmatpush.msra.mxu0 %v817
        %1226 = vmatpush.msra.mxu0 %v813
        %1227 = vmatpush.msra.mxu0 %v809
        %1228 = vmatpush.msra.mxu0 %v805
        %1229 = vmatpush.msra.mxu0 %v801
        %1230 = vmatpush.msra.mxu0 %v797
        %1231 = vmatpush.msra.mxu0 %v793
        %1232 = vmatpush.msra.mxu0 %v789
        %1233 = vmatpush.msra.mxu0 %v785
        %1234 = vmatpush.msra.mxu0 %v781
        %1235 = vmatpush.msra.mxu0 %v777
        %1236 = vmatpush.msra.mxu0 %v773
        %1237 = vmatpush.msra.mxu0 %v769
        %1238 = vmatpush.msra.mxu0 %v765
        %1239 = vmatpush.msra.mxu0 %v761
        %1240 = vmatpush.msra.mxu0 %v757
        %1241 = vmatmul.f32.gmra.mxu0 %v1160
        %v1242 = vpop.f32.mrf.mxu0
        %v1243 = vadd.f32 %v1223, %v1242
        %1244 = vdwg.mxu0
        %1245 = vmatpush.msra.mxu0 %v626
        %1246 = vmatpush.msra.mxu0 %v622
        %1247 = vmatpush.msra.mxu0 %v618
        %1248 = vmatpush.msra.mxu0 %v614
        %1249 = vmatpush.msra.mxu0 %v610
        %1250 = vmatpush.msra.mxu0 %v606
        %1251 = vmatpush.msra.mxu0 %v602
        %1252 = vmatpush.msra.mxu0 %v598
        %1253 = vmatpush.msra.mxu0 %v594
        %1254 = vmatpush.msra.mxu0 %v590
        %1255 = vmatpush.msra.mxu0 %v586
        %1256 = vmatpush.msra.mxu0 %v582
        %1257 = vmatpush.msra.mxu0 %v578
        %1258 = vmatpush.msra.mxu0 %v574
        %1259 = vmatpush.msra.mxu0 %v570
        %1260 = vmatpush.msra.mxu0 %v566
        %1261 = vmatmul.f32.gmra.mxu0 %v1157
        %v1262 = vpop.f32.mrf.mxu0
        %v1263 = vadd.f32 0.0, %v1262
        %1264 = vdwg.mxu0
        %1265 = vmatpush.msra.mxu0 %v690
        %1266 = vmatpush.msra.mxu0 %v686
        %1267 = vmatpush.msra.mxu0 %v682
        %1268 = vmatpush.msra.mxu0 %v678
        %1269 = vmatpush.msra.mxu0 %v674
        %1270 = vmatpush.msra.mxu0 %v670
        %1271 = vmatpush.msra.mxu0 %v666
        %1272 = vmatpush.msra.mxu0 %v662
        %1273 = vmatpush.msra.mxu0 %v658
        %1274 = vmatpush.msra.mxu0 %v654
        %1275 = vmatpush.msra.mxu0 %v650
        %1276 = vmatpush.msra.mxu0 %v646
        %1277 = vmatpush.msra.mxu0 %v642
        %1278 = vmatpush.msra.mxu0 %v638
        %1279 = vmatpush.msra.mxu0 %v634
        %1280 = vmatpush.msra.mxu0 %v630
        %1281 = vmatmul.f32.gmra.mxu0 %v1158
        %v1282 = vpop.f32.mrf.mxu0
        %v1283 = vadd.f32 %v1263, %v1282
        %1284 = vdwg.mxu0
        %1285 = vmatpush.msra.mxu0 %v754
        %1286 = vmatpush.msra.mxu0 %v750
        %1287 = vmatpush.msra.mxu0 %v746
        %1288 = vmatpush.msra.mxu0 %v742
        %1289 = vmatpush.msra.mxu0 %v738
        %1290 = vmatpush.msra.mxu0 %v734
        %1291 = vmatpush.msra.mxu0 %v730
        %1292 = vmatpush.msra.mxu0 %v726
        %1293 = vmatpush.msra.mxu0 %v722
        %1294 = vmatpush.msra.mxu0 %v718
        %1295 = vmatpush.msra.mxu0 %v714
        %1296 = vmatpush.msra.mxu0 %v710
        %1297 = vmatpush.msra.mxu0 %v706
        %1298 = vmatpush.msra.mxu0 %v702
        %1299 = vmatpush.msra.mxu0 %v698
        %1300 = vmatpush.msra.mxu0 %v694
        %1301 = vmatmul.f32.gmra.mxu0 %v1159
        %v1302 = vpop.f32.mrf.mxu0
        %v1303 = vadd.f32 %v1283, %v1302
        %1304 = vdwg.mxu0
        %1305 = vmatpush.msra.mxu0 %v818
        %1306 = vmatpush.msra.mxu0 %v814
        %1307 = vmatpush.msra.mxu0 %v810
        %1308 = vmatpush.msra.mxu0 %v806
        %1309 = vmatpush.msra.mxu0 %v802
        %1310 = vmatpush.msra.mxu0 %v798
        %1311 = vmatpush.msra.mxu0 %v794
        %1312 = vmatpush.msra.mxu0 %v790
        %1313 = vmatpush.msra.mxu0 %v786
        %1314 = vmatpush.msra.mxu0 %v782
        %1315 = vmatpush.msra.mxu0 %v778
        %1316 = vmatpush.msra.mxu0 %v774
        %1317 = vmatpush.msra.mxu0 %v770
        %1318 = vmatpush.msra.mxu0 %v766
        %1319 = vmatpush.msra.mxu0 %v762
        %1320 = vmatpush.msra.mxu0 %v758
        %1321 = vmatmul.f32.gmra.mxu0 %v1160
        %v1322 = vpop.f32.mrf.mxu0
        %v1323 = vadd.f32 %v1303, %v1322
        %1324 = vdwg.mxu0
        %1325 = vmatpush.msra.mxu0 %v627
        %1326 = vmatpush.msra.mxu0 %v623
        %1327 = vmatpush.msra.mxu0 %v619
        %1328 = vmatpush.msra.mxu0 %v615
        %1329 = vmatpush.msra.mxu0 %v611
        %1330 = vmatpush.msra.mxu0 %v607
        %1331 = vmatpush.msra.mxu0 %v603
        %1332 = vmatpush.msra.mxu0 %v599
        %1333 = vmatpush.msra.mxu0 %v595
        %1334 = vmatpush.msra.mxu0 %v591
        %1335 = vmatpush.msra.mxu0 %v587
        %1336 = vmatpush.msra.mxu0 %v583
        %1337 = vmatpush.msra.mxu0 %v579
        %1338 = vmatpush.msra.mxu0 %v575
        %1339 = vmatpush.msra.mxu0 %v571
        %1340 = vmatpush.msra.mxu0 %v567
        %1341 = vmatmul.f32.gmra.mxu0 %v1157
        %v1342 = vpop.f32.mrf.mxu0
        %v1343 = vadd.f32 0.0, %v1342
        %1344 = vdwg.mxu0
        %1345 = vmatpush.msra.mxu0 %v691
        %1346 = vmatpush.msra.mxu0 %v687
        %1347 = vmatpush.msra.mxu0 %v683
        %1348 = vmatpush.msra.mxu0 %v679
        %1349 = vmatpush.msra.mxu0 %v675
        %1350 = vmatpush.msra.mxu0 %v671
        %1351 = vmatpush.msra.mxu0 %v667
        %1352 = vmatpush.msra.mxu0 %v663
        %1353 = vmatpush.msra.mxu0 %v659
        %1354 = vmatpush.msra.mxu0 %v655
        %1355 = vmatpush.msra.mxu0 %v651
        %1356 = vmatpush.msra.mxu0 %v647
        %1357 = vmatpush.msra.mxu0 %v643
        %1358 = vmatpush.msra.mxu0 %v639
        %1359 = vmatpush.msra.mxu0 %v635
        %1360 = vmatpush.msra.mxu0 %v631
        %1361 = vmatmul.f32.gmra.mxu0 %v1158
        %v1362 = vpop.f32.mrf.mxu0
        %v1363 = vadd.f32 %v1343, %v1362
        %1364 = vdwg.mxu0
        %1365 = vmatpush.msra.mxu0 %v755
        %1366 = vmatpush.msra.mxu0 %v751
        %1367 = vmatpush.msra.mxu0 %v747
        %1368 = vmatpush.msra.mxu0 %v743
        %1369 = vmatpush.msra.mxu0 %v739
        %1370 = vmatpush.msra.mxu0 %v735
        %1371 = vmatpush.msra.mxu0 %v731
        %1372 = vmatpush.msra.mxu0 %v727
        %1373 = vmatpush.msra.mxu0 %v723
        %1374 = vmatpush.msra.mxu0 %v719
        %1375 = vmatpush.msra.mxu0 %v715
        %1376 = vmatpush.msra.mxu0 %v711
        %1377 = vmatpush.msra.mxu0 %v707
        %1378 = vmatpush.msra.mxu0 %v703
        %1379 = vmatpush.msra.mxu0 %v699
        %1380 = vmatpush.msra.mxu0 %v695
        %1381 = vmatmul.f32.gmra.mxu0 %v1159
        %v1382 = vpop.f32.mrf.mxu0
        %v1383 = vadd.f32 %v1363, %v1382
        %1384 = vdwg.mxu0
        %1385 = vmatpush.msra.mxu0 %v819
        %1386 = vmatpush.msra.mxu0 %v815
        %1387 = vmatpush.msra.mxu0 %v811
        %1388 = vmatpush.msra.mxu0 %v807
        %1389 = vmatpush.msra.mxu0 %v803
        %1390 = vmatpush.msra.mxu0 %v799
        %1391 = vmatpush.msra.mxu0 %v795
        %1392 = vmatpush.msra.mxu0 %v791
        %1393 = vmatpush.msra.mxu0 %v787
        %1394 = vmatpush.msra.mxu0 %v783
        %1395 = vmatpush.msra.mxu0 %v779
        %1396 = vmatpush.msra.mxu0 %v775
        %1397 = vmatpush.msra.mxu0 %v771
        %1398 = vmatpush.msra.mxu0 %v767
        %1399 = vmatpush.msra.mxu0 %v763
        %1400 = vmatpush.msra.mxu0 %v759
        %1401 = vmatmul.f32.gmra.mxu0 %v1160
        %v1402 = vpop.f32.mrf.mxu0
        %v1403 = vadd.f32 %v1383, %v1402
        %1404 = vdwg.mxu0
        %1405 = vmatpush.msra.mxu0 %v628
        %1406 = vmatpush.msra.mxu0 %v624
        %1407 = vmatpush.msra.mxu0 %v620
        %1408 = vmatpush.msra.mxu0 %v616
        %1409 = vmatpush.msra.mxu0 %v612
        %1410 = vmatpush.msra.mxu0 %v608
        %1411 = vmatpush.msra.mxu0 %v604
        %1412 = vmatpush.msra.mxu0 %v600
        %1413 = vmatpush.msra.mxu0 %v596
        %1414 = vmatpush.msra.mxu0 %v592
        %1415 = vmatpush.msra.mxu0 %v588
        %1416 = vmatpush.msra.mxu0 %v584
        %1417 = vmatpush.msra.mxu0 %v580
        %1418 = vmatpush.msra.mxu0 %v576
        %1419 = vmatpush.msra.mxu0 %v572
        %1420 = vmatpush.msra.mxu0 %v568
        %1421 = vmatmul.f32.gmra.mxu0 %v1157
        %v1422 = vpop.f32.mrf.mxu0
        %v1423 = vadd.f32 0.0, %v1422
        %1424 = vdwg.mxu0
        %1425 = vmatpush.msra.mxu0 %v692
        %1426 = vmatpush.msra.mxu0 %v688
        %1427 = vmatpush.msra.mxu0 %v684
        %1428 = vmatpush.msra.mxu0 %v680
        %1429 = vmatpush.msra.mxu0 %v676
        %1430 = vmatpush.msra.mxu0 %v672
        %1431 = vmatpush.msra.mxu0 %v668
        %1432 = vmatpush.msra.mxu0 %v664
        %1433 = vmatpush.msra.mxu0 %v660
        %1434 = vmatpush.msra.mxu0 %v656
        %1435 = vmatpush.msra.mxu0 %v652
        %1436 = vmatpush.msra.mxu0 %v648
        %1437 = vmatpush.msra.mxu0 %v644
        %1438 = vmatpush.msra.mxu0 %v640
        %1439 = vmatpush.msra.mxu0 %v636
        %1440 = vmatpush.msra.mxu0 %v632
        %1441 = vmatmul.f32.gmra.mxu0 %v1158
        %v1442 = vpop.f32.mrf.mxu0
        %v1443 = vadd.f32 %v1423, %v1442
        %1444 = vdwg.mxu0
        %1445 = vmatpush.msra.mxu0 %v756
        %1446 = vmatpush.msra.mxu0 %v752
        %1447 = vmatpush.msra.mxu0 %v748
        %1448 = vmatpush.msra.mxu0 %v744
        %1449 = vmatpush.msra.mxu0 %v740
        %1450 = vmatpush.msra.mxu0 %v736
        %1451 = vmatpush.msra.mxu0 %v732
        %1452 = vmatpush.msra.mxu0 %v728
        %1453 = vmatpush.msra.mxu0 %v724
        %1454 = vmatpush.msra.mxu0 %v720
        %1455 = vmatpush.msra.mxu0 %v716
        %1456 = vmatpush.msra.mxu0 %v712
        %1457 = vmatpush.msra.mxu0 %v708
        %1458 = vmatpush.msra.mxu0 %v704
        %1459 = vmatpush.msra.mxu0 %v700
        %1460 = vmatpush.msra.mxu0 %v696
        %1461 = vmatmul.f32.gmra.mxu0 %v1159
        %v1462 = vpop.f32.mrf.mxu0
        %v1463 = vadd.f32 %v1443, %v1462
        %1464 = vdwg.mxu0
        %1465 = vmatpush.msra.mxu0 %v820
        %1466 = vmatpush.msra.mxu0 %v816
        %1467 = vmatpush.msra.mxu0 %v812
        %1468 = vmatpush.msra.mxu0 %v808
        %1469 = vmatpush.msra.mxu0 %v804
        %1470 = vmatpush.msra.mxu0 %v800
        %1471 = vmatpush.msra.mxu0 %v796
        %1472 = vmatpush.msra.mxu0 %v792
        %1473 = vmatpush.msra.mxu0 %v788
        %1474 = vmatpush.msra.mxu0 %v784
        %1475 = vmatpush.msra.mxu0 %v780
        %1476 = vmatpush.msra.mxu0 %v776
        %1477 = vmatpush.msra.mxu0 %v772
        %1478 = vmatpush.msra.mxu0 %v768
        %1479 = vmatpush.msra.mxu0 %v764
        %1480 = vmatpush.msra.mxu0 %v760
        %1481 = vmatmul.f32.gmra.mxu0 %v1160
        %v1482 = vpop.f32.mrf.mxu0
        %v1483 = vadd.f32 %v1463, %v1482
        %1484 = vdwg.mxu0
        %v1489 = vrot.slane %v1243, 4
        %v1490 = vrot.slane %v1323, 4
        %v1491 = vrot.slane %v1403, 4
        %v1492 = vrot.slane %v1483, 4
        %v1497 = vadd.f32 %v523, %v1489
        %v1498 = vadd.f32 %v536, %v1490
        %v1499 = vadd.f32 %v549, %v1491
        %v1500 = vadd.f32 %v562, %v1492
        %v1501 = vld [vmem:[%s4] sm:$0xff]
        %v1502 = vld [vmem:[%s4 + $0x8] sm:$0xff]
        %v1503 = vld [vmem:[%s4 + $0x10] sm:$0xff]
        %v1504 = vld [vmem:[%s4 + $0x18] sm:$0xff]
        %v1505 = vld [vmem:[%s4 + $0x20] sm:$0xff]
        %v1506 = vld [vmem:[%s4 + $0x28] sm:$0xff]
        %v1507 = vld [vmem:[%s4 + $0x30] sm:$0xff]
        %v1508 = vld [vmem:[%s4 + $0x38] sm:$0xff]
        %v1509 = vld [vmem:[%s4 + $0x40] sm:$0xff]
        %v1510 = vld [vmem:[%s4 + $0x48] sm:$0xff]
        %v1511 = vld [vmem:[%s4 + $0x50] sm:$0xff]
        %v1512 = vld [vmem:[%s4 + $0x58] sm:$0xff]
        %v1513 = vld [vmem:[%s4 + $0x60] sm:$0xff]
        %v1514 = vld [vmem:[%s4 + $0x68] sm:$0xff]
        %v1515 = vld [vmem:[%s4 + $0x70] sm:$0xff]
        %v1516 = vld [vmem:[%s4 + $0x78] sm:$0xff]
        %v1517 = vld [vmem:[%s4 + $0x80] sm:$0xff]
        %v1518 = vld [vmem:[%s4 + $0x88] sm:$0xff]
        %v1519 = vld [vmem:[%s4 + $0x90] sm:$0xff]
        %v1520 = vld [vmem:[%s4 + $0x98] sm:$0xff]
        %v1521 = vld [vmem:[%s4 + $0xa0] sm:$0xff]
        %v1522 = vld [vmem:[%s4 + $0xa8] sm:$0xff]
        %v1523 = vld [vmem:[%s4 + $0xb0] sm:$0xff]
        %v1524 = vld [vmem:[%s4 + $0xb8] sm:$0xff]
        %v1525 = vld [vmem:[%s4 + $0xc0] sm:$0xff]
        %v1526 = vld [vmem:[%s4 + $0xc8] sm:$0xff]
        %v1527 = vld [vmem:[%s4 + $0xd0] sm:$0xff]
        %v1528 = vld [vmem:[%s4 + $0xd8] sm:$0xff]
        %v1529 = vld [vmem:[%s4 + $0xe0] sm:$0xff]
        %v1530 = vld [vmem:[%s4 + $0xe8] sm:$0xff]
        %v1531 = vld [vmem:[%s4 + $0xf0] sm:$0xff]
        %v1532 = vld [vmem:[%s4 + $0xf8] sm:$0xff]
        %v1533 = vld [vmem:[%s4 + $0x100] sm:$0xff]
        %v1534 = vld [vmem:[%s4 + $0x108] sm:$0xff]
        %v1535 = vld [vmem:[%s4 + $0x110] sm:$0xff]
        %v1536 = vld [vmem:[%s4 + $0x118] sm:$0xff]
        %v1537 = vld [vmem:[%s4 + $0x120] sm:$0xff]
        %v1538 = vld [vmem:[%s4 + $0x128] sm:$0xff]
        %v1539 = vld [vmem:[%s4 + $0x130] sm:$0xff]
        %v1540 = vld [vmem:[%s4 + $0x138] sm:$0xff]
        %v1541 = vld [vmem:[%s4 + $0x140] sm:$0xff]
        %v1542 = vld [vmem:[%s4 + $0x148] sm:$0xff]
        %v1543 = vld [vmem:[%s4 + $0x150] sm:$0xff]
        %v1544 = vld [vmem:[%s4 + $0x158] sm:$0xff]
        %v1545 = vld [vmem:[%s4 + $0x160] sm:$0xff]
        %v1546 = vld [vmem:[%s4 + $0x168] sm:$0xff]
        %v1547 = vld [vmem:[%s4 + $0x170] sm:$0xff]
        %v1548 = vld [vmem:[%s4 + $0x178] sm:$0xff]
        %v1549 = vld [vmem:[%s4 + $0x180] sm:$0xff]
        %v1550 = vld [vmem:[%s4 + $0x188] sm:$0xff]
        %v1551 = vld [vmem:[%s4 + $0x190] sm:$0xff]
        %v1552 = vld [vmem:[%s4 + $0x198] sm:$0xff]
        %v1553 = vld [vmem:[%s4 + $0x1a0] sm:$0xff]
        %v1554 = vld [vmem:[%s4 + $0x1a8] sm:$0xff]
        %v1555 = vld [vmem:[%s4 + $0x1b0] sm:$0xff]
        %v1556 = vld [vmem:[%s4 + $0x1b8] sm:$0xff]
        %v1557 = vld [vmem:[%s4 + $0x1c0] sm:$0xff]
        %v1558 = vld [vmem:[%s4 + $0x1c8] sm:$0xff]
        %v1559 = vld [vmem:[%s4 + $0x1d0] sm:$0xff]
        %v1560 = vld [vmem:[%s4 + $0x1d8] sm:$0xff]
        %v1561 = vld [vmem:[%s4 + $0x1e0] sm:$0xff]
        %v1562 = vld [vmem:[%s4 + $0x1e8] sm:$0xff]
        %v1563 = vld [vmem:[%s4 + $0x1f0] sm:$0xff]
        %v1564 = vld [vmem:[%s4 + $0x1f8] sm:$0xff]
        %v1565 = vld [vmem:[%s4 + $0x200] sm:$0xff]
        %v1566 = vld [vmem:[%s4 + $0x208] sm:$0xff]
        %v1567 = vld [vmem:[%s4 + $0x210] sm:$0xff]
        %v1568 = vld [vmem:[%s4 + $0x218] sm:$0xff]
        %v1569 = vld [vmem:[%s4 + $0x220] sm:$0xff]
        %v1570 = vld [vmem:[%s4 + $0x228] sm:$0xff]
        %v1571 = vld [vmem:[%s4 + $0x230] sm:$0xff]
        %v1572 = vld [vmem:[%s4 + $0x238] sm:$0xff]
        %v1573 = vld [vmem:[%s4 + $0x240] sm:$0xff]
        %v1574 = vld [vmem:[%s4 + $0x248] sm:$0xff]
        %v1575 = vld [vmem:[%s4 + $0x250] sm:$0xff]
        %v1576 = vld [vmem:[%s4 + $0x258] sm:$0xff]
        %v1577 = vld [vmem:[%s4 + $0x260] sm:$0xff]
        %v1578 = vld [vmem:[%s4 + $0x268] sm:$0xff]
        %v1579 = vld [vmem:[%s4 + $0x270] sm:$0xff]
        %v1580 = vld [vmem:[%s4 + $0x278] sm:$0xff]
        %v1581 = vld [vmem:[%s4 + $0x280] sm:$0xff]
        %v1582 = vld [vmem:[%s4 + $0x288] sm:$0xff]
        %v1583 = vld [vmem:[%s4 + $0x290] sm:$0xff]
        %v1584 = vld [vmem:[%s4 + $0x298] sm:$0xff]
        %v1585 = vld [vmem:[%s4 + $0x2a0] sm:$0xff]
        %v1586 = vld [vmem:[%s4 + $0x2a8] sm:$0xff]
        %v1587 = vld [vmem:[%s4 + $0x2b0] sm:$0xff]
        %v1588 = vld [vmem:[%s4 + $0x2b8] sm:$0xff]
        %v1589 = vld [vmem:[%s4 + $0x2c0] sm:$0xff]
        %v1590 = vld [vmem:[%s4 + $0x2c8] sm:$0xff]
        %v1591 = vld [vmem:[%s4 + $0x2d0] sm:$0xff]
        %v1592 = vld [vmem:[%s4 + $0x2d8] sm:$0xff]
        %v1593 = vld [vmem:[%s4 + $0x2e0] sm:$0xff]
        %v1594 = vld [vmem:[%s4 + $0x2e8] sm:$0xff]
        %v1595 = vld [vmem:[%s4 + $0x2f0] sm:$0xff]
        %v1596 = vld [vmem:[%s4 + $0x2f8] sm:$0xff]
        %v1597 = vld [vmem:[%s4 + $0x300] sm:$0xff]
        %v1598 = vld [vmem:[%s4 + $0x308] sm:$0xff]
        %v1599 = vld [vmem:[%s4 + $0x310] sm:$0xff]
        %v1600 = vld [vmem:[%s4 + $0x318] sm:$0xff]
        %v1601 = vld [vmem:[%s4 + $0x320] sm:$0xff]
        %v1602 = vld [vmem:[%s4 + $0x328] sm:$0xff]
        %v1603 = vld [vmem:[%s4 + $0x330] sm:$0xff]
        %v1604 = vld [vmem:[%s4 + $0x338] sm:$0xff]
        %v1605 = vld [vmem:[%s4 + $0x340] sm:$0xff]
        %v1606 = vld [vmem:[%s4 + $0x348] sm:$0xff]
        %v1607 = vld [vmem:[%s4 + $0x350] sm:$0xff]
        %v1608 = vld [vmem:[%s4 + $0x358] sm:$0xff]
        %v1609 = vld [vmem:[%s4 + $0x360] sm:$0xff]
        %v1610 = vld [vmem:[%s4 + $0x368] sm:$0xff]
        %v1611 = vld [vmem:[%s4 + $0x370] sm:$0xff]
        %v1612 = vld [vmem:[%s4 + $0x378] sm:$0xff]
        %v1613 = vld [vmem:[%s4 + $0x380] sm:$0xff]
        %v1614 = vld [vmem:[%s4 + $0x388] sm:$0xff]
        %v1615 = vld [vmem:[%s4 + $0x390] sm:$0xff]
        %v1616 = vld [vmem:[%s4 + $0x398] sm:$0xff]
        %v1617 = vld [vmem:[%s4 + $0x3a0] sm:$0xff]
        %v1618 = vld [vmem:[%s4 + $0x3a8] sm:$0xff]
        %v1619 = vld [vmem:[%s4 + $0x3b0] sm:$0xff]
        %v1620 = vld [vmem:[%s4 + $0x3b8] sm:$0xff]
        %v1621 = vld [vmem:[%s4 + $0x3c0] sm:$0xff]
        %v1622 = vld [vmem:[%s4 + $0x3c8] sm:$0xff]
        %v1623 = vld [vmem:[%s4 + $0x3d0] sm:$0xff]
        %v1624 = vld [vmem:[%s4 + $0x3d8] sm:$0xff]
        %v1625 = vld [vmem:[%s4 + $0x3e0] sm:$0xff]
        %v1626 = vld [vmem:[%s4 + $0x3e8] sm:$0xff]
        %v1627 = vld [vmem:[%s4 + $0x3f0] sm:$0xff]
        %v1628 = vld [vmem:[%s4 + $0x3f8] sm:$0xff]
        %v1629 = vld [vmem:[%s4 + $0x400] sm:$0xff]
        %v1630 = vld [vmem:[%s4 + $0x408] sm:$0xff]
        %v1631 = vld [vmem:[%s4 + $0x410] sm:$0xff]
        %v1632 = vld [vmem:[%s4 + $0x418] sm:$0xff]
        %v1633 = vld [vmem:[%s4 + $0x420] sm:$0xff]
        %v1634 = vld [vmem:[%s4 + $0x428] sm:$0xff]
        %v1635 = vld [vmem:[%s4 + $0x430] sm:$0xff]
        %v1636 = vld [vmem:[%s4 + $0x438] sm:$0xff]
        %v1637 = vld [vmem:[%s4 + $0x440] sm:$0xff]
        %v1638 = vld [vmem:[%s4 + $0x448] sm:$0xff]
        %v1639 = vld [vmem:[%s4 + $0x450] sm:$0xff]
        %v1640 = vld [vmem:[%s4 + $0x458] sm:$0xff]
        %v1641 = vld [vmem:[%s4 + $0x460] sm:$0xff]
        %v1642 = vld [vmem:[%s4 + $0x468] sm:$0xff]
        %v1643 = vld [vmem:[%s4 + $0x470] sm:$0xff]
        %v1644 = vld [vmem:[%s4 + $0x478] sm:$0xff]
        %v1645 = vld [vmem:[%s4 + $0x480] sm:$0xff]
        %v1646 = vld [vmem:[%s4 + $0x488] sm:$0xff]
        %v1647 = vld [vmem:[%s4 + $0x490] sm:$0xff]
        %v1648 = vld [vmem:[%s4 + $0x498] sm:$0xff]
        %v1649 = vld [vmem:[%s4 + $0x4a0] sm:$0xff]
        %v1650 = vld [vmem:[%s4 + $0x4a8] sm:$0xff]
        %v1651 = vld [vmem:[%s4 + $0x4b0] sm:$0xff]
        %v1652 = vld [vmem:[%s4 + $0x4b8] sm:$0xff]
        %v1653 = vld [vmem:[%s4 + $0x4c0] sm:$0xff]
        %v1654 = vld [vmem:[%s4 + $0x4c8] sm:$0xff]
        %v1655 = vld [vmem:[%s4 + $0x4d0] sm:$0xff]
        %v1656 = vld [vmem:[%s4 + $0x4d8] sm:$0xff]
        %v1657 = vld [vmem:[%s4 + $0x4e0] sm:$0xff]
        %v1658 = vld [vmem:[%s4 + $0x4e8] sm:$0xff]
        %v1659 = vld [vmem:[%s4 + $0x4f0] sm:$0xff]
        %v1660 = vld [vmem:[%s4 + $0x4f8] sm:$0xff]
        %v1661 = vld [vmem:[%s4 + $0x500] sm:$0xff]
        %v1662 = vld [vmem:[%s4 + $0x508] sm:$0xff]
        %v1663 = vld [vmem:[%s4 + $0x510] sm:$0xff]
        %v1664 = vld [vmem:[%s4 + $0x518] sm:$0xff]
        %v1665 = vld [vmem:[%s4 + $0x520] sm:$0xff]
        %v1666 = vld [vmem:[%s4 + $0x528] sm:$0xff]
        %v1667 = vld [vmem:[%s4 + $0x530] sm:$0xff]
        %v1668 = vld [vmem:[%s4 + $0x538] sm:$0xff]
        %v1669 = vld [vmem:[%s4 + $0x540] sm:$0xff]
        %v1670 = vld [vmem:[%s4 + $0x548] sm:$0xff]
        %v1671 = vld [vmem:[%s4 + $0x550] sm:$0xff]
        %v1672 = vld [vmem:[%s4 + $0x558] sm:$0xff]
        %v1673 = vld [vmem:[%s4 + $0x560] sm:$0xff]
        %v1674 = vld [vmem:[%s4 + $0x568] sm:$0xff]
        %v1675 = vld [vmem:[%s4 + $0x570] sm:$0xff]
        %v1676 = vld [vmem:[%s4 + $0x578] sm:$0xff]
        %v1677 = vld [vmem:[%s4 + $0x580] sm:$0xff]
        %v1678 = vld [vmem:[%s4 + $0x588] sm:$0xff]
        %v1679 = vld [vmem:[%s4 + $0x590] sm:$0xff]
        %v1680 = vld [vmem:[%s4 + $0x598] sm:$0xff]
        %v1681 = vld [vmem:[%s4 + $0x5a0] sm:$0xff]
        %v1682 = vld [vmem:[%s4 + $0x5a8] sm:$0xff]
        %v1683 = vld [vmem:[%s4 + $0x5b0] sm:$0xff]
        %v1684 = vld [vmem:[%s4 + $0x5b8] sm:$0xff]
        %v1685 = vld [vmem:[%s4 + $0x5c0] sm:$0xff]
        %v1686 = vld [vmem:[%s4 + $0x5c8] sm:$0xff]
        %v1687 = vld [vmem:[%s4 + $0x5d0] sm:$0xff]
        %v1688 = vld [vmem:[%s4 + $0x5d8] sm:$0xff]
        %v1689 = vld [vmem:[%s4 + $0x5e0] sm:$0xff]
        %v1690 = vld [vmem:[%s4 + $0x5e8] sm:$0xff]
        %v1691 = vld [vmem:[%s4 + $0x5f0] sm:$0xff]
        %v1692 = vld [vmem:[%s4 + $0x5f8] sm:$0xff]
        %v1693 = vld [vmem:[%s4 + $0x600] sm:$0xff]
        %v1694 = vld [vmem:[%s4 + $0x608] sm:$0xff]
        %v1695 = vld [vmem:[%s4 + $0x610] sm:$0xff]
        %v1696 = vld [vmem:[%s4 + $0x618] sm:$0xff]
        %v1697 = vld [vmem:[%s4 + $0x620] sm:$0xff]
        %v1698 = vld [vmem:[%s4 + $0x628] sm:$0xff]
        %v1699 = vld [vmem:[%s4 + $0x630] sm:$0xff]
        %v1700 = vld [vmem:[%s4 + $0x638] sm:$0xff]
        %v1701 = vld [vmem:[%s4 + $0x640] sm:$0xff]
        %v1702 = vld [vmem:[%s4 + $0x648] sm:$0xff]
        %v1703 = vld [vmem:[%s4 + $0x650] sm:$0xff]
        %v1704 = vld [vmem:[%s4 + $0x658] sm:$0xff]
        %v1705 = vld [vmem:[%s4 + $0x660] sm:$0xff]
        %v1706 = vld [vmem:[%s4 + $0x668] sm:$0xff]
        %v1707 = vld [vmem:[%s4 + $0x670] sm:$0xff]
        %v1708 = vld [vmem:[%s4 + $0x678] sm:$0xff]
        %v1709 = vld [vmem:[%s4 + $0x680] sm:$0xff]
        %v1710 = vld [vmem:[%s4 + $0x688] sm:$0xff]
        %v1711 = vld [vmem:[%s4 + $0x690] sm:$0xff]
        %v1712 = vld [vmem:[%s4 + $0x698] sm:$0xff]
        %v1713 = vld [vmem:[%s4 + $0x6a0] sm:$0xff]
        %v1714 = vld [vmem:[%s4 + $0x6a8] sm:$0xff]
        %v1715 = vld [vmem:[%s4 + $0x6b0] sm:$0xff]
        %v1716 = vld [vmem:[%s4 + $0x6b8] sm:$0xff]
        %v1717 = vld [vmem:[%s4 + $0x6c0] sm:$0xff]
        %v1718 = vld [vmem:[%s4 + $0x6c8] sm:$0xff]
        %v1719 = vld [vmem:[%s4 + $0x6d0] sm:$0xff]
        %v1720 = vld [vmem:[%s4 + $0x6d8] sm:$0xff]
        %v1721 = vld [vmem:[%s4 + $0x6e0] sm:$0xff]
        %v1722 = vld [vmem:[%s4 + $0x6e8] sm:$0xff]
        %v1723 = vld [vmem:[%s4 + $0x6f0] sm:$0xff]
        %v1724 = vld [vmem:[%s4 + $0x6f8] sm:$0xff]
        %v1725 = vld [vmem:[%s4 + $0x700] sm:$0xff]
        %v1726 = vld [vmem:[%s4 + $0x708] sm:$0xff]
        %v1727 = vld [vmem:[%s4 + $0x710] sm:$0xff]
        %v1728 = vld [vmem:[%s4 + $0x718] sm:$0xff]
        %v1729 = vld [vmem:[%s4 + $0x720] sm:$0xff]
        %v1730 = vld [vmem:[%s4 + $0x728] sm:$0xff]
        %v1731 = vld [vmem:[%s4 + $0x730] sm:$0xff]
        %v1732 = vld [vmem:[%s4 + $0x738] sm:$0xff]
        %v1733 = vld [vmem:[%s4 + $0x740] sm:$0xff]
        %v1734 = vld [vmem:[%s4 + $0x748] sm:$0xff]
        %v1735 = vld [vmem:[%s4 + $0x750] sm:$0xff]
        %v1736 = vld [vmem:[%s4 + $0x758] sm:$0xff]
        %v1737 = vld [vmem:[%s4 + $0x760] sm:$0xff]
        %v1738 = vld [vmem:[%s4 + $0x768] sm:$0xff]
        %v1739 = vld [vmem:[%s4 + $0x770] sm:$0xff]
        %v1740 = vld [vmem:[%s4 + $0x778] sm:$0xff]
        %v1741 = vld [vmem:[%s4 + $0x780] sm:$0xff]
        %v1742 = vld [vmem:[%s4 + $0x788] sm:$0xff]
        %v1743 = vld [vmem:[%s4 + $0x790] sm:$0xff]
        %v1744 = vld [vmem:[%s4 + $0x798] sm:$0xff]
        %v1745 = vld [vmem:[%s4 + $0x7a0] sm:$0xff]
        %v1746 = vld [vmem:[%s4 + $0x7a8] sm:$0xff]
        %v1747 = vld [vmem:[%s4 + $0x7b0] sm:$0xff]
        %v1748 = vld [vmem:[%s4 + $0x7b8] sm:$0xff]
        %v1749 = vld [vmem:[%s4 + $0x7c0] sm:$0xff]
        %v1750 = vld [vmem:[%s4 + $0x7c8] sm:$0xff]
        %v1751 = vld [vmem:[%s4 + $0x7d0] sm:$0xff]
        %v1752 = vld [vmem:[%s4 + $0x7d8] sm:$0xff]
        %v1753 = vld [vmem:[%s4 + $0x7e0] sm:$0xff]
        %v1754 = vld [vmem:[%s4 + $0x7e8] sm:$0xff]
        %v1755 = vld [vmem:[%s4 + $0x7f0] sm:$0xff]
        %v1756 = vld [vmem:[%s4 + $0x7f8] sm:$0xff]
        %v1761 = vrot.slane %v1497, 4
        %v1762 = vrot.slane %v1498, 4
        %v1763 = vrot.slane %v1499, 4
        %v1764 = vrot.slane %v1500, 4
        %1769 = vmatpush.msra.mxu0 %v1561
        %1770 = vmatpush.msra.mxu0 %v1557
        %1771 = vmatpush.msra.mxu0 %v1553
        %1772 = vmatpush.msra.mxu0 %v1549
        %1773 = vmatpush.msra.mxu0 %v1545
        %1774 = vmatpush.msra.mxu0 %v1541
        %1775 = vmatpush.msra.mxu0 %v1537
        %1776 = vmatpush.msra.mxu0 %v1533
        %1777 = vmatpush.msra.mxu0 %v1529
        %1778 = vmatpush.msra.mxu0 %v1525
        %1779 = vmatpush.msra.mxu0 %v1521
        %1780 = vmatpush.msra.mxu0 %v1517
        %1781 = vmatpush.msra.mxu0 %v1513
        %1782 = vmatpush.msra.mxu0 %v1509
        %1783 = vmatpush.msra.mxu0 %v1505
        %1784 = vmatpush.msra.mxu0 %v1501
        %1785 = vmatmul.f32.gmra.mxu0 %v1761
        %v1786 = vpop.f32.mrf.mxu0
        %v1787 = vadd.f32 0.0, %v1786
        %1788 = vdwg.mxu0
        %1789 = vmatpush.msra.mxu0 %v1625
        %1790 = vmatpush.msra.mxu0 %v1621
        %1791 = vmatpush.msra.mxu0 %v1617
        %1792 = vmatpush.msra.mxu0 %v1613
        %1793 = vmatpush.msra.mxu0 %v1609
        %1794 = vmatpush.msra.mxu0 %v1605
        %1795 = vmatpush.msra.mxu0 %v1601
        %1796 = vmatpush.msra.mxu0 %v1597
        %1797 = vmatpush.msra.mxu0 %v1593
        %1798 = vmatpush.msra.mxu0 %v1589
        %1799 = vmatpush.msra.mxu0 %v1585
        %1800 = vmatpush.msra.mxu0 %v1581
        %1801 = vmatpush.msra.mxu0 %v1577
        %1802 = vmatpush.msra.mxu0 %v1573
        %1803 = vmatpush.msra.mxu0 %v1569
        %1804 = vmatpush.msra.mxu0 %v1565
        %1805 = vmatmul.f32.gmra.mxu0 %v1762
        %v1806 = vpop.f32.mrf.mxu0
        %v1807 = vadd.f32 %v1787, %v1806
        %1808 = vdwg.mxu0
        %1809 = vmatpush.msra.mxu0 %v1689
        %1810 = vmatpush.msra.mxu0 %v1685
        %1811 = vmatpush.msra.mxu0 %v1681
        %1812 = vmatpush.msra.mxu0 %v1677
        %1813 = vmatpush.msra.mxu0 %v1673
        %1814 = vmatpush.msra.mxu0 %v1669
        %1815 = vmatpush.msra.mxu0 %v1665
        %1816 = vmatpush.msra.mxu0 %v1661
        %1817 = vmatpush.msra.mxu0 %v1657
        %1818 = vmatpush.msra.mxu0 %v1653
        %1819 = vmatpush.msra.mxu0 %v1649
        %1820 = vmatpush.msra.mxu0 %v1645
        %1821 = vmatpush.msra.mxu0 %v1641
        %1822 = vmatpush.msra.mxu0 %v1637
        %1823 = vmatpush.msra.mxu0 %v1633
        %1824 = vmatpush.msra.mxu0 %v1629
        %1825 = vmatmul.f32.gmra.mxu0 %v1763
        %v1826 = vpop.f32.mrf.mxu0
        %v1827 = vadd.f32 %v1807, %v1826
        %1828 = vdwg.mxu0
        %1829 = vmatpush.msra.mxu0 %v1753
        %1830 = vmatpush.msra.mxu0 %v1749
        %1831 = vmatpush.msra.mxu0 %v1745
        %1832 = vmatpush.msra.mxu0 %v1741
        %1833 = vmatpush.msra.mxu0 %v1737
        %1834 = vmatpush.msra.mxu0 %v1733
        %1835 = vmatpush.msra.mxu0 %v1729
        %1836 = vmatpush.msra.mxu0 %v1725
        %1837 = vmatpush.msra.mxu0 %v1721
        %1838 = vmatpush.msra.mxu0 %v1717
        %1839 = vmatpush.msra.mxu0 %v1713
        %1840 = vmatpush.msra.mxu0 %v1709
        %1841 = vmatpush.msra.mxu0 %v1705
        %1842 = vmatpush.msra.mxu0 %v1701
        %1843 = vmatpush.msra.mxu0 %v1697
        %1844 = vmatpush.msra.mxu0 %v1693
        %1845 = vmatmul.f32.gmra.mxu0 %v1764
        %v1846 = vpop.f32.mrf.mxu0
        %v1847 = vadd.f32 %v1827, %v1846
        %1848 = vdwg.mxu0
        %1849 = vmatpush.msra.mxu0 %v1562
        %1850 = vmatpush.msra.mxu0 %v1558
        %1851 = vmatpush.msra.mxu0 %v1554
        %1852 = vmatpush.msra.mxu0 %v1550
        %1853 = vmatpush.msra.mxu0 %v1546
        %1854 = vmatpush.msra.mxu0 %v1542
        %1855 = vmatpush.msra.mxu0 %v1538
        %1856 = vmatpush.msra.mxu0 %v1534
        %1857 = vmatpush.msra.mxu0 %v1530
        %1858 = vmatpush.msra.mxu0 %v1526
        %1859 = vmatpush.msra.mxu0 %v1522
        %1860 = vmatpush.msra.mxu0 %v1518
        %1861 = vmatpush.msra.mxu0 %v1514
        %1862 = vmatpush.msra.mxu0 %v1510
        %1863 = vmatpush.msra.mxu0 %v1506
        %1864 = vmatpush.msra.mxu0 %v1502
        %1865 = vmatmul.f32.gmra.mxu0 %v1761
        %v1866 = vpop.f32.mrf.mxu0
        %v1867 = vadd.f32 0.0, %v1866
        %1868 = vdwg.mxu0
        %1869 = vmatpush.msra.mxu0 %v1626
        %1870 = vmatpush.msra.mxu0 %v1622
        %1871 = vmatpush.msra.mxu0 %v1618
        %1872 = vmatpush.msra.mxu0 %v1614
        %1873 = vmatpush.msra.mxu0 %v1610
        %1874 = vmatpush.msra.mxu0 %v1606
        %1875 = vmatpush.msra.mxu0 %v1602
        %1876 = vmatpush.msra.mxu0 %v1598
        %1877 = vmatpush.msra.mxu0 %v1594
        %1878 = vmatpush.msra.mxu0 %v1590
        %1879 = vmatpush.msra.mxu0 %v1586
        %1880 = vmatpush.msra.mxu0 %v1582
        %1881 = vmatpush.msra.mxu0 %v1578
        %1882 = vmatpush.msra.mxu0 %v1574
        %1883 = vmatpush.msra.mxu0 %v1570
        %1884 = vmatpush.msra.mxu0 %v1566
        %1885 = vmatmul.f32.gmra.mxu0 %v1762
        %v1886 = vpop.f32.mrf.mxu0
        %v1887 = vadd.f32 %v1867, %v1886
        %1888 = vdwg.mxu0
        %1889 = vmatpush.msra.mxu0 %v1690
        %1890 = vmatpush.msra.mxu0 %v1686
        %1891 = vmatpush.msra.mxu0 %v1682
        %1892 = vmatpush.msra.mxu0 %v1678
        %1893 = vmatpush.msra.mxu0 %v1674
        %1894 = vmatpush.msra.mxu0 %v1670
        %1895 = vmatpush.msra.mxu0 %v1666
        %1896 = vmatpush.msra.mxu0 %v1662
        %1897 = vmatpush.msra.mxu0 %v1658
        %1898 = vmatpush.msra.mxu0 %v1654
        %1899 = vmatpush.msra.mxu0 %v1650
        %1900 = vmatpush.msra.mxu0 %v1646
        %1901 = vmatpush.msra.mxu0 %v1642
        %1902 = vmatpush.msra.mxu0 %v1638
        %1903 = vmatpush.msra.mxu0 %v1634
        %1904 = vmatpush.msra.mxu0 %v1630
        %1905 = vmatmul.f32.gmra.mxu0 %v1763
        %v1906 = vpop.f32.mrf.mxu0
        %v1907 = vadd.f32 %v1887, %v1906
        %1908 = vdwg.mxu0
        %1909 = vmatpush.msra.mxu0 %v1754
        %1910 = vmatpush.msra.mxu0 %v1750
        %1911 = vmatpush.msra.mxu0 %v1746
        %1912 = vmatpush.msra.mxu0 %v1742
        %1913 = vmatpush.msra.mxu0 %v1738
        %1914 = vmatpush.msra.mxu0 %v1734
        %1915 = vmatpush.msra.mxu0 %v1730
        %1916 = vmatpush.msra.mxu0 %v1726
        %1917 = vmatpush.msra.mxu0 %v1722
        %1918 = vmatpush.msra.mxu0 %v1718
        %1919 = vmatpush.msra.mxu0 %v1714
        %1920 = vmatpush.msra.mxu0 %v1710
        %1921 = vmatpush.msra.mxu0 %v1706
        %1922 = vmatpush.msra.mxu0 %v1702
        %1923 = vmatpush.msra.mxu0 %v1698
        %1924 = vmatpush.msra.mxu0 %v1694
        %1925 = vmatmul.f32.gmra.mxu0 %v1764
        %v1926 = vpop.f32.mrf.mxu0
        %v1927 = vadd.f32 %v1907, %v1926
        %1928 = vdwg.mxu0
        %1929 = vmatpush.msra.mxu0 %v1563
        %1930 = vmatpush.msra.mxu0 %v1559
        %1931 = vmatpush.msra.mxu0 %v1555
        %1932 = vmatpush.msra.mxu0 %v1551
        %1933 = vmatpush.msra.mxu0 %v1547
        %1934 = vmatpush.msra.mxu0 %v1543
        %1935 = vmatpush.msra.mxu0 %v1539
        %1936 = vmatpush.msra.mxu0 %v1535
        %1937 = vmatpush.msra.mxu0 %v1531
        %1938 = vmatpush.msra.mxu0 %v1527
        %1939 = vmatpush.msra.mxu0 %v1523
        %1940 = vmatpush.msra.mxu0 %v1519
        %1941 = vmatpush.msra.mxu0 %v1515
        %1942 = vmatpush.msra.mxu0 %v1511
        %1943 = vmatpush.msra.mxu0 %v1507
        %1944 = vmatpush.msra.mxu0 %v1503
        %1945 = vmatmul.f32.gmra.mxu0 %v1761
        %v1946 = vpop.f32.mrf.mxu0
        %v1947 = vadd.f32 0.0, %v1946
        %1948 = vdwg.mxu0
        %1949 = vmatpush.msra.mxu0 %v1627
        %1950 = vmatpush.msra.mxu0 %v1623
        %1951 = vmatpush.msra.mxu0 %v1619
        %1952 = vmatpush.msra.mxu0 %v1615
        %1953 = vmatpush.msra.mxu0 %v1611
        %1954 = vmatpush.msra.mxu0 %v1607
        %1955 = vmatpush.msra.mxu0 %v1603
        %1956 = vmatpush.msra.mxu0 %v1599
        %1957 = vmatpush.msra.mxu0 %v1595
        %1958 = vmatpush.msra.mxu0 %v1591
        %1959 = vmatpush.msra.mxu0 %v1587
        %1960 = vmatpush.msra.mxu0 %v1583
        %1961 = vmatpush.msra.mxu0 %v1579
        %1962 = vmatpush.msra.mxu0 %v1575
        %1963 = vmatpush.msra.mxu0 %v1571
        %1964 = vmatpush.msra.mxu0 %v1567
        %1965 = vmatmul.f32.gmra.mxu0 %v1762
        %v1966 = vpop.f32.mrf.mxu0
        %v1967 = vadd.f32 %v1947, %v1966
        %1968 = vdwg.mxu0
        %1969 = vmatpush.msra.mxu0 %v1691
        %1970 = vmatpush.msra.mxu0 %v1687
        %1971 = vmatpush.msra.mxu0 %v1683
        %1972 = vmatpush.msra.mxu0 %v1679
        %1973 = vmatpush.msra.mxu0 %v1675
        %1974 = vmatpush.msra.mxu0 %v1671
        %1975 = vmatpush.msra.mxu0 %v1667
        %1976 = vmatpush.msra.mxu0 %v1663
        %1977 = vmatpush.msra.mxu0 %v1659
        %1978 = vmatpush.msra.mxu0 %v1655
        %1979 = vmatpush.msra.mxu0 %v1651
        %1980 = vmatpush.msra.mxu0 %v1647
        %1981 = vmatpush.msra.mxu0 %v1643
        %1982 = vmatpush.msra.mxu0 %v1639
        %1983 = vmatpush.msra.mxu0 %v1635
        %1984 = vmatpush.msra.mxu0 %v1631
        %1985 = vmatmul.f32.gmra.mxu0 %v1763
        %v1986 = vpop.f32.mrf.mxu0
        %v1987 = vadd.f32 %v1967, %v1986
        %1988 = vdwg.mxu0
        %1989 = vmatpush.msra.mxu0 %v1755
        %1990 = vmatpush.msra.mxu0 %v1751
        %1991 = vmatpush.msra.mxu0 %v1747
        %1992 = vmatpush.msra.mxu0 %v1743
        %1993 = vmatpush.msra.mxu0 %v1739
        %1994 = vmatpush.msra.mxu0 %v1735
        %1995 = vmatpush.msra.mxu0 %v1731
        %1996 = vmatpush.msra.mxu0 %v1727
        %1997 = vmatpush.msra.mxu0 %v1723
        %1998 = vmatpush.msra.mxu0 %v1719
        %1999 = vmatpush.msra.mxu0 %v1715
        %2000 = vmatpush.msra.mxu0 %v1711
        %2001 = vmatpush.msra.mxu0 %v1707
        %2002 = vmatpush.msra.mxu0 %v1703
        %2003 = vmatpush.msra.mxu0 %v1699
        %2004 = vmatpush.msra.mxu0 %v1695
        %2005 = vmatmul.f32.gmra.mxu0 %v1764
        %v2006 = vpop.f32.mrf.mxu0
        %v2007 = vadd.f32 %v1987, %v2006
        %2008 = vdwg.mxu0
        %2009 = vmatpush.msra.mxu0 %v1564
        %2010 = vmatpush.msra.mxu0 %v1560
        %2011 = vmatpush.msra.mxu0 %v1556
        %2012 = vmatpush.msra.mxu0 %v1552
        %2013 = vmatpush.msra.mxu0 %v1548
        %2014 = vmatpush.msra.mxu0 %v1544
        %2015 = vmatpush.msra.mxu0 %v1540
        %2016 = vmatpush.msra.mxu0 %v1536
        %2017 = vmatpush.msra.mxu0 %v1532
        %2018 = vmatpush.msra.mxu0 %v1528
        %2019 = vmatpush.msra.mxu0 %v1524
        %2020 = vmatpush.msra.mxu0 %v1520
        %2021 = vmatpush.msra.mxu0 %v1516
        %2022 = vmatpush.msra.mxu0 %v1512
        %2023 = vmatpush.msra.mxu0 %v1508
        %2024 = vmatpush.msra.mxu0 %v1504
        %2025 = vmatmul.f32.gmra.mxu0 %v1761
        %v2026 = vpop.f32.mrf.mxu0
        %v2027 = vadd.f32 0.0, %v2026
        %2028 = vdwg.mxu0
        %2029 = vmatpush.msra.mxu0 %v1628
        %2030 = vmatpush.msra.mxu0 %v1624
        %2031 = vmatpush.msra.mxu0 %v1620
        %2032 = vmatpush.msra.mxu0 %v1616
        %2033 = vmatpush.msra.mxu0 %v1612
        %2034 = vmatpush.msra.mxu0 %v1608
        %2035 = vmatpush.msra.mxu0 %v1604
        %2036 = vmatpush.msra.mxu0 %v1600
        %2037 = vmatpush.msra.mxu0 %v1596
        %2038 = vmatpush.msra.mxu0 %v1592
        %2039 = vmatpush.msra.mxu0 %v1588
        %2040 = vmatpush.msra.mxu0 %v1584
        %2041 = vmatpush.msra.mxu0 %v1580
        %2042 = vmatpush.msra.mxu0 %v1576
        %2043 = vmatpush.msra.mxu0 %v1572
        %2044 = vmatpush.msra.mxu0 %v1568
        %2045 = vmatmul.f32.gmra.mxu0 %v1762
        %v2046 = vpop.f32.mrf.mxu0
        %v2047 = vadd.f32 %v2027, %v2046
        %2048 = vdwg.mxu0
        %2049 = vmatpush.msra.mxu0 %v1692
        %2050 = vmatpush.msra.mxu0 %v1688
        %2051 = vmatpush.msra.mxu0 %v1684
        %2052 = vmatpush.msra.mxu0 %v1680
        %2053 = vmatpush.msra.mxu0 %v1676
        %2054 = vmatpush.msra.mxu0 %v1672
        %2055 = vmatpush.msra.mxu0 %v1668
        %2056 = vmatpush.msra.mxu0 %v1664
        %2057 = vmatpush.msra.mxu0 %v1660
        %2058 = vmatpush.msra.mxu0 %v1656
        %2059 = vmatpush.msra.mxu0 %v1652
        %2060 = vmatpush.msra.mxu0 %v1648
        %2061 = vmatpush.msra.mxu0 %v1644
        %2062 = vmatpush.msra.mxu0 %v1640
        %2063 = vmatpush.msra.mxu0 %v1636
        %2064 = vmatpush.msra.mxu0 %v1632
        %2065 = vmatmul.f32.gmra.mxu0 %v1763
        %v2066 = vpop.f32.mrf.mxu0
        %v2067 = vadd.f32 %v2047, %v2066
        %2068 = vdwg.mxu0
        %2069 = vmatpush.msra.mxu0 %v1756
        %2070 = vmatpush.msra.mxu0 %v1752
        %2071 = vmatpush.msra.mxu0 %v1748
        %2072 = vmatpush.msra.mxu0 %v1744
        %2073 = vmatpush.msra.mxu0 %v1740
        %2074 = vmatpush.msra.mxu0 %v1736
        %2075 = vmatpush.msra.mxu0 %v1732
        %2076 = vmatpush.msra.mxu0 %v1728
        %2077 = vmatpush.msra.mxu0 %v1724
        %2078 = vmatpush.msra.mxu0 %v1720
        %2079 = vmatpush.msra.mxu0 %v1716
        %2080 = vmatpush.msra.mxu0 %v1712
        %2081 = vmatpush.msra.mxu0 %v1708
        %2082 = vmatpush.msra.mxu0 %v1704
        %2083 = vmatpush.msra.mxu0 %v1700
        %2084 = vmatpush.msra.mxu0 %v1696
        %2085 = vmatmul.f32.gmra.mxu0 %v1764
        %v2086 = vpop.f32.mrf.mxu0
        %v2087 = vadd.f32 %v2067, %v2086
        %2088 = vdwg.mxu0
        %v2089 = vadd.f32 %v1153, %v1847
        %v2090 = vadd.f32 %v1154, %v1927
        %v2091 = vadd.f32 %v1155, %v2007
        %v2092 = vadd.f32 %v1156, %v2087
        %v2093 = vld [vmem:[%s2] sm:$0x3]
        %2095 = vset.pattern.permute.xlu0 0
        %2096 = vperm.xlu0 %2095, %v2093
        %v2097 = vpop.permute.xlu0 %2096
        %v2099 = vadd.f32 %v2089, %v2097
        %v2100 = vadd.f32 %v2090, %v2097
        %v2101 = vadd.f32 %v2091, %v2097
        %v2102 = vadd.f32 %v2092, %v2097
        %v2103 = vmax.f32 %v2099, 0.0
        %v2104 = vmax.f32 %v2100, 0.0
        %v2105 = vmax.f32 %v2101, 0.0
        %v2106 = vmax.f32 %v2102, 0.0
        %v2107 = vpack.c.bf16 %v2104, %v2103
        %v2108 = vpack.c.bf16 %v2106, %v2105
        %v2109 = vld [vmem:[%s5] sm:$0xff]
        %v2110 = vld [vmem:[%s5 + $0x8] sm:$0xf]
        %v2111 = vld [vmem:[%s5 + $0xc] sm:$0xff]
        %v2112 = vld [vmem:[%s5 + $0x14] sm:$0xf]
        %v2113 = vld [vmem:[%s5 + $0x18] sm:$0xff]
        %v2114 = vld [vmem:[%s5 + $0x20] sm:$0xf]
        %v2115 = vld [vmem:[%s5 + $0x24] sm:$0xff]
        %v2116 = vld [vmem:[%s5 + $0x2c] sm:$0xf]
        %v2117 = vld [vmem:[%s5 + $0x30] sm:$0xff]
        %v2118 = vld [vmem:[%s5 + $0x38] sm:$0xf]
        %v2119 = vld [vmem:[%s5 + $0x3c] sm:$0xff]
        %v2120 = vld [vmem:[%s5 + $0x44] sm:$0xf]
        %v2121 = vld [vmem:[%s5 + $0x48] sm:$0xff]
        %v2122 = vld [vmem:[%s5 + $0x50] sm:$0xf]
        %v2123 = vld [vmem:[%s5 + $0x54] sm:$0xff]
        %v2124 = vld [vmem:[%s5 + $0x5c] sm:$0xf]
        %v2125 = vld [vmem:[%s5 + $0x60] sm:$0xff]
        %v2126 = vld [vmem:[%s5 + $0x68] sm:$0xf]
        %v2127 = vld [vmem:[%s5 + $0x6c] sm:$0xff]
        %v2128 = vld [vmem:[%s5 + $0x74] sm:$0xf]
        %v2129 = vld [vmem:[%s5 + $0x78] sm:$0xff]
        %v2130 = vld [vmem:[%s5 + $0x80] sm:$0xf]
        %v2131 = vld [vmem:[%s5 + $0x84] sm:$0xff]
        %v2132 = vld [vmem:[%s5 + $0x8c] sm:$0xf]
        %v2133 = vld [vmem:[%s5 + $0x90] sm:$0xff]
        %v2134 = vld [vmem:[%s5 + $0x98] sm:$0xf]
        %v2135 = vld [vmem:[%s5 + $0x9c] sm:$0xff]
        %v2136 = vld [vmem:[%s5 + $0xa4] sm:$0xf]
        %v2137 = vld [vmem:[%s5 + $0xa8] sm:$0xff]
        %v2138 = vld [vmem:[%s5 + $0xb0] sm:$0xf]
        %v2139 = vld [vmem:[%s5 + $0xb4] sm:$0xff]
        %v2140 = vld [vmem:[%s5 + $0xbc] sm:$0xf]
        %v2141 = vld [vmem:[%s5 + $0xc0] sm:$0xff]
        %v2142 = vld [vmem:[%s5 + $0xc8] sm:$0xf]
        %v2143 = vld [vmem:[%s5 + $0xcc] sm:$0xff]
        %v2144 = vld [vmem:[%s5 + $0xd4] sm:$0xf]
        %v2145 = vld [vmem:[%s5 + $0xd8] sm:$0xff]
        %v2146 = vld [vmem:[%s5 + $0xe0] sm:$0xf]
        %v2147 = vld [vmem:[%s5 + $0xe4] sm:$0xff]
        %v2148 = vld [vmem:[%s5 + $0xec] sm:$0xf]
        %v2149 = vld [vmem:[%s5 + $0xf0] sm:$0xff]
        %v2150 = vld [vmem:[%s5 + $0xf8] sm:$0xf]
        %v2151 = vld [vmem:[%s5 + $0xfc] sm:$0xff]
        %v2152 = vld [vmem:[%s5 + $0x104] sm:$0xf]
        %v2153 = vld [vmem:[%s5 + $0x108] sm:$0xff]
        %v2154 = vld [vmem:[%s5 + $0x110] sm:$0xf]
        %v2155 = vld [vmem:[%s5 + $0x114] sm:$0xff]
        %v2156 = vld [vmem:[%s5 + $0x11c] sm:$0xf]
        %v2157 = vld [vmem:[%s5 + $0x120] sm:$0xff]
        %v2158 = vld [vmem:[%s5 + $0x128] sm:$0xf]
        %v2159 = vld [vmem:[%s5 + $0x12c] sm:$0xff]
        %v2160 = vld [vmem:[%s5 + $0x134] sm:$0xf]
        %v2161 = vld [vmem:[%s5 + $0x138] sm:$0xff]
        %v2162 = vld [vmem:[%s5 + $0x140] sm:$0xf]
        %v2163 = vld [vmem:[%s5 + $0x144] sm:$0xff]
        %v2164 = vld [vmem:[%s5 + $0x14c] sm:$0xf]
        %v2165 = vld [vmem:[%s5 + $0x150] sm:$0xff]
        %v2166 = vld [vmem:[%s5 + $0x158] sm:$0xf]
        %v2167 = vld [vmem:[%s5 + $0x15c] sm:$0xff]
        %v2168 = vld [vmem:[%s5 + $0x164] sm:$0xf]
        %v2169 = vld [vmem:[%s5 + $0x168] sm:$0xff]
        %v2170 = vld [vmem:[%s5 + $0x170] sm:$0xf]
        %v2171 = vld [vmem:[%s5 + $0x174] sm:$0xff]
        %v2172 = vld [vmem:[%s5 + $0x17c] sm:$0xf]
        %v2173 = vld [vmem:[%s5 + $0x180] sm:$0xff]
        %v2174 = vld [vmem:[%s5 + $0x188] sm:$0xf]
        %v2175 = vld [vmem:[%s5 + $0x18c] sm:$0xff]
        %v2176 = vld [vmem:[%s5 + $0x194] sm:$0xf]
        %v2177 = vld [vmem:[%s5 + $0x198] sm:$0xff]
        %v2178 = vld [vmem:[%s5 + $0x1a0] sm:$0xf]
        %v2179 = vld [vmem:[%s5 + $0x1a4] sm:$0xff]
        %v2180 = vld [vmem:[%s5 + $0x1ac] sm:$0xf]
        %v2181 = vld [vmem:[%s5 + $0x1b0] sm:$0xff]
        %v2182 = vld [vmem:[%s5 + $0x1b8] sm:$0xf]
        %v2183 = vld [vmem:[%s5 + $0x1bc] sm:$0xff]
        %v2184 = vld [vmem:[%s5 + $0x1c4] sm:$0xf]
        %v2185 = vld [vmem:[%s5 + $0x1c8] sm:$0xff]
        %v2186 = vld [vmem:[%s5 + $0x1d0] sm:$0xf]
        %v2187 = vld [vmem:[%s5 + $0x1d4] sm:$0xff]
        %v2188 = vld [vmem:[%s5 + $0x1dc] sm:$0xf]
        %v2189 = vld [vmem:[%s5 + $0x1e0] sm:$0xff]
        %v2190 = vld [vmem:[%s5 + $0x1e8] sm:$0xf]
        %v2191 = vld [vmem:[%s5 + $0x1ec] sm:$0xff]
        %v2192 = vld [vmem:[%s5 + $0x1f4] sm:$0xf]
        %v2193 = vld [vmem:[%s5 + $0x1f8] sm:$0xff]
        %v2194 = vld [vmem:[%s5 + $0x200] sm:$0xf]
        %v2195 = vld [vmem:[%s5 + $0x204] sm:$0xff]
        %v2196 = vld [vmem:[%s5 + $0x20c] sm:$0xf]
        %v2197 = vld [vmem:[%s5 + $0x210] sm:$0xff]
        %v2198 = vld [vmem:[%s5 + $0x218] sm:$0xf]
        %v2199 = vld [vmem:[%s5 + $0x21c] sm:$0xff]
        %v2200 = vld [vmem:[%s5 + $0x224] sm:$0xf]
        %v2201 = vld [vmem:[%s5 + $0x228] sm:$0xff]
        %v2202 = vld [vmem:[%s5 + $0x230] sm:$0xf]
        %v2203 = vld [vmem:[%s5 + $0x234] sm:$0xff]
        %v2204 = vld [vmem:[%s5 + $0x23c] sm:$0xf]
        %v2205 = vld [vmem:[%s5 + $0x240] sm:$0xff]
        %v2206 = vld [vmem:[%s5 + $0x248] sm:$0xf]
        %v2207 = vld [vmem:[%s5 + $0x24c] sm:$0xff]
        %v2208 = vld [vmem:[%s5 + $0x254] sm:$0xf]
        %v2209 = vld [vmem:[%s5 + $0x258] sm:$0xff]
        %v2210 = vld [vmem:[%s5 + $0x260] sm:$0xf]
        %v2211 = vld [vmem:[%s5 + $0x264] sm:$0xff]
        %v2212 = vld [vmem:[%s5 + $0x26c] sm:$0xf]
        %v2213 = vld [vmem:[%s5 + $0x270] sm:$0xff]
        %v2214 = vld [vmem:[%s5 + $0x278] sm:$0xf]
        %v2215 = vld [vmem:[%s5 + $0x27c] sm:$0xff]
        %v2216 = vld [vmem:[%s5 + $0x284] sm:$0xf]
        %v2217 = vld [vmem:[%s5 + $0x288] sm:$0xff]
        %v2218 = vld [vmem:[%s5 + $0x290] sm:$0xf]
        %v2219 = vld [vmem:[%s5 + $0x294] sm:$0xff]
        %v2220 = vld [vmem:[%s5 + $0x29c] sm:$0xf]
        %v2221 = vld [vmem:[%s5 + $0x2a0] sm:$0xff]
        %v2222 = vld [vmem:[%s5 + $0x2a8] sm:$0xf]
        %v2223 = vld [vmem:[%s5 + $0x2ac] sm:$0xff]
        %v2224 = vld [vmem:[%s5 + $0x2b4] sm:$0xf]
        %v2225 = vld [vmem:[%s5 + $0x2b8] sm:$0xff]
        %v2226 = vld [vmem:[%s5 + $0x2c0] sm:$0xf]
        %v2227 = vld [vmem:[%s5 + $0x2c4] sm:$0xff]
        %v2228 = vld [vmem:[%s5 + $0x2cc] sm:$0xf]
        %v2229 = vld [vmem:[%s5 + $0x2d0] sm:$0xff]
        %v2230 = vld [vmem:[%s5 + $0x2d8] sm:$0xf]
        %v2231 = vld [vmem:[%s5 + $0x2dc] sm:$0xff]
        %v2232 = vld [vmem:[%s5 + $0x2e4] sm:$0xf]
        %v2233 = vld [vmem:[%s5 + $0x2e8] sm:$0xff]
        %v2234 = vld [vmem:[%s5 + $0x2f0] sm:$0xf]
        %v2235 = vld [vmem:[%s5 + $0x2f4] sm:$0xff]
        %v2236 = vld [vmem:[%s5 + $0x2fc] sm:$0xf]
        %v2237 = vld [vmem:[%s6] sm:$0xff]
        %v2238 = vld [vmem:[%s6 + $0x8] sm:$0xf]
        %v2239 = vld [vmem:[%s6 + $0xc] sm:$0xff]
        %v2240 = vld [vmem:[%s6 + $0x14] sm:$0xf]
        %v2241 = vld [vmem:[%s6 + $0x18] sm:$0xff]
        %v2242 = vld [vmem:[%s6 + $0x20] sm:$0xf]
        %v2243 = vld [vmem:[%s6 + $0x24] sm:$0xff]
        %v2244 = vld [vmem:[%s6 + $0x2c] sm:$0xf]
        %v2245 = vld [vmem:[%s6 + $0x30] sm:$0xff]
        %v2246 = vld [vmem:[%s6 + $0x38] sm:$0xf]
        %v2247 = vld [vmem:[%s6 + $0x3c] sm:$0xff]
        %v2248 = vld [vmem:[%s6 + $0x44] sm:$0xf]
        %v2249 = vld [vmem:[%s6 + $0x48] sm:$0xff]
        %v2250 = vld [vmem:[%s6 + $0x50] sm:$0xf]
        %v2251 = vld [vmem:[%s6 + $0x54] sm:$0xff]
        %v2252 = vld [vmem:[%s6 + $0x5c] sm:$0xf]
        %v2253 = vld [vmem:[%s6 + $0x60] sm:$0xff]
        %v2254 = vld [vmem:[%s6 + $0x68] sm:$0xf]
        %v2255 = vld [vmem:[%s6 + $0x6c] sm:$0xff]
        %v2256 = vld [vmem:[%s6 + $0x74] sm:$0xf]
        %v2257 = vld [vmem:[%s6 + $0x78] sm:$0xff]
        %v2258 = vld [vmem:[%s6 + $0x80] sm:$0xf]
        %v2259 = vld [vmem:[%s6 + $0x84] sm:$0xff]
        %v2260 = vld [vmem:[%s6 + $0x8c] sm:$0xf]
        %v2261 = vld [vmem:[%s6 + $0x90] sm:$0xff]
        %v2262 = vld [vmem:[%s6 + $0x98] sm:$0xf]
        %v2263 = vld [vmem:[%s6 + $0x9c] sm:$0xff]
        %v2264 = vld [vmem:[%s6 + $0xa4] sm:$0xf]
        %v2265 = vld [vmem:[%s6 + $0xa8] sm:$0xff]
        %v2266 = vld [vmem:[%s6 + $0xb0] sm:$0xf]
        %v2267 = vld [vmem:[%s6 + $0xb4] sm:$0xff]
        %v2268 = vld [vmem:[%s6 + $0xbc] sm:$0xf]
        %v2269 = vld [vmem:[%s6 + $0xc0] sm:$0xff]
        %v2270 = vld [vmem:[%s6 + $0xc8] sm:$0xf]
        %v2271 = vld [vmem:[%s6 + $0xcc] sm:$0xff]
        %v2272 = vld [vmem:[%s6 + $0xd4] sm:$0xf]
        %v2273 = vld [vmem:[%s6 + $0xd8] sm:$0xff]
        %v2274 = vld [vmem:[%s6 + $0xe0] sm:$0xf]
        %v2275 = vld [vmem:[%s6 + $0xe4] sm:$0xff]
        %v2276 = vld [vmem:[%s6 + $0xec] sm:$0xf]
        %v2277 = vld [vmem:[%s6 + $0xf0] sm:$0xff]
        %v2278 = vld [vmem:[%s6 + $0xf8] sm:$0xf]
        %v2279 = vld [vmem:[%s6 + $0xfc] sm:$0xff]
        %v2280 = vld [vmem:[%s6 + $0x104] sm:$0xf]
        %v2281 = vld [vmem:[%s6 + $0x108] sm:$0xff]
        %v2282 = vld [vmem:[%s6 + $0x110] sm:$0xf]
        %v2283 = vld [vmem:[%s6 + $0x114] sm:$0xff]
        %v2284 = vld [vmem:[%s6 + $0x11c] sm:$0xf]
        %v2285 = vld [vmem:[%s6 + $0x120] sm:$0xff]
        %v2286 = vld [vmem:[%s6 + $0x128] sm:$0xf]
        %v2287 = vld [vmem:[%s6 + $0x12c] sm:$0xff]
        %v2288 = vld [vmem:[%s6 + $0x134] sm:$0xf]
        %v2289 = vld [vmem:[%s6 + $0x138] sm:$0xff]
        %v2290 = vld [vmem:[%s6 + $0x140] sm:$0xf]
        %v2291 = vld [vmem:[%s6 + $0x144] sm:$0xff]
        %v2292 = vld [vmem:[%s6 + $0x14c] sm:$0xf]
        %v2293 = vld [vmem:[%s6 + $0x150] sm:$0xff]
        %v2294 = vld [vmem:[%s6 + $0x158] sm:$0xf]
        %v2295 = vld [vmem:[%s6 + $0x15c] sm:$0xff]
        %v2296 = vld [vmem:[%s6 + $0x164] sm:$0xf]
        %v2297 = vld [vmem:[%s6 + $0x168] sm:$0xff]
        %v2298 = vld [vmem:[%s6 + $0x170] sm:$0xf]
        %v2299 = vld [vmem:[%s6 + $0x174] sm:$0xff]
        %v2300 = vld [vmem:[%s6 + $0x17c] sm:$0xf]
        %v2301 = vld [vmem:[%s6 + $0x180] sm:$0xff]
        %v2302 = vld [vmem:[%s6 + $0x188] sm:$0xf]
        %v2303 = vld [vmem:[%s6 + $0x18c] sm:$0xff]
        %v2304 = vld [vmem:[%s6 + $0x194] sm:$0xf]
        %v2305 = vld [vmem:[%s6 + $0x198] sm:$0xff]
        %v2306 = vld [vmem:[%s6 + $0x1a0] sm:$0xf]
        %v2307 = vld [vmem:[%s6 + $0x1a4] sm:$0xff]
        %v2308 = vld [vmem:[%s6 + $0x1ac] sm:$0xf]
        %v2309 = vld [vmem:[%s6 + $0x1b0] sm:$0xff]
        %v2310 = vld [vmem:[%s6 + $0x1b8] sm:$0xf]
        %v2311 = vld [vmem:[%s6 + $0x1bc] sm:$0xff]
        %v2312 = vld [vmem:[%s6 + $0x1c4] sm:$0xf]
        %v2313 = vld [vmem:[%s6 + $0x1c8] sm:$0xff]
        %v2314 = vld [vmem:[%s6 + $0x1d0] sm:$0xf]
        %v2315 = vld [vmem:[%s6 + $0x1d4] sm:$0xff]
        %v2316 = vld [vmem:[%s6 + $0x1dc] sm:$0xf]
        %v2317 = vld [vmem:[%s6 + $0x1e0] sm:$0xff]
        %v2318 = vld [vmem:[%s6 + $0x1e8] sm:$0xf]
        %v2319 = vld [vmem:[%s6 + $0x1ec] sm:$0xff]
        %v2320 = vld [vmem:[%s6 + $0x1f4] sm:$0xf]
        %v2321 = vld [vmem:[%s6 + $0x1f8] sm:$0xff]
        %v2322 = vld [vmem:[%s6 + $0x200] sm:$0xf]
        %v2323 = vld [vmem:[%s6 + $0x204] sm:$0xff]
        %v2324 = vld [vmem:[%s6 + $0x20c] sm:$0xf]
        %v2325 = vld [vmem:[%s6 + $0x210] sm:$0xff]
        %v2326 = vld [vmem:[%s6 + $0x218] sm:$0xf]
        %v2327 = vld [vmem:[%s6 + $0x21c] sm:$0xff]
        %v2328 = vld [vmem:[%s6 + $0x224] sm:$0xf]
        %v2329 = vld [vmem:[%s6 + $0x228] sm:$0xff]
        %v2330 = vld [vmem:[%s6 + $0x230] sm:$0xf]
        %v2331 = vld [vmem:[%s6 + $0x234] sm:$0xff]
        %v2332 = vld [vmem:[%s6 + $0x23c] sm:$0xf]
        %v2333 = vld [vmem:[%s6 + $0x240] sm:$0xff]
        %v2334 = vld [vmem:[%s6 + $0x248] sm:$0xf]
        %v2335 = vld [vmem:[%s6 + $0x24c] sm:$0xff]
        %v2336 = vld [vmem:[%s6 + $0x254] sm:$0xf]
        %v2337 = vld [vmem:[%s6 + $0x258] sm:$0xff]
        %v2338 = vld [vmem:[%s6 + $0x260] sm:$0xf]
        %v2339 = vld [vmem:[%s6 + $0x264] sm:$0xff]
        %v2340 = vld [vmem:[%s6 + $0x26c] sm:$0xf]
        %v2341 = vld [vmem:[%s6 + $0x270] sm:$0xff]
        %v2342 = vld [vmem:[%s6 + $0x278] sm:$0xf]
        %v2343 = vld [vmem:[%s6 + $0x27c] sm:$0xff]
        %v2344 = vld [vmem:[%s6 + $0x284] sm:$0xf]
        %v2345 = vld [vmem:[%s6 + $0x288] sm:$0xff]
        %v2346 = vld [vmem:[%s6 + $0x290] sm:$0xf]
        %v2347 = vld [vmem:[%s6 + $0x294] sm:$0xff]
        %v2348 = vld [vmem:[%s6 + $0x29c] sm:$0xf]
        %v2349 = vld [vmem:[%s6 + $0x2a0] sm:$0xff]
        %v2350 = vld [vmem:[%s6 + $0x2a8] sm:$0xf]
        %v2351 = vld [vmem:[%s6 + $0x2ac] sm:$0xff]
        %v2352 = vld [vmem:[%s6 + $0x2b4] sm:$0xf]
        %v2353 = vld [vmem:[%s6 + $0x2b8] sm:$0xff]
        %v2354 = vld [vmem:[%s6 + $0x2c0] sm:$0xf]
        %v2355 = vld [vmem:[%s6 + $0x2c4] sm:$0xff]
        %v2356 = vld [vmem:[%s6 + $0x2cc] sm:$0xf]
        %v2357 = vld [vmem:[%s6 + $0x2d0] sm:$0xff]
        %v2358 = vld [vmem:[%s6 + $0x2d8] sm:$0xf]
        %v2359 = vld [vmem:[%s6 + $0x2dc] sm:$0xff]
        %v2360 = vld [vmem:[%s6 + $0x2e4] sm:$0xf]
        %v2361 = vld [vmem:[%s6 + $0x2e8] sm:$0xff]
        %v2362 = vld [vmem:[%s6 + $0x2f0] sm:$0xf]
        %v2363 = vld [vmem:[%s6 + $0x2f4] sm:$0xff]
        %v2364 = vld [vmem:[%s6 + $0x2fc] sm:$0xf]
        %v2367 = vunpack.c.l.b16 %v2107
        %v2368 = vunpack.c.h.b16 %v2107
        %v2369 = vunpack.c.l.b16 %v2108
        %v2370 = vunpack.c.h.b16 %v2108
        %v2371 = vpack.c.b16 %v2367, %v2367
        %v2372 = vpack.c.b16 %v2368, %v2368
        %v2373 = vpack.c.b16 %v2369, %v2369
        %v2374 = vpack.c.b16 %v2370, %v2370
        %v2376 = vshrl.u32 %v2371, 16
        %v2379 = vshrl.u32 %v2372, 16
        %v2382 = vshrl.u32 %v2373, 16
        %v2385 = vshrl.u32 %v2374, 16
        %v2519 = vunpack.c.l.b16 %v2237
        %v2520 = vunpack.c.h.b16 %v2237
        %v2521 = vunpack.c.l.b16 %v2238
        %v2522 = vunpack.c.l.b16 %v2239
        %v2523 = vunpack.c.h.b16 %v2239
        %v2524 = vunpack.c.l.b16 %v2240
        %v2525 = vunpack.c.l.b16 %v2241
        %v2526 = vunpack.c.h.b16 %v2241
        %v2527 = vunpack.c.l.b16 %v2242
        %v2528 = vunpack.c.l.b16 %v2243
        %v2529 = vunpack.c.h.b16 %v2243
        %v2530 = vunpack.c.l.b16 %v2244
        %v2531 = vunpack.c.l.b16 %v2245
        %v2532 = vunpack.c.h.b16 %v2245
        %v2533 = vunpack.c.l.b16 %v2246
        %v2534 = vunpack.c.l.b16 %v2247
        %v2535 = vunpack.c.h.b16 %v2247
        %v2536 = vunpack.c.l.b16 %v2248
        %v2537 = vunpack.c.l.b16 %v2249
        %v2538 = vunpack.c.h.b16 %v2249
        %v2539 = vunpack.c.l.b16 %v2250
        %v2540 = vunpack.c.l.b16 %v2251
        %v2541 = vunpack.c.h.b16 %v2251
        %v2542 = vunpack.c.l.b16 %v2252
        %v2543 = vunpack.c.l.b16 %v2253
        %v2544 = vunpack.c.h.b16 %v2253
        %v2545 = vunpack.c.l.b16 %v2254
        %v2546 = vunpack.c.l.b16 %v2255
        %v2547 = vunpack.c.h.b16 %v2255
        %v2548 = vunpack.c.l.b16 %v2256
        %v2549 = vunpack.c.l.b16 %v2257
        %v2550 = vunpack.c.h.b16 %v2257
        %v2551 = vunpack.c.l.b16 %v2258
        %v2552 = vunpack.c.l.b16 %v2259
        %v2553 = vunpack.c.h.b16 %v2259
        %v2554 = vunpack.c.l.b16 %v2260
        %v2555 = vunpack.c.l.b16 %v2261
        %v2556 = vunpack.c.h.b16 %v2261
        %v2557 = vunpack.c.l.b16 %v2262
        %v2558 = vunpack.c.l.b16 %v2263
        %v2559 = vunpack.c.h.b16 %v2263
        %v2560 = vunpack.c.l.b16 %v2264
        %v2561 = vunpack.c.l.b16 %v2265
        %v2562 = vunpack.c.h.b16 %v2265
        %v2563 = vunpack.c.l.b16 %v2266
        %v2564 = vunpack.c.l.b16 %v2267
        %v2565 = vunpack.c.h.b16 %v2267
        %v2566 = vunpack.c.l.b16 %v2268
        %v2567 = vunpack.c.l.b16 %v2269
        %v2568 = vunpack.c.h.b16 %v2269
        %v2569 = vunpack.c.l.b16 %v2270
        %v2570 = vunpack.c.l.b16 %v2271
        %v2571 = vunpack.c.h.b16 %v2271
        %v2572 = vunpack.c.l.b16 %v2272
        %v2573 = vunpack.c.l.b16 %v2273
        %v2574 = vunpack.c.h.b16 %v2273
        %v2575 = vunpack.c.l.b16 %v2274
        %v2576 = vunpack.c.l.b16 %v2275
        %v2577 = vunpack.c.h.b16 %v2275
        %v2578 = vunpack.c.l.b16 %v2276
        %v2579 = vunpack.c.l.b16 %v2277
        %v2580 = vunpack.c.h.b16 %v2277
        %v2581 = vunpack.c.l.b16 %v2278
        %v2582 = vunpack.c.l.b16 %v2279
        %v2583 = vunpack.c.h.b16 %v2279
        %v2584 = vunpack.c.l.b16 %v2280
        %v2585 = vunpack.c.l.b16 %v2281
        %v2586 = vunpack.c.h.b16 %v2281
        %v2587 = vunpack.c.l.b16 %v2282
        %v2588 = vunpack.c.l.b16 %v2283
        %v2589 = vunpack.c.h.b16 %v2283
        %v2590 = vunpack.c.l.b16 %v2284
        %v2591 = vunpack.c.l.b16 %v2285
        %v2592 = vunpack.c.h.b16 %v2285
        %v2593 = vunpack.c.l.b16 %v2286
        %v2594 = vunpack.c.l.b16 %v2287
        %v2595 = vunpack.c.h.b16 %v2287
        %v2596 = vunpack.c.l.b16 %v2288
        %v2597 = vunpack.c.l.b16 %v2289
        %v2598 = vunpack.c.h.b16 %v2289
        %v2599 = vunpack.c.l.b16 %v2290
        %v2600 = vunpack.c.l.b16 %v2291
        %v2601 = vunpack.c.h.b16 %v2291
        %v2602 = vunpack.c.l.b16 %v2292
        %v2603 = vunpack.c.l.b16 %v2293
        %v2604 = vunpack.c.h.b16 %v2293
        %v2605 = vunpack.c.l.b16 %v2294
        %v2606 = vunpack.c.l.b16 %v2295
        %v2607 = vunpack.c.h.b16 %v2295
        %v2608 = vunpack.c.l.b16 %v2296
        %v2609 = vunpack.c.l.b16 %v2297
        %v2610 = vunpack.c.h.b16 %v2297
        %v2611 = vunpack.c.l.b16 %v2298
        %v2612 = vunpack.c.l.b16 %v2299
        %v2613 = vunpack.c.h.b16 %v2299
        %v2614 = vunpack.c.l.b16 %v2300
        %v2615 = vunpack.c.l.b16 %v2301
        %v2616 = vunpack.c.h.b16 %v2301
        %v2617 = vunpack.c.l.b16 %v2302
        %v2618 = vunpack.c.l.b16 %v2303
        %v2619 = vunpack.c.h.b16 %v2303
        %v2620 = vunpack.c.l.b16 %v2304
        %v2621 = vunpack.c.l.b16 %v2305
        %v2622 = vunpack.c.h.b16 %v2305
        %v2623 = vunpack.c.l.b16 %v2306
        %v2624 = vunpack.c.l.b16 %v2307
        %v2625 = vunpack.c.h.b16 %v2307
        %v2626 = vunpack.c.l.b16 %v2308
        %v2627 = vunpack.c.l.b16 %v2309
        %v2628 = vunpack.c.h.b16 %v2309
        %v2629 = vunpack.c.l.b16 %v2310
        %v2630 = vunpack.c.l.b16 %v2311
        %v2631 = vunpack.c.h.b16 %v2311
        %v2632 = vunpack.c.l.b16 %v2312
        %v2633 = vunpack.c.l.b16 %v2313
        %v2634 = vunpack.c.h.b16 %v2313
        %v2635 = vunpack.c.l.b16 %v2314
        %v2636 = vunpack.c.l.b16 %v2315
        %v2637 = vunpack.c.h.b16 %v2315
        %v2638 = vunpack.c.l.b16 %v2316
        %v2639 = vunpack.c.l.b16 %v2317
        %v2640 = vunpack.c.h.b16 %v2317
        %v2641 = vunpack.c.l.b16 %v2318
        %v2642 = vunpack.c.l.b16 %v2319
        %v2643 = vunpack.c.h.b16 %v2319
        %v2644 = vunpack.c.l.b16 %v2320
        %v2645 = vunpack.c.l.b16 %v2321
        %v2646 = vunpack.c.h.b16 %v2321
        %v2647 = vunpack.c.l.b16 %v2322
        %v2648 = vunpack.c.l.b16 %v2323
        %v2649 = vunpack.c.h.b16 %v2323
        %v2650 = vunpack.c.l.b16 %v2324
        %v2651 = vunpack.c.l.b16 %v2325
        %v2652 = vunpack.c.h.b16 %v2325
        %v2653 = vunpack.c.l.b16 %v2326
        %v2654 = vunpack.c.l.b16 %v2327
        %v2655 = vunpack.c.h.b16 %v2327
        %v2656 = vunpack.c.l.b16 %v2328
        %v2657 = vunpack.c.l.b16 %v2329
        %v2658 = vunpack.c.h.b16 %v2329
        %v2659 = vunpack.c.l.b16 %v2330
        %v2660 = vunpack.c.l.b16 %v2331
        %v2661 = vunpack.c.h.b16 %v2331
        %v2662 = vunpack.c.l.b16 %v2332
        %v2663 = vunpack.c.l.b16 %v2333
        %v2664 = vunpack.c.h.b16 %v2333
        %v2665 = vunpack.c.l.b16 %v2334
        %v2666 = vunpack.c.l.b16 %v2335
        %v2667 = vunpack.c.h.b16 %v2335
        %v2668 = vunpack.c.l.b16 %v2336
        %v2669 = vunpack.c.l.b16 %v2337
        %v2670 = vunpack.c.h.b16 %v2337
        %v2671 = vunpack.c.l.b16 %v2338
        %v2672 = vunpack.c.l.b16 %v2339
        %v2673 = vunpack.c.h.b16 %v2339
        %v2674 = vunpack.c.l.b16 %v2340
        %v2675 = vunpack.c.l.b16 %v2341
        %v2676 = vunpack.c.h.b16 %v2341
        %v2677 = vunpack.c.l.b16 %v2342
        %v2678 = vunpack.c.l.b16 %v2343
        %v2679 = vunpack.c.h.b16 %v2343
        %v2680 = vunpack.c.l.b16 %v2344
        %v2681 = vunpack.c.l.b16 %v2345
        %v2682 = vunpack.c.h.b16 %v2345
        %v2683 = vunpack.c.l.b16 %v2346
        %v2684 = vunpack.c.l.b16 %v2347
        %v2685 = vunpack.c.h.b16 %v2347
        %v2686 = vunpack.c.l.b16 %v2348
        %v2687 = vunpack.c.l.b16 %v2349
        %v2688 = vunpack.c.h.b16 %v2349
        %v2689 = vunpack.c.l.b16 %v2350
        %v2690 = vunpack.c.l.b16 %v2351
        %v2691 = vunpack.c.h.b16 %v2351
        %v2692 = vunpack.c.l.b16 %v2352
        %v2693 = vunpack.c.l.b16 %v2353
        %v2694 = vunpack.c.h.b16 %v2353
        %v2695 = vunpack.c.l.b16 %v2354
        %v2696 = vunpack.c.l.b16 %v2355
        %v2697 = vunpack.c.h.b16 %v2355
        %v2698 = vunpack.c.l.b16 %v2356
        %v2699 = vunpack.c.l.b16 %v2357
        %v2700 = vunpack.c.h.b16 %v2357
        %v2701 = vunpack.c.l.b16 %v2358
        %v2702 = vunpack.c.l.b16 %v2359
        %v2703 = vunpack.c.h.b16 %v2359
        %v2704 = vunpack.c.l.b16 %v2360
        %v2705 = vunpack.c.l.b16 %v2361
        %v2706 = vunpack.c.h.b16 %v2361
        %v2707 = vunpack.c.l.b16 %v2362
        %v2708 = vunpack.c.l.b16 %v2363
        %v2709 = vunpack.c.h.b16 %v2363
        %v2710 = vunpack.c.l.b16 %v2364
        %v2711 = vpack.c.b16 %v2522, %v2519
        %v2712 = vpack.c.b16 %v2523, %v2520
        %v2713 = vpack.c.b16 %v2524, %v2521
        %v2714 = vpack.c.b16 %v2528, %v2525
        %v2715 = vpack.c.b16 %v2529, %v2526
        %v2716 = vpack.c.b16 %v2530, %v2527
        %v2717 = vpack.c.b16 %v2534, %v2531
        %v2718 = vpack.c.b16 %v2535, %v2532
        %v2719 = vpack.c.b16 %v2536, %v2533
        %v2720 = vpack.c.b16 %v2540, %v2537
        %v2721 = vpack.c.b16 %v2541, %v2538
        %v2722 = vpack.c.b16 %v2542, %v2539
        %v2723 = vpack.c.b16 %v2546, %v2543
        %v2724 = vpack.c.b16 %v2547, %v2544
        %v2725 = vpack.c.b16 %v2548, %v2545
        %v2726 = vpack.c.b16 %v2552, %v2549
        %v2727 = vpack.c.b16 %v2553, %v2550
        %v2728 = vpack.c.b16 %v2554, %v2551
        %v2729 = vpack.c.b16 %v2558, %v2555
        %v2730 = vpack.c.b16 %v2559, %v2556
        %v2731 = vpack.c.b16 %v2560, %v2557
        %v2732 = vpack.c.b16 %v2564, %v2561
        %v2733 = vpack.c.b16 %v2565, %v2562
        %v2734 = vpack.c.b16 %v2566, %v2563
        %v2735 = vpack.c.b16 %v2570, %v2567
        %v2736 = vpack.c.b16 %v2571, %v2568
        %v2737 = vpack.c.b16 %v2572, %v2569
        %v2738 = vpack.c.b16 %v2576, %v2573
        %v2739 = vpack.c.b16 %v2577, %v2574
        %v2740 = vpack.c.b16 %v2578, %v2575
        %v2741 = vpack.c.b16 %v2582, %v2579
        %v2742 = vpack.c.b16 %v2583, %v2580
        %v2743 = vpack.c.b16 %v2584, %v2581
        %v2744 = vpack.c.b16 %v2588, %v2585
        %v2745 = vpack.c.b16 %v2589, %v2586
        %v2746 = vpack.c.b16 %v2590, %v2587
        %v2747 = vpack.c.b16 %v2594, %v2591
        %v2748 = vpack.c.b16 %v2595, %v2592
        %v2749 = vpack.c.b16 %v2596, %v2593
        %v2750 = vpack.c.b16 %v2600, %v2597
        %v2751 = vpack.c.b16 %v2601, %v2598
        %v2752 = vpack.c.b16 %v2602, %v2599
        %v2753 = vpack.c.b16 %v2606, %v2603
        %v2754 = vpack.c.b16 %v2607, %v2604
        %v2755 = vpack.c.b16 %v2608, %v2605
        %v2756 = vpack.c.b16 %v2612, %v2609
        %v2757 = vpack.c.b16 %v2613, %v2610
        %v2758 = vpack.c.b16 %v2614, %v2611
        %v2759 = vpack.c.b16 %v2618, %v2615
        %v2760 = vpack.c.b16 %v2619, %v2616
        %v2761 = vpack.c.b16 %v2620, %v2617
        %v2762 = vpack.c.b16 %v2624, %v2621
        %v2763 = vpack.c.b16 %v2625, %v2622
        %v2764 = vpack.c.b16 %v2626, %v2623
        %v2765 = vpack.c.b16 %v2630, %v2627
        %v2766 = vpack.c.b16 %v2631, %v2628
        %v2767 = vpack.c.b16 %v2632, %v2629
        %v2768 = vpack.c.b16 %v2636, %v2633
        %v2769 = vpack.c.b16 %v2637, %v2634
        %v2770 = vpack.c.b16 %v2638, %v2635
        %v2771 = vpack.c.b16 %v2642, %v2639
        %v2772 = vpack.c.b16 %v2643, %v2640
        %v2773 = vpack.c.b16 %v2644, %v2641
        %v2774 = vpack.c.b16 %v2648, %v2645
        %v2775 = vpack.c.b16 %v2649, %v2646
        %v2776 = vpack.c.b16 %v2650, %v2647
        %v2777 = vpack.c.b16 %v2654, %v2651
        %v2778 = vpack.c.b16 %v2655, %v2652
        %v2779 = vpack.c.b16 %v2656, %v2653
        %v2780 = vpack.c.b16 %v2660, %v2657
        %v2781 = vpack.c.b16 %v2661, %v2658
        %v2782 = vpack.c.b16 %v2662, %v2659
        %v2783 = vpack.c.b16 %v2666, %v2663
        %v2784 = vpack.c.b16 %v2667, %v2664
        %v2785 = vpack.c.b16 %v2668, %v2665
        %v2786 = vpack.c.b16 %v2672, %v2669
        %v2787 = vpack.c.b16 %v2673, %v2670
        %v2788 = vpack.c.b16 %v2674, %v2671
        %v2789 = vpack.c.b16 %v2678, %v2675
        %v2790 = vpack.c.b16 %v2679, %v2676
        %v2791 = vpack.c.b16 %v2680, %v2677
        %v2792 = vpack.c.b16 %v2684, %v2681
        %v2793 = vpack.c.b16 %v2685, %v2682
        %v2794 = vpack.c.b16 %v2686, %v2683
        %v2795 = vpack.c.b16 %v2690, %v2687
        %v2796 = vpack.c.b16 %v2691, %v2688
        %v2797 = vpack.c.b16 %v2692, %v2689
        %v2798 = vpack.c.b16 %v2696, %v2693
        %v2799 = vpack.c.b16 %v2697, %v2694
        %v2800 = vpack.c.b16 %v2698, %v2695
        %v2801 = vpack.c.b16 %v2702, %v2699
        %v2802 = vpack.c.b16 %v2703, %v2700
        %v2803 = vpack.c.b16 %v2704, %v2701
        %v2804 = vpack.c.b16 %v2708, %v2705
        %v2805 = vpack.c.b16 %v2709, %v2706
        %v2806 = vpack.c.b16 %v2710, %v2707
        %2903 = vmatpush.bf16.msra.mxu0 %v2732
        %2904 = vmatpush.bf16.msra.mxu0 %v2729
        %2905 = vmatpush.bf16.msra.mxu0 %v2726
        %2906 = vmatpush.bf16.msra.mxu0 %v2723
        %2907 = vmatpush.bf16.msra.mxu0 %v2720
        %2908 = vmatpush.bf16.msra.mxu0 %v2717
        %2909 = vmatpush.bf16.msra.mxu0 %v2714
        %2910 = vmatpush.bf16.msra.mxu0 %v2711
        %2911 = vmatmul.bf16.gmra.mxu0 %v2376
        %v2912 = vpop.f32.mrf.mxu0
        %v2913 = vadd.f32 0.0, %v2912
        %v2914 = vpop.f32.mrf.mxu0
        %2915 = vdwg.mxu0
        %2916 = vmatpush.bf16.msra.mxu0 %v2756
        %2917 = vmatpush.bf16.msra.mxu0 %v2753
        %2918 = vmatpush.bf16.msra.mxu0 %v2750
        %2919 = vmatpush.bf16.msra.mxu0 %v2747
        %2920 = vmatpush.bf16.msra.mxu0 %v2744
        %2921 = vmatpush.bf16.msra.mxu0 %v2741
        %2922 = vmatpush.bf16.msra.mxu0 %v2738
        %2923 = vmatpush.bf16.msra.mxu0 %v2735
        %2924 = vmatmul.bf16.gmra.mxu0 %v2379
        %v2925 = vpop.f32.mrf.mxu0
        %v2926 = vadd.f32 %v2913, %v2925
        %v2927 = vpop.f32.mrf.mxu0
        %2928 = vdwg.mxu0
        %2929 = vmatpush.bf16.msra.mxu0 %v2780
        %2930 = vmatpush.bf16.msra.mxu0 %v2777
        %2931 = vmatpush.bf16.msra.mxu0 %v2774
        %2932 = vmatpush.bf16.msra.mxu0 %v2771
        %2933 = vmatpush.bf16.msra.mxu0 %v2768
        %2934 = vmatpush.bf16.msra.mxu0 %v2765
        %2935 = vmatpush.bf16.msra.mxu0 %v2762
        %2936 = vmatpush.bf16.msra.mxu0 %v2759
        %2937 = vmatmul.bf16.gmra.mxu0 %v2382
        %v2938 = vpop.f32.mrf.mxu0
        %v2939 = vadd.f32 %v2926, %v2938
        %v2940 = vpop.f32.mrf.mxu0
        %2941 = vdwg.mxu0
        %2942 = vmatpush.bf16.msra.mxu0 %v2804
        %2943 = vmatpush.bf16.msra.mxu0 %v2801
        %2944 = vmatpush.bf16.msra.mxu0 %v2798
        %2945 = vmatpush.bf16.msra.mxu0 %v2795
        %2946 = vmatpush.bf16.msra.mxu0 %v2792
        %2947 = vmatpush.bf16.msra.mxu0 %v2789
        %2948 = vmatpush.bf16.msra.mxu0 %v2786
        %2949 = vmatpush.bf16.msra.mxu0 %v2783
        %2950 = vmatmul.bf16.gmra.mxu0 %v2385
        %v2951 = vpop.f32.mrf.mxu0
        %v2952 = vadd.f32 %v2939, %v2951
        %v2953 = vpop.f32.mrf.mxu0
        %2954 = vdwg.mxu0
        %2955 = vmatpush.bf16.msra.mxu0 %v2733
        %2956 = vmatpush.bf16.msra.mxu0 %v2730
        %2957 = vmatpush.bf16.msra.mxu0 %v2727
        %2958 = vmatpush.bf16.msra.mxu0 %v2724
        %2959 = vmatpush.bf16.msra.mxu0 %v2721
        %2960 = vmatpush.bf16.msra.mxu0 %v2718
        %2961 = vmatpush.bf16.msra.mxu0 %v2715
        %2962 = vmatpush.bf16.msra.mxu0 %v2712
        %2963 = vmatmul.bf16.gmra.mxu0 %v2376
        %v2964 = vpop.f32.mrf.mxu0
        %v2965 = vadd.f32 0.0, %v2964
        %v2966 = vpop.f32.mrf.mxu0
        %2967 = vdwg.mxu0
        %2968 = vmatpush.bf16.msra.mxu0 %v2757
        %2969 = vmatpush.bf16.msra.mxu0 %v2754
        %2970 = vmatpush.bf16.msra.mxu0 %v2751
        %2971 = vmatpush.bf16.msra.mxu0 %v2748
        %2972 = vmatpush.bf16.msra.mxu0 %v2745
        %2973 = vmatpush.bf16.msra.mxu0 %v2742
        %2974 = vmatpush.bf16.msra.mxu0 %v2739
        %2975 = vmatpush.bf16.msra.mxu0 %v2736
        %2976 = vmatmul.bf16.gmra.mxu0 %v2379
        %v2977 = vpop.f32.mrf.mxu0
        %v2978 = vadd.f32 %v2965, %v2977
        %v2979 = vpop.f32.mrf.mxu0
        %2980 = vdwg.mxu0
        %2981 = vmatpush.bf16.msra.mxu0 %v2781
        %2982 = vmatpush.bf16.msra.mxu0 %v2778
        %2983 = vmatpush.bf16.msra.mxu0 %v2775
        %2984 = vmatpush.bf16.msra.mxu0 %v2772
        %2985 = vmatpush.bf16.msra.mxu0 %v2769
        %2986 = vmatpush.bf16.msra.mxu0 %v2766
        %2987 = vmatpush.bf16.msra.mxu0 %v2763
        %2988 = vmatpush.bf16.msra.mxu0 %v2760
        %2989 = vmatmul.bf16.gmra.mxu0 %v2382
        %v2990 = vpop.f32.mrf.mxu0
        %v2991 = vadd.f32 %v2978, %v2990
        %v2992 = vpop.f32.mrf.mxu0
        %2993 = vdwg.mxu0
        %2994 = vmatpush.bf16.msra.mxu0 %v2805
        %2995 = vmatpush.bf16.msra.mxu0 %v2802
        %2996 = vmatpush.bf16.msra.mxu0 %v2799
        %2997 = vmatpush.bf16.msra.mxu0 %v2796
        %2998 = vmatpush.bf16.msra.mxu0 %v2793
        %2999 = vmatpush.bf16.msra.mxu0 %v2790
        %3000 = vmatpush.bf16.msra.mxu0 %v2787
        %3001 = vmatpush.bf16.msra.mxu0 %v2784
        %3002 = vmatmul.bf16.gmra.mxu0 %v2385
        %v3003 = vpop.f32.mrf.mxu0
        %v3004 = vadd.f32 %v2991, %v3003
        %v3005 = vpop.f32.mrf.mxu0
        %3006 = vdwg.mxu0
        %3007 = vmatpush.bf16.msra.mxu0 %v2734
        %3008 = vmatpush.bf16.msra.mxu0 %v2731
        %3009 = vmatpush.bf16.msra.mxu0 %v2728
        %3010 = vmatpush.bf16.msra.mxu0 %v2725
        %3011 = vmatpush.bf16.msra.mxu0 %v2722
        %3012 = vmatpush.bf16.msra.mxu0 %v2719
        %3013 = vmatpush.bf16.msra.mxu0 %v2716
        %3014 = vmatpush.bf16.msra.mxu0 %v2713
        %3015 = vmatmul.bf16.gmra.mxu0 %v2376
        %v3016 = vpop.f32.mrf.mxu0
        %v3017 = vadd.f32 0.0, %v3016
        %v3018 = vpop.f32.mrf.mxu0
        %3019 = vdwg.mxu0
        %3020 = vmatpush.bf16.msra.mxu0 %v2758
        %3021 = vmatpush.bf16.msra.mxu0 %v2755
        %3022 = vmatpush.bf16.msra.mxu0 %v2752
        %3023 = vmatpush.bf16.msra.mxu0 %v2749
        %3024 = vmatpush.bf16.msra.mxu0 %v2746
        %3025 = vmatpush.bf16.msra.mxu0 %v2743
        %3026 = vmatpush.bf16.msra.mxu0 %v2740
        %3027 = vmatpush.bf16.msra.mxu0 %v2737
        %3028 = vmatmul.bf16.gmra.mxu0 %v2379
        %v3029 = vpop.f32.mrf.mxu0
        %v3030 = vadd.f32 %v3017, %v3029
        %v3031 = vpop.f32.mrf.mxu0
        %3032 = vdwg.mxu0
        %3033 = vmatpush.bf16.msra.mxu0 %v2782
        %3034 = vmatpush.bf16.msra.mxu0 %v2779
        %3035 = vmatpush.bf16.msra.mxu0 %v2776
        %3036 = vmatpush.bf16.msra.mxu0 %v2773
        %3037 = vmatpush.bf16.msra.mxu0 %v2770
        %3038 = vmatpush.bf16.msra.mxu0 %v2767
        %3039 = vmatpush.bf16.msra.mxu0 %v2764
        %3040 = vmatpush.bf16.msra.mxu0 %v2761
        %3041 = vmatmul.bf16.gmra.mxu0 %v2382
        %v3042 = vpop.f32.mrf.mxu0
        %v3043 = vadd.f32 %v3030, %v3042
        %v3044 = vpop.f32.mrf.mxu0
        %3045 = vdwg.mxu0
        %3046 = vmatpush.bf16.msra.mxu0 %v2806
        %3047 = vmatpush.bf16.msra.mxu0 %v2803
        %3048 = vmatpush.bf16.msra.mxu0 %v2800
        %3049 = vmatpush.bf16.msra.mxu0 %v2797
        %3050 = vmatpush.bf16.msra.mxu0 %v2794
        %3051 = vmatpush.bf16.msra.mxu0 %v2791
        %3052 = vmatpush.bf16.msra.mxu0 %v2788
        %3053 = vmatpush.bf16.msra.mxu0 %v2785
        %3054 = vmatmul.bf16.gmra.mxu0 %v2385
        %v3055 = vpop.f32.mrf.mxu0
        %v3056 = vadd.f32 %v3043, %v3055
        %v3057 = vpop.f32.mrf.mxu0
        %3058 = vdwg.mxu0
        %v3191 = vunpack.c.l.b16 %v2109
        %v3192 = vunpack.c.h.b16 %v2109
        %v3193 = vunpack.c.l.b16 %v2110
        %v3194 = vunpack.c.l.b16 %v2111
        %v3195 = vunpack.c.h.b16 %v2111
        %v3196 = vunpack.c.l.b16 %v2112
        %v3197 = vunpack.c.l.b16 %v2113
        %v3198 = vunpack.c.h.b16 %v2113
        %v3199 = vunpack.c.l.b16 %v2114
        %v3200 = vunpack.c.l.b16 %v2115
        %v3201 = vunpack.c.h.b16 %v2115
        %v3202 = vunpack.c.l.b16 %v2116
        %v3203 = vunpack.c.l.b16 %v2117
        %v3204 = vunpack.c.h.b16 %v2117
        %v3205 = vunpack.c.l.b16 %v2118
        %v3206 = vunpack.c.l.b16 %v2119
        %v3207 = vunpack.c.h.b16 %v2119
        %v3208 = vunpack.c.l.b16 %v2120
        %v3209 = vunpack.c.l.b16 %v2121
        %v3210 = vunpack.c.h.b16 %v2121
        %v3211 = vunpack.c.l.b16 %v2122
        %v3212 = vunpack.c.l.b16 %v2123
        %v3213 = vunpack.c.h.b16 %v2123
        %v3214 = vunpack.c.l.b16 %v2124
        %v3215 = vunpack.c.l.b16 %v2125
        %v3216 = vunpack.c.h.b16 %v2125
        %v3217 = vunpack.c.l.b16 %v2126
        %v3218 = vunpack.c.l.b16 %v2127
        %v3219 = vunpack.c.h.b16 %v2127
        %v3220 = vunpack.c.l.b16 %v2128
        %v3221 = vunpack.c.l.b16 %v2129
        %v3222 = vunpack.c.h.b16 %v2129
        %v3223 = vunpack.c.l.b16 %v2130
        %v3224 = vunpack.c.l.b16 %v2131
        %v3225 = vunpack.c.h.b16 %v2131
        %v3226 = vunpack.c.l.b16 %v2132
        %v3227 = vunpack.c.l.b16 %v2133
        %v3228 = vunpack.c.h.b16 %v2133
        %v3229 = vunpack.c.l.b16 %v2134
        %v3230 = vunpack.c.l.b16 %v2135
        %v3231 = vunpack.c.h.b16 %v2135
        %v3232 = vunpack.c.l.b16 %v2136
        %v3233 = vunpack.c.l.b16 %v2137
        %v3234 = vunpack.c.h.b16 %v2137
        %v3235 = vunpack.c.l.b16 %v2138
        %v3236 = vunpack.c.l.b16 %v2139
        %v3237 = vunpack.c.h.b16 %v2139
        %v3238 = vunpack.c.l.b16 %v2140
        %v3239 = vunpack.c.l.b16 %v2141
        %v3240 = vunpack.c.h.b16 %v2141
        %v3241 = vunpack.c.l.b16 %v2142
        %v3242 = vunpack.c.l.b16 %v2143
        %v3243 = vunpack.c.h.b16 %v2143
        %v3244 = vunpack.c.l.b16 %v2144
        %v3245 = vunpack.c.l.b16 %v2145
        %v3246 = vunpack.c.h.b16 %v2145
        %v3247 = vunpack.c.l.b16 %v2146
        %v3248 = vunpack.c.l.b16 %v2147
        %v3249 = vunpack.c.h.b16 %v2147
        %v3250 = vunpack.c.l.b16 %v2148
        %v3251 = vunpack.c.l.b16 %v2149
        %v3252 = vunpack.c.h.b16 %v2149
        %v3253 = vunpack.c.l.b16 %v2150
        %v3254 = vunpack.c.l.b16 %v2151
        %v3255 = vunpack.c.h.b16 %v2151
        %v3256 = vunpack.c.l.b16 %v2152
        %v3257 = vunpack.c.l.b16 %v2153
        %v3258 = vunpack.c.h.b16 %v2153
        %v3259 = vunpack.c.l.b16 %v2154
        %v3260 = vunpack.c.l.b16 %v2155
        %v3261 = vunpack.c.h.b16 %v2155
        %v3262 = vunpack.c.l.b16 %v2156
        %v3263 = vunpack.c.l.b16 %v2157
        %v3264 = vunpack.c.h.b16 %v2157
        %v3265 = vunpack.c.l.b16 %v2158
        %v3266 = vunpack.c.l.b16 %v2159
        %v3267 = vunpack.c.h.b16 %v2159
        %v3268 = vunpack.c.l.b16 %v2160
        %v3269 = vunpack.c.l.b16 %v2161
        %v3270 = vunpack.c.h.b16 %v2161
        %v3271 = vunpack.c.l.b16 %v2162
        %v3272 = vunpack.c.l.b16 %v2163
        %v3273 = vunpack.c.h.b16 %v2163
        %v3274 = vunpack.c.l.b16 %v2164
        %v3275 = vunpack.c.l.b16 %v2165
        %v3276 = vunpack.c.h.b16 %v2165
        %v3277 = vunpack.c.l.b16 %v2166
        %v3278 = vunpack.c.l.b16 %v2167
        %v3279 = vunpack.c.h.b16 %v2167
        %v3280 = vunpack.c.l.b16 %v2168
        %v3281 = vunpack.c.l.b16 %v2169
        %v3282 = vunpack.c.h.b16 %v2169
        %v3283 = vunpack.c.l.b16 %v2170
        %v3284 = vunpack.c.l.b16 %v2171
        %v3285 = vunpack.c.h.b16 %v2171
        %v3286 = vunpack.c.l.b16 %v2172
        %v3287 = vunpack.c.l.b16 %v2173
        %v3288 = vunpack.c.h.b16 %v2173
        %v3289 = vunpack.c.l.b16 %v2174
        %v3290 = vunpack.c.l.b16 %v2175
        %v3291 = vunpack.c.h.b16 %v2175
        %v3292 = vunpack.c.l.b16 %v2176
        %v3293 = vunpack.c.l.b16 %v2177
        %v3294 = vunpack.c.h.b16 %v2177
        %v3295 = vunpack.c.l.b16 %v2178
        %v3296 = vunpack.c.l.b16 %v2179
        %v3297 = vunpack.c.h.b16 %v2179
        %v3298 = vunpack.c.l.b16 %v2180
        %v3299 = vunpack.c.l.b16 %v2181
        %v3300 = vunpack.c.h.b16 %v2181
        %v3301 = vunpack.c.l.b16 %v2182
        %v3302 = vunpack.c.l.b16 %v2183
        %v3303 = vunpack.c.h.b16 %v2183
        %v3304 = vunpack.c.l.b16 %v2184
        %v3305 = vunpack.c.l.b16 %v2185
        %v3306 = vunpack.c.h.b16 %v2185
        %v3307 = vunpack.c.l.b16 %v2186
        %v3308 = vunpack.c.l.b16 %v2187
        %v3309 = vunpack.c.h.b16 %v2187
        %v3310 = vunpack.c.l.b16 %v2188
        %v3311 = vunpack.c.l.b16 %v2189
        %v3312 = vunpack.c.h.b16 %v2189
        %v3313 = vunpack.c.l.b16 %v2190
        %v3314 = vunpack.c.l.b16 %v2191
        %v3315 = vunpack.c.h.b16 %v2191
        %v3316 = vunpack.c.l.b16 %v2192
        %v3317 = vunpack.c.l.b16 %v2193
        %v3318 = vunpack.c.h.b16 %v2193
        %v3319 = vunpack.c.l.b16 %v2194
        %v3320 = vunpack.c.l.b16 %v2195
        %v3321 = vunpack.c.h.b16 %v2195
        %v3322 = vunpack.c.l.b16 %v2196
        %v3323 = vunpack.c.l.b16 %v2197
        %v3324 = vunpack.c.h.b16 %v2197
        %v3325 = vunpack.c.l.b16 %v2198
        %v3326 = vunpack.c.l.b16 %v2199
        %v3327 = vunpack.c.h.b16 %v2199
        %v3328 = vunpack.c.l.b16 %v2200
        %v3329 = vunpack.c.l.b16 %v2201
        %v3330 = vunpack.c.h.b16 %v2201
        %v3331 = vunpack.c.l.b16 %v2202
        %v3332 = vunpack.c.l.b16 %v2203
        %v3333 = vunpack.c.h.b16 %v2203
        %v3334 = vunpack.c.l.b16 %v2204
        %v3335 = vunpack.c.l.b16 %v2205
        %v3336 = vunpack.c.h.b16 %v2205
        %v3337 = vunpack.c.l.b16 %v2206
        %v3338 = vunpack.c.l.b16 %v2207
        %v3339 = vunpack.c.h.b16 %v2207
        %v3340 = vunpack.c.l.b16 %v2208
        %v3341 = vunpack.c.l.b16 %v2209
        %v3342 = vunpack.c.h.b16 %v2209
        %v3343 = vunpack.c.l.b16 %v2210
        %v3344 = vunpack.c.l.b16 %v2211
        %v3345 = vunpack.c.h.b16 %v2211
        %v3346 = vunpack.c.l.b16 %v2212
        %v3347 = vunpack.c.l.b16 %v2213
        %v3348 = vunpack.c.h.b16 %v2213
        %v3349 = vunpack.c.l.b16 %v2214
        %v3350 = vunpack.c.l.b16 %v2215
        %v3351 = vunpack.c.h.b16 %v2215
        %v3352 = vunpack.c.l.b16 %v2216
        %v3353 = vunpack.c.l.b16 %v2217
        %v3354 = vunpack.c.h.b16 %v2217
        %v3355 = vunpack.c.l.b16 %v2218
        %v3356 = vunpack.c.l.b16 %v2219
        %v3357 = vunpack.c.h.b16 %v2219
        %v3358 = vunpack.c.l.b16 %v2220
        %v3359 = vunpack.c.l.b16 %v2221
        %v3360 = vunpack.c.h.b16 %v2221
        %v3361 = vunpack.c.l.b16 %v2222
        %v3362 = vunpack.c.l.b16 %v2223
        %v3363 = vunpack.c.h.b16 %v2223
        %v3364 = vunpack.c.l.b16 %v2224
        %v3365 = vunpack.c.l.b16 %v2225
        %v3366 = vunpack.c.h.b16 %v2225
        %v3367 = vunpack.c.l.b16 %v2226
        %v3368 = vunpack.c.l.b16 %v2227
        %v3369 = vunpack.c.h.b16 %v2227
        %v3370 = vunpack.c.l.b16 %v2228
        %v3371 = vunpack.c.l.b16 %v2229
        %v3372 = vunpack.c.h.b16 %v2229
        %v3373 = vunpack.c.l.b16 %v2230
        %v3374 = vunpack.c.l.b16 %v2231
        %v3375 = vunpack.c.h.b16 %v2231
        %v3376 = vunpack.c.l.b16 %v2232
        %v3377 = vunpack.c.l.b16 %v2233
        %v3378 = vunpack.c.h.b16 %v2233
        %v3379 = vunpack.c.l.b16 %v2234
        %v3380 = vunpack.c.l.b16 %v2235
        %v3381 = vunpack.c.h.b16 %v2235
        %v3382 = vunpack.c.l.b16 %v2236
        %v3383 = vpack.c.b16 %v3194, %v3191
        %v3384 = vpack.c.b16 %v3195, %v3192
        %v3385 = vpack.c.b16 %v3196, %v3193
        %v3386 = vpack.c.b16 %v3200, %v3197
        %v3387 = vpack.c.b16 %v3201, %v3198
        %v3388 = vpack.c.b16 %v3202, %v3199
        %v3389 = vpack.c.b16 %v3206, %v3203
        %v3390 = vpack.c.b16 %v3207, %v3204
        %v3391 = vpack.c.b16 %v3208, %v3205
        %v3392 = vpack.c.b16 %v3212, %v3209
        %v3393 = vpack.c.b16 %v3213, %v3210
        %v3394 = vpack.c.b16 %v3214, %v3211
        %v3395 = vpack.c.b16 %v3218, %v3215
        %v3396 = vpack.c.b16 %v3219, %v3216
        %v3397 = vpack.c.b16 %v3220, %v3217
        %v3398 = vpack.c.b16 %v3224, %v3221
        %v3399 = vpack.c.b16 %v3225, %v3222
        %v3400 = vpack.c.b16 %v3226, %v3223
        %v3401 = vpack.c.b16 %v3230, %v3227
        %v3402 = vpack.c.b16 %v3231, %v3228
        %v3403 = vpack.c.b16 %v3232, %v3229
        %v3404 = vpack.c.b16 %v3236, %v3233
        %v3405 = vpack.c.b16 %v3237, %v3234
        %v3406 = vpack.c.b16 %v3238, %v3235
        %v3407 = vpack.c.b16 %v3242, %v3239
        %v3408 = vpack.c.b16 %v3243, %v3240
        %v3409 = vpack.c.b16 %v3244, %v3241
        %v3410 = vpack.c.b16 %v3248, %v3245
        %v3411 = vpack.c.b16 %v3249, %v3246
        %v3412 = vpack.c.b16 %v3250, %v3247
        %v3413 = vpack.c.b16 %v3254, %v3251
        %v3414 = vpack.c.b16 %v3255, %v3252
        %v3415 = vpack.c.b16 %v3256, %v3253
        %v3416 = vpack.c.b16 %v3260, %v3257
        %v3417 = vpack.c.b16 %v3261, %v3258
        %v3418 = vpack.c.b16 %v3262, %v3259
        %v3419 = vpack.c.b16 %v3266, %v3263
        %v3420 = vpack.c.b16 %v3267, %v3264
        %v3421 = vpack.c.b16 %v3268, %v3265
        %v3422 = vpack.c.b16 %v3272, %v3269
        %v3423 = vpack.c.b16 %v3273, %v3270
        %v3424 = vpack.c.b16 %v3274, %v3271
        %v3425 = vpack.c.b16 %v3278, %v3275
        %v3426 = vpack.c.b16 %v3279, %v3276
        %v3427 = vpack.c.b16 %v3280, %v3277
        %v3428 = vpack.c.b16 %v3284, %v3281
        %v3429 = vpack.c.b16 %v3285, %v3282
        %v3430 = vpack.c.b16 %v3286, %v3283
        %v3431 = vpack.c.b16 %v3290, %v3287
        %v3432 = vpack.c.b16 %v3291, %v3288
        %v3433 = vpack.c.b16 %v3292, %v3289
        %v3434 = vpack.c.b16 %v3296, %v3293
        %v3435 = vpack.c.b16 %v3297, %v3294
        %v3436 = vpack.c.b16 %v3298, %v3295
        %v3437 = vpack.c.b16 %v3302, %v3299
        %v3438 = vpack.c.b16 %v3303, %v3300
        %v3439 = vpack.c.b16 %v3304, %v3301
        %v3440 = vpack.c.b16 %v3308, %v3305
        %v3441 = vpack.c.b16 %v3309, %v3306
        %v3442 = vpack.c.b16 %v3310, %v3307
        %v3443 = vpack.c.b16 %v3314, %v3311
        %v3444 = vpack.c.b16 %v3315, %v3312
        %v3445 = vpack.c.b16 %v3316, %v3313
        %v3446 = vpack.c.b16 %v3320, %v3317
        %v3447 = vpack.c.b16 %v3321, %v3318
        %v3448 = vpack.c.b16 %v3322, %v3319
        %v3449 = vpack.c.b16 %v3326, %v3323
        %v3450 = vpack.c.b16 %v3327, %v3324
        %v3451 = vpack.c.b16 %v3328, %v3325
        %v3452 = vpack.c.b16 %v3332, %v3329
        %v3453 = vpack.c.b16 %v3333, %v3330
        %v3454 = vpack.c.b16 %v3334, %v3331
        %v3455 = vpack.c.b16 %v3338, %v3335
        %v3456 = vpack.c.b16 %v3339, %v3336
        %v3457 = vpack.c.b16 %v3340, %v3337
        %v3458 = vpack.c.b16 %v3344, %v3341
        %v3459 = vpack.c.b16 %v3345, %v3342
        %v3460 = vpack.c.b16 %v3346, %v3343
        %v3461 = vpack.c.b16 %v3350, %v3347
        %v3462 = vpack.c.b16 %v3351, %v3348
        %v3463 = vpack.c.b16 %v3352, %v3349
        %v3464 = vpack.c.b16 %v3356, %v3353
        %v3465 = vpack.c.b16 %v3357, %v3354
        %v3466 = vpack.c.b16 %v3358, %v3355
        %v3467 = vpack.c.b16 %v3362, %v3359
        %v3468 = vpack.c.b16 %v3363, %v3360
        %v3469 = vpack.c.b16 %v3364, %v3361
        %v3470 = vpack.c.b16 %v3368, %v3365
        %v3471 = vpack.c.b16 %v3369, %v3366
        %v3472 = vpack.c.b16 %v3370, %v3367
        %v3473 = vpack.c.b16 %v3374, %v3371
        %v3474 = vpack.c.b16 %v3375, %v3372
        %v3475 = vpack.c.b16 %v3376, %v3373
        %v3476 = vpack.c.b16 %v3380, %v3377
        %v3477 = vpack.c.b16 %v3381, %v3378
        %v3478 = vpack.c.b16 %v3382, %v3379
        %3575 = vmatpush.bf16.msra.mxu0 %v3404
        %3576 = vmatpush.bf16.msra.mxu0 %v3401
        %3577 = vmatpush.bf16.msra.mxu0 %v3398
        %3578 = vmatpush.bf16.msra.mxu0 %v3395
        %3579 = vmatpush.bf16.msra.mxu0 %v3392
        %3580 = vmatpush.bf16.msra.mxu0 %v3389
        %3581 = vmatpush.bf16.msra.mxu0 %v3386
        %3582 = vmatpush.bf16.msra.mxu0 %v3383
        %3583 = vmatmul.bf16.gmra.mxu0 %v2371
        %v3584 = vpop.f32.mrf.mxu0
        %v3585 = vadd.f32 %v2952, %v3584
        %v3586 = vpop.f32.mrf.mxu0
        %3587 = vdwg.mxu0
        %3588 = vmatpush.bf16.msra.mxu0 %v3428
        %3589 = vmatpush.bf16.msra.mxu0 %v3425
        %3590 = vmatpush.bf16.msra.mxu0 %v3422
        %3591 = vmatpush.bf16.msra.mxu0 %v3419
        %3592 = vmatpush.bf16.msra.mxu0 %v3416
        %3593 = vmatpush.bf16.msra.mxu0 %v3413
        %3594 = vmatpush.bf16.msra.mxu0 %v3410
        %3595 = vmatpush.bf16.msra.mxu0 %v3407
        %3596 = vmatmul.bf16.gmra.mxu0 %v2372
        %v3597 = vpop.f32.mrf.mxu0
        %v3598 = vadd.f32 %v3585, %v3597
        %v3599 = vpop.f32.mrf.mxu0
        %3600 = vdwg.mxu0
        %3601 = vmatpush.bf16.msra.mxu0 %v3452
        %3602 = vmatpush.bf16.msra.mxu0 %v3449
        %3603 = vmatpush.bf16.msra.mxu0 %v3446
        %3604 = vmatpush.bf16.msra.mxu0 %v3443
        %3605 = vmatpush.bf16.msra.mxu0 %v3440
        %3606 = vmatpush.bf16.msra.mxu0 %v3437
        %3607 = vmatpush.bf16.msra.mxu0 %v3434
        %3608 = vmatpush.bf16.msra.mxu0 %v3431
        %3609 = vmatmul.bf16.gmra.mxu0 %v2373
        %v3610 = vpop.f32.mrf.mxu0
        %v3611 = vadd.f32 %v3598, %v3610
        %v3612 = vpop.f32.mrf.mxu0
        %3613 = vdwg.mxu0
        %3614 = vmatpush.bf16.msra.mxu0 %v3476
        %3615 = vmatpush.bf16.msra.mxu0 %v3473
        %3616 = vmatpush.bf16.msra.mxu0 %v3470
        %3617 = vmatpush.bf16.msra.mxu0 %v3467
        %3618 = vmatpush.bf16.msra.mxu0 %v3464
        %3619 = vmatpush.bf16.msra.mxu0 %v3461
        %3620 = vmatpush.bf16.msra.mxu0 %v3458
        %3621 = vmatpush.bf16.msra.mxu0 %v3455
        %3622 = vmatmul.bf16.gmra.mxu0 %v2374
        %v3623 = vpop.f32.mrf.mxu0
        %v3624 = vadd.f32 %v3611, %v3623
        %v3625 = vpop.f32.mrf.mxu0
        %3626 = vdwg.mxu0
        %3627 = vmatpush.bf16.msra.mxu0 %v3405
        %3628 = vmatpush.bf16.msra.mxu0 %v3402
        %3629 = vmatpush.bf16.msra.mxu0 %v3399
        %3630 = vmatpush.bf16.msra.mxu0 %v3396
        %3631 = vmatpush.bf16.msra.mxu0 %v3393
        %3632 = vmatpush.bf16.msra.mxu0 %v3390
        %3633 = vmatpush.bf16.msra.mxu0 %v3387
        %3634 = vmatpush.bf16.msra.mxu0 %v3384
        %3635 = vmatmul.bf16.gmra.mxu0 %v2371
        %v3636 = vpop.f32.mrf.mxu0
        %v3637 = vadd.f32 %v3004, %v3636
        %v3638 = vpop.f32.mrf.mxu0
        %3639 = vdwg.mxu0
        %3640 = vmatpush.bf16.msra.mxu0 %v3429
        %3641 = vmatpush.bf16.msra.mxu0 %v3426
        %3642 = vmatpush.bf16.msra.mxu0 %v3423
        %3643 = vmatpush.bf16.msra.mxu0 %v3420
        %3644 = vmatpush.bf16.msra.mxu0 %v3417
        %3645 = vmatpush.bf16.msra.mxu0 %v3414
        %3646 = vmatpush.bf16.msra.mxu0 %v3411
        %3647 = vmatpush.bf16.msra.mxu0 %v3408
        %3648 = vmatmul.bf16.gmra.mxu0 %v2372
        %v3649 = vpop.f32.mrf.mxu0
        %v3650 = vadd.f32 %v3637, %v3649
        %v3651 = vpop.f32.mrf.mxu0
        %3652 = vdwg.mxu0
        %3653 = vmatpush.bf16.msra.mxu0 %v3453
        %3654 = vmatpush.bf16.msra.mxu0 %v3450
        %3655 = vmatpush.bf16.msra.mxu0 %v3447
        %3656 = vmatpush.bf16.msra.mxu0 %v3444
        %3657 = vmatpush.bf16.msra.mxu0 %v3441
        %3658 = vmatpush.bf16.msra.mxu0 %v3438
        %3659 = vmatpush.bf16.msra.mxu0 %v3435
        %3660 = vmatpush.bf16.msra.mxu0 %v3432
        %3661 = vmatmul.bf16.gmra.mxu0 %v2373
        %v3662 = vpop.f32.mrf.mxu0
        %v3663 = vadd.f32 %v3650, %v3662
        %v3664 = vpop.f32.mrf.mxu0
        %3665 = vdwg.mxu0
        %3666 = vmatpush.bf16.msra.mxu0 %v3477
        %3667 = vmatpush.bf16.msra.mxu0 %v3474
        %3668 = vmatpush.bf16.msra.mxu0 %v3471
        %3669 = vmatpush.bf16.msra.mxu0 %v3468
        %3670 = vmatpush.bf16.msra.mxu0 %v3465
        %3671 = vmatpush.bf16.msra.mxu0 %v3462
        %3672 = vmatpush.bf16.msra.mxu0 %v3459
        %3673 = vmatpush.bf16.msra.mxu0 %v3456
        %3674 = vmatmul.bf16.gmra.mxu0 %v2374
        %v3675 = vpop.f32.mrf.mxu0
        %v3676 = vadd.f32 %v3663, %v3675
        %v3677 = vpop.f32.mrf.mxu0
        %3678 = vdwg.mxu0
        %3679 = vmatpush.bf16.msra.mxu0 %v3406
        %3680 = vmatpush.bf16.msra.mxu0 %v3403
        %3681 = vmatpush.bf16.msra.mxu0 %v3400
        %3682 = vmatpush.bf16.msra.mxu0 %v3397
        %3683 = vmatpush.bf16.msra.mxu0 %v3394
        %3684 = vmatpush.bf16.msra.mxu0 %v3391
        %3685 = vmatpush.bf16.msra.mxu0 %v3388
        %3686 = vmatpush.bf16.msra.mxu0 %v3385
        %3687 = vmatmul.bf16.gmra.mxu0 %v2371
        %v3688 = vpop.f32.mrf.mxu0
        %v3689 = vadd.f32 %v3056, %v3688
        %v3690 = vpop.f32.mrf.mxu0
        %3691 = vdwg.mxu0
        %3692 = vmatpush.bf16.msra.mxu0 %v3430
        %3693 = vmatpush.bf16.msra.mxu0 %v3427
        %3694 = vmatpush.bf16.msra.mxu0 %v3424
        %3695 = vmatpush.bf16.msra.mxu0 %v3421
        %3696 = vmatpush.bf16.msra.mxu0 %v3418
        %3697 = vmatpush.bf16.msra.mxu0 %v3415
        %3698 = vmatpush.bf16.msra.mxu0 %v3412
        %3699 = vmatpush.bf16.msra.mxu0 %v3409
        %3700 = vmatmul.bf16.gmra.mxu0 %v2372
        %v3701 = vpop.f32.mrf.mxu0
        %v3702 = vadd.f32 %v3689, %v3701
        %v3703 = vpop.f32.mrf.mxu0
        %3704 = vdwg.mxu0
        %3705 = vmatpush.bf16.msra.mxu0 %v3454
        %3706 = vmatpush.bf16.msra.mxu0 %v3451
        %3707 = vmatpush.bf16.msra.mxu0 %v3448
        %3708 = vmatpush.bf16.msra.mxu0 %v3445
        %3709 = vmatpush.bf16.msra.mxu0 %v3442
        %3710 = vmatpush.bf16.msra.mxu0 %v3439
        %3711 = vmatpush.bf16.msra.mxu0 %v3436
        %3712 = vmatpush.bf16.msra.mxu0 %v3433
        %3713 = vmatmul.bf16.gmra.mxu0 %v2373
        %v3714 = vpop.f32.mrf.mxu0
        %v3715 = vadd.f32 %v3702, %v3714
        %v3716 = vpop.f32.mrf.mxu0
        %3717 = vdwg.mxu0
        %3718 = vmatpush.bf16.msra.mxu0 %v3478
        %3719 = vmatpush.bf16.msra.mxu0 %v3475
        %3720 = vmatpush.bf16.msra.mxu0 %v3472
        %3721 = vmatpush.bf16.msra.mxu0 %v3469
        %3722 = vmatpush.bf16.msra.mxu0 %v3466
        %3723 = vmatpush.bf16.msra.mxu0 %v3463
        %3724 = vmatpush.bf16.msra.mxu0 %v3460
        %3725 = vmatpush.bf16.msra.mxu0 %v3457
        %3726 = vmatmul.bf16.gmra.mxu0 %v2374
        %v3727 = vpop.f32.mrf.mxu0
        %v3728 = vadd.f32 %v3715, %v3727
        %v3729 = vpop.f32.mrf.mxu0
        %3730 = vdwg.mxu0
        %v3731 = vld [vmem:[%s7] sm:$0x7]
        %v3733 = vperm.slane %v3731, 0
        %v3734 = vperm.slane %v3731, 1
        %v3735 = vperm.slane %v3731, 2
        %v3739 = vadd.f32 %v3624, %v3733
        %v3740 = vadd.f32 %v3676, %v3734
        %v3741 = vadd.f32 %v3728, %v3735
        %v3742 = vmax.f32 %v3739, 0.0
        %v3743 = vmax.f32 %v3740, 0.0
        %v3744 = vmax.f32 %v3741, 0.0
        %v3745 = vld [vmem:[%s8] sm:$0xff]
        %v3746 = vld [vmem:[%s8 + $0x8] sm:$0xff]
        %v3747 = vld [vmem:[%s8 + $0x10] sm:$0xff]
        %v3748 = vld [vmem:[%s8 + $0x18] sm:$0xff]
        %v3749 = vld [vmem:[%s8 + $0x20] sm:$0xff]
        %v3750 = vld [vmem:[%s8 + $0x28] sm:$0xff]
        %v3751 = vld [vmem:[%s8 + $0x30] sm:$0xff]
        %v3752 = vld [vmem:[%s8 + $0x38] sm:$0xff]
        %v3753 = vld [vmem:[%s8 + $0x40] sm:$0xff]
        %v3754 = vld [vmem:[%s8 + $0x48] sm:$0xff]
        %v3755 = vld [vmem:[%s8 + $0x50] sm:$0xff]
        %v3756 = vld [vmem:[%s8 + $0x58] sm:$0xff]
        %v3757 = vld [vmem:[%s8 + $0x60] sm:$0xff]
        %v3758 = vld [vmem:[%s8 + $0x68] sm:$0xff]
        %v3759 = vld [vmem:[%s8 + $0x70] sm:$0xff]
        %v3760 = vld [vmem:[%s8 + $0x78] sm:$0xff]
        %v3761 = vld [vmem:[%s8 + $0x80] sm:$0xff]
        %v3762 = vld [vmem:[%s8 + $0x88] sm:$0xff]
        %v3763 = vld [vmem:[%s8 + $0x90] sm:$0xff]
        %v3764 = vld [vmem:[%s8 + $0x98] sm:$0xff]
        %v3765 = vld [vmem:[%s8 + $0xa0] sm:$0xff]
        %v3766 = vld [vmem:[%s8 + $0xa8] sm:$0xff]
        %v3767 = vld [vmem:[%s8 + $0xb0] sm:$0xff]
        %v3768 = vld [vmem:[%s8 + $0xb8] sm:$0xff]
        %v3769 = vld [vmem:[%s8 + $0xc0] sm:$0xff]
        %v3770 = vld [vmem:[%s8 + $0xc8] sm:$0xff]
        %v3771 = vld [vmem:[%s8 + $0xd0] sm:$0xff]
        %v3772 = vld [vmem:[%s8 + $0xd8] sm:$0xff]
        %v3773 = vld [vmem:[%s8 + $0xe0] sm:$0xff]
        %v3774 = vld [vmem:[%s8 + $0xe8] sm:$0xff]
        %v3775 = vld [vmem:[%s8 + $0xf0] sm:$0xff]
        %v3776 = vld [vmem:[%s8 + $0xf8] sm:$0xff]
        %v3777 = vld [vmem:[%s8 + $0x100] sm:$0xff]
        %v3778 = vld [vmem:[%s8 + $0x108] sm:$0xff]
        %v3779 = vld [vmem:[%s8 + $0x110] sm:$0xff]
        %v3780 = vld [vmem:[%s8 + $0x118] sm:$0xff]
        %v3781 = vld [vmem:[%s8 + $0x120] sm:$0xff]
        %v3782 = vld [vmem:[%s8 + $0x128] sm:$0xff]
        %v3783 = vld [vmem:[%s8 + $0x130] sm:$0xff]
        %v3784 = vld [vmem:[%s8 + $0x138] sm:$0xff]
        %v3785 = vld [vmem:[%s8 + $0x140] sm:$0xff]
        %v3786 = vld [vmem:[%s8 + $0x148] sm:$0xff]
        %v3787 = vld [vmem:[%s8 + $0x150] sm:$0xff]
        %v3788 = vld [vmem:[%s8 + $0x158] sm:$0xff]
        %v3789 = vld [vmem:[%s8 + $0x160] sm:$0xff]
        %v3790 = vld [vmem:[%s8 + $0x168] sm:$0xff]
        %v3791 = vld [vmem:[%s8 + $0x170] sm:$0xff]
        %v3792 = vld [vmem:[%s8 + $0x178] sm:$0xff]
        %v3793 = vld [vmem:[%s8 + $0x180] sm:$0xff]
        %v3794 = vld [vmem:[%s8 + $0x188] sm:$0xff]
        %v3795 = vld [vmem:[%s8 + $0x190] sm:$0xff]
        %v3796 = vld [vmem:[%s8 + $0x198] sm:$0xff]
        %v3797 = vld [vmem:[%s8 + $0x1a0] sm:$0xff]
        %v3798 = vld [vmem:[%s8 + $0x1a8] sm:$0xff]
        %v3799 = vld [vmem:[%s8 + $0x1b0] sm:$0xff]
        %v3800 = vld [vmem:[%s8 + $0x1b8] sm:$0xff]
        %v3801 = vld [vmem:[%s8 + $0x1c0] sm:$0xff]
        %v3802 = vld [vmem:[%s8 + $0x1c8] sm:$0xff]
        %v3803 = vld [vmem:[%s8 + $0x1d0] sm:$0xff]
        %v3804 = vld [vmem:[%s8 + $0x1d8] sm:$0xff]
        %v3805 = vld [vmem:[%s8 + $0x1e0] sm:$0xff]
        %v3806 = vld [vmem:[%s8 + $0x1e8] sm:$0xff]
        %v3807 = vld [vmem:[%s8 + $0x1f0] sm:$0xff]
        %v3808 = vld [vmem:[%s8 + $0x1f8] sm:$0xff]
        %v3809 = vld [vmem:[%s8 + $0x200] sm:$0xff]
        %v3810 = vld [vmem:[%s8 + $0x208] sm:$0xff]
        %v3811 = vld [vmem:[%s8 + $0x210] sm:$0xff]
        %v3812 = vld [vmem:[%s8 + $0x218] sm:$0xff]
        %v3813 = vld [vmem:[%s8 + $0x220] sm:$0xff]
        %v3814 = vld [vmem:[%s8 + $0x228] sm:$0xff]
        %v3815 = vld [vmem:[%s8 + $0x230] sm:$0xff]
        %v3816 = vld [vmem:[%s8 + $0x238] sm:$0xff]
        %v3817 = vld [vmem:[%s8 + $0x240] sm:$0xff]
        %v3818 = vld [vmem:[%s8 + $0x248] sm:$0xff]
        %v3819 = vld [vmem:[%s8 + $0x250] sm:$0xff]
        %v3820 = vld [vmem:[%s8 + $0x258] sm:$0xff]
        %v3821 = vld [vmem:[%s8 + $0x260] sm:$0xff]
        %v3822 = vld [vmem:[%s8 + $0x268] sm:$0xff]
        %v3823 = vld [vmem:[%s8 + $0x270] sm:$0xff]
        %v3824 = vld [vmem:[%s8 + $0x278] sm:$0xff]
        %v3825 = vld [vmem:[%s8 + $0x280] sm:$0xff]
        %v3826 = vld [vmem:[%s8 + $0x288] sm:$0xff]
        %v3827 = vld [vmem:[%s8 + $0x290] sm:$0xff]
        %v3828 = vld [vmem:[%s8 + $0x298] sm:$0xff]
        %v3829 = vld [vmem:[%s8 + $0x2a0] sm:$0xff]
        %v3830 = vld [vmem:[%s8 + $0x2a8] sm:$0xff]
        %v3831 = vld [vmem:[%s8 + $0x2b0] sm:$0xff]
        %v3832 = vld [vmem:[%s8 + $0x2b8] sm:$0xff]
        %v3833 = vld [vmem:[%s8 + $0x2c0] sm:$0xff]
        %v3834 = vld [vmem:[%s8 + $0x2c8] sm:$0xff]
        %v3835 = vld [vmem:[%s8 + $0x2d0] sm:$0xff]
        %v3836 = vld [vmem:[%s8 + $0x2d8] sm:$0xff]
        %v3837 = vld [vmem:[%s8 + $0x2e0] sm:$0xff]
        %v3838 = vld [vmem:[%s8 + $0x2e8] sm:$0xff]
        %v3839 = vld [vmem:[%s8 + $0x2f0] sm:$0xff]
        %v3840 = vld [vmem:[%s8 + $0x2f8] sm:$0xff]
        %v3841 = vld [vmem:[%s9] sm:$0x3]
        %v3843 = vperm.slane %v3841, 0
        %v3844 = vperm.slane %v3841, 1
        %3847 = vmatpush.msra.mxu0 %v3775
        %3848 = vmatpush.msra.mxu0 %v3773
        %3849 = vmatpush.msra.mxu0 %v3771
        %3850 = vmatpush.msra.mxu0 %v3769
        %3851 = vmatpush.msra.mxu0 %v3767
        %3852 = vmatpush.msra.mxu0 %v3765
        %3853 = vmatpush.msra.mxu0 %v3763
        %3854 = vmatpush.msra.mxu0 %v3761
        %3855 = vmatpush.msra.mxu0 %v3759
        %3856 = vmatpush.msra.mxu0 %v3757
        %3857 = vmatpush.msra.mxu0 %v3755
        %3858 = vmatpush.msra.mxu0 %v3753
        %3859 = vmatpush.msra.mxu0 %v3751
        %3860 = vmatpush.msra.mxu0 %v3749
        %3861 = vmatpush.msra.mxu0 %v3747
        %3862 = vmatpush.msra.mxu0 %v3745
        %3863 = vmatmul.f32.gmra.mxu0 %v3742
        %v3864 = vpop.f32.mrf.mxu0
        %v3865 = vadd.f32 %v3843, %v3864
        %3866 = vdwg.mxu0
        %3867 = vmatpush.msra.mxu0 %v3807
        %3868 = vmatpush.msra.mxu0 %v3805
        %3869 = vmatpush.msra.mxu0 %v3803
        %3870 = vmatpush.msra.mxu0 %v3801
        %3871 = vmatpush.msra.mxu0 %v3799
        %3872 = vmatpush.msra.mxu0 %v3797
        %3873 = vmatpush.msra.mxu0 %v3795
        %3874 = vmatpush.msra.mxu0 %v3793
        %3875 = vmatpush.msra.mxu0 %v3791
        %3876 = vmatpush.msra.mxu0 %v3789
        %3877 = vmatpush.msra.mxu0 %v3787
        %3878 = vmatpush.msra.mxu0 %v3785
        %3879 = vmatpush.msra.mxu0 %v3783
        %3880 = vmatpush.msra.mxu0 %v3781
        %3881 = vmatpush.msra.mxu0 %v3779
        %3882 = vmatpush.msra.mxu0 %v3777
        %3883 = vmatmul.f32.gmra.mxu0 %v3743
        %v3884 = vpop.f32.mrf.mxu0
        %v3885 = vadd.f32 %v3865, %v3884
        %3886 = vdwg.mxu0
        %3887 = vmatpush.msra.mxu0 %v3839
        %3888 = vmatpush.msra.mxu0 %v3837
        %3889 = vmatpush.msra.mxu0 %v3835
        %3890 = vmatpush.msra.mxu0 %v3833
        %3891 = vmatpush.msra.mxu0 %v3831
        %3892 = vmatpush.msra.mxu0 %v3829
        %3893 = vmatpush.msra.mxu0 %v3827
        %3894 = vmatpush.msra.mxu0 %v3825
        %3895 = vmatpush.msra.mxu0 %v3823
        %3896 = vmatpush.msra.mxu0 %v3821
        %3897 = vmatpush.msra.mxu0 %v3819
        %3898 = vmatpush.msra.mxu0 %v3817
        %3899 = vmatpush.msra.mxu0 %v3815
        %3900 = vmatpush.msra.mxu0 %v3813
        %3901 = vmatpush.msra.mxu0 %v3811
        %3902 = vmatpush.msra.mxu0 %v3809
        %3903 = vmatmul.f32.gmra.mxu0 %v3744
        %v3904 = vpop.f32.mrf.mxu0
        %v3905 = vadd.f32 %v3885, %v3904
        %3906 = vdwg.mxu0
        %3907 = vmatpush.msra.mxu0 %v3776
        %3908 = vmatpush.msra.mxu0 %v3774
        %3909 = vmatpush.msra.mxu0 %v3772
        %3910 = vmatpush.msra.mxu0 %v3770
        %3911 = vmatpush.msra.mxu0 %v3768
        %3912 = vmatpush.msra.mxu0 %v3766
        %3913 = vmatpush.msra.mxu0 %v3764
        %3914 = vmatpush.msra.mxu0 %v3762
        %3915 = vmatpush.msra.mxu0 %v3760
        %3916 = vmatpush.msra.mxu0 %v3758
        %3917 = vmatpush.msra.mxu0 %v3756
        %3918 = vmatpush.msra.mxu0 %v3754
        %3919 = vmatpush.msra.mxu0 %v3752
        %3920 = vmatpush.msra.mxu0 %v3750
        %3921 = vmatpush.msra.mxu0 %v3748
        %3922 = vmatpush.msra.mxu0 %v3746
        %3923 = vmatmul.f32.gmra.mxu0 %v3742
        %v3924 = vpop.f32.mrf.mxu0
        %v3925 = vadd.f32 %v3844, %v3924
        %3926 = vdwg.mxu0
        %3927 = vmatpush.msra.mxu0 %v3808
        %3928 = vmatpush.msra.mxu0 %v3806
        %3929 = vmatpush.msra.mxu0 %v3804
        %3930 = vmatpush.msra.mxu0 %v3802
        %3931 = vmatpush.msra.mxu0 %v3800
        %3932 = vmatpush.msra.mxu0 %v3798
        %3933 = vmatpush.msra.mxu0 %v3796
        %3934 = vmatpush.msra.mxu0 %v3794
        %3935 = vmatpush.msra.mxu0 %v3792
        %3936 = vmatpush.msra.mxu0 %v3790
        %3937 = vmatpush.msra.mxu0 %v3788
        %3938 = vmatpush.msra.mxu0 %v3786
        %3939 = vmatpush.msra.mxu0 %v3784
        %3940 = vmatpush.msra.mxu0 %v3782
        %3941 = vmatpush.msra.mxu0 %v3780
        %3942 = vmatpush.msra.mxu0 %v3778
        %3943 = vmatmul.f32.gmra.mxu0 %v3743
        %v3944 = vpop.f32.mrf.mxu0
        %v3945 = vadd.f32 %v3925, %v3944
        %3946 = vdwg.mxu0
        %3947 = vmatpush.msra.mxu0 %v3840
        %3948 = vmatpush.msra.mxu0 %v3838
        %3949 = vmatpush.msra.mxu0 %v3836
        %3950 = vmatpush.msra.mxu0 %v3834
        %3951 = vmatpush.msra.mxu0 %v3832
        %3952 = vmatpush.msra.mxu0 %v3830
        %3953 = vmatpush.msra.mxu0 %v3828
        %3954 = vmatpush.msra.mxu0 %v3826
        %3955 = vmatpush.msra.mxu0 %v3824
        %3956 = vmatpush.msra.mxu0 %v3822
        %3957 = vmatpush.msra.mxu0 %v3820
        %3958 = vmatpush.msra.mxu0 %v3818
        %3959 = vmatpush.msra.mxu0 %v3816
        %3960 = vmatpush.msra.mxu0 %v3814
        %3961 = vmatpush.msra.mxu0 %v3812
        %3962 = vmatpush.msra.mxu0 %v3810
        %3963 = vmatmul.f32.gmra.mxu0 %v3744
        %v3964 = vpop.f32.mrf.mxu0
        %v3965 = vadd.f32 %v3945, %v3964
        %3966 = vdwg.mxu0
        %v3967 = vmax.f32 %v3905, 0.0
        %v3968 = vmax.f32 %v3965, 0.0
        %v3969 = vld [vmem:[%s10] sm:$0xff]
        %v3970 = vld [vmem:[%s10 + $0x8] sm:$0xff]
        %v3971 = vld [vmem:[%s10 + $0x10] sm:$0xff]
        %v3972 = vld [vmem:[%s10 + $0x18] sm:$0xff]
        %v3973 = vld [vmem:[%s10 + $0x20] sm:$0xff]
        %v3974 = vld [vmem:[%s10 + $0x28] sm:$0xff]
        %v3975 = vld [vmem:[%s10 + $0x30] sm:$0xff]
        %v3976 = vld [vmem:[%s10 + $0x38] sm:$0xff]
        %v3977 = vld [vmem:[%s10 + $0x40] sm:$0xff]
        %v3978 = vld [vmem:[%s10 + $0x48] sm:$0xff]
        %v3979 = vld [vmem:[%s10 + $0x50] sm:$0xff]
        %v3980 = vld [vmem:[%s10 + $0x58] sm:$0xff]
        %v3981 = vld [vmem:[%s10 + $0x60] sm:$0xff]
        %v3982 = vld [vmem:[%s10 + $0x68] sm:$0xff]
        %v3983 = vld [vmem:[%s10 + $0x70] sm:$0xff]
        %v3984 = vld [vmem:[%s10 + $0x78] sm:$0xff]
        %v3985 = vld [vmem:[%s10 + $0x80] sm:$0xff]
        %v3986 = vld [vmem:[%s10 + $0x88] sm:$0xff]
        %v3987 = vld [vmem:[%s10 + $0x90] sm:$0xff]
        %v3988 = vld [vmem:[%s10 + $0x98] sm:$0xff]
        %v3989 = vld [vmem:[%s10 + $0xa0] sm:$0xff]
        %v3990 = vld [vmem:[%s10 + $0xa8] sm:$0xff]
        %v3991 = vld [vmem:[%s10 + $0xb0] sm:$0xff]
        %v3992 = vld [vmem:[%s10 + $0xb8] sm:$0xff]
        %v3993 = vld [vmem:[%s10 + $0xc0] sm:$0xff]
        %v3994 = vld [vmem:[%s10 + $0xc8] sm:$0xff]
        %v3995 = vld [vmem:[%s10 + $0xd0] sm:$0xff]
        %v3996 = vld [vmem:[%s10 + $0xd8] sm:$0xff]
        %v3997 = vld [vmem:[%s10 + $0xe0] sm:$0xff]
        %v3998 = vld [vmem:[%s10 + $0xe8] sm:$0xff]
        %v3999 = vld [vmem:[%s10 + $0xf0] sm:$0xff]
        %v4000 = vld [vmem:[%s10 + $0xf8] sm:$0xff]
        %v4001 = vld [vmem:[%s11] sm:$0x1]
        %4002 = vmatpush.msra.mxu0 %v3984
        %4003 = vmatpush.msra.mxu0 %v3983
        %4004 = vmatpush.msra.mxu0 %v3982
        %4005 = vmatpush.msra.mxu0 %v3981
        %4006 = vmatpush.msra.mxu0 %v3980
        %4007 = vmatpush.msra.mxu0 %v3979
        %4008 = vmatpush.msra.mxu0 %v3978
        %4009 = vmatpush.msra.mxu0 %v3977
        %4010 = vmatpush.msra.mxu0 %v3976
        %4011 = vmatpush.msra.mxu0 %v3975
        %4012 = vmatpush.msra.mxu0 %v3974
        %4013 = vmatpush.msra.mxu0 %v3973
        %4014 = vmatpush.msra.mxu0 %v3972
        %4015 = vmatpush.msra.mxu0 %v3971
        %4016 = vmatpush.msra.mxu0 %v3970
        %4017 = vmatpush.msra.mxu0 %v3969
        %4018 = vmatmul.f32.gmra.mxu0 %v3967
        %v4019 = vpop.f32.mrf.mxu0
        %v4020 = vadd.f32 %v4001, %v4019
        %4021 = vdwg.mxu0
        %4022 = vmatpush.msra.mxu0 %v4000
        %4023 = vmatpush.msra.mxu0 %v3999
        %4024 = vmatpush.msra.mxu0 %v3998
        %4025 = vmatpush.msra.mxu0 %v3997
        %4026 = vmatpush.msra.mxu0 %v3996
        %4027 = vmatpush.msra.mxu0 %v3995
        %4028 = vmatpush.msra.mxu0 %v3994
        %4029 = vmatpush.msra.mxu0 %v3993
        %4030 = vmatpush.msra.mxu0 %v3992
        %4031 = vmatpush.msra.mxu0 %v3991
        %4032 = vmatpush.msra.mxu0 %v3990
        %4033 = vmatpush.msra.mxu0 %v3989
        %4034 = vmatpush.msra.mxu0 %v3988
        %4035 = vmatpush.msra.mxu0 %v3987
        %4036 = vmatpush.msra.mxu0 %v3986
        %4037 = vmatpush.msra.mxu0 %v3985
        %4038 = vmatmul.f32.gmra.mxu0 %v3968
        %v4039 = vpop.f32.mrf.mxu0
        %v4040 = vadd.f32 %v4020, %v4039
        %4041 = vdwg.mxu0
        %vm4042 = vcmask 16384
        %4043 = vst.msk [vmem:[%s405] sm:$0x1] %vm4042, %v4040
        %s4044 = sand.u32 %s291, 1
        %s4045 = scalar_lea.sflag [#allocation3], %s4044
        %s4046 = sand.u32 %s291, 1
        %s4047 = scalar_lea.vmem [#allocation2], %s4046
        // Predicated region
        $region69: #{network_forward.1} parent=67 // pred_check
          %p4048 = pneg %p301
        $region70: #{network_forward.1} parent=67 // pred_check_branch
          %4050 = sbr.rel (%p4048) target = $region72
        $region71: #{network_forward.1} parent=67 // pred_region
          %4052 = vsyncadd %s4045, 0
          %s4053 = scalar_lea.hbm %s12, %s26
          %s4055 = sshll.u32 %s4047, 4
          %s4056 = int_to_ptr.vmem [resolvable:$true] %s4055
          %s4057 = sshll.u32 %s4053, 4
          %s4058 = int_to_ptr.hbm [resolvable:$true] %s4057
          %4060 = dma.vmem_to_hbm [thread:$0]  %s4056, 16, %s4058, %s4045
        $region72: #{network_forward.1} parent=67 // pred_fallthru
          _
      $region68: #{network_forward.1} parent=5 // pred_fallthru
        _
      %p4061 = scmp.le.s32.totalorder 2, %s21
      // Predicated region
      $region73: #{network_forward.1} parent=5 // pred_check
        %p4062 = pneg %p4061
      $region74: #{network_forward.1} parent=5 // pred_check_branch
        %4064 = sbr.rel (%p4062) target = $region76
      $region75: #{network_forward.1} parent=5 // pred_region
        %s4065 = ssub.s32 %s21, 2
        // Predicated region
        $region77: #{network_forward.1} parent=75 // pred_check
          %p4066 = pneg %p307
        $region78: #{network_forward.1} parent=75 // pred_check_branch
          %4068 = sbr.rel (%p4066) target = $region80
        $region79: #{network_forward.1} parent=75 // pred_region
          %s4069 = sand.u32 %s292, 1
          %s4070 = scalar_lea.sflag [#allocation3], %s4069
          %s4071 = sand.u32 %s292, 1
          %s4072 = scalar_lea.vmem [#allocation2], %s4071
          %4074 = dma.done %s4070, 16
        $region80: #{network_forward.1} parent=75 // pred_fallthru
          _
      $region76: #{network_forward.1} parent=5 // pred_fallthru
        _
    $region6: #{network_forward.1} parent=1 // loop_footer
      %s25 = sadd.s32 1, %s21
    $region7: #{network_forward.1} parent=1 // loop_footer_branch
      %20 = sbr.rel target = $region3
    $region8: #{network_forward.1} parent=1 // loop_exit
      _
    %4075 = vsyncpa [#allocation3], 1
    %s4076 = scalar_lea.sflag [#allocation3], 1
    %4077 = vsyncpa %s4076, 1

</llo_original>
